<compile_context>
chip_gen: v5e
topology: v5e:2x2
jax: 0.10.0
libtpu: 0.0.40
codegen_flags: <defaults>
</compile_context>

<pallas_src>
import functools

import jax
import jax.numpy as jnp
from jax import lax
from jax.experimental import pallas as pl
from jax.experimental.pallas import tpu as pltpu


# ----------------------------------------------------------------------------
# Fused Pallas kernel
# ----------------------------------------------------------------------------
def _leaky_relu(y, neg_slope=0.01):
    return jnp.where(y >= 0, y, neg_slope * y)


def _fused_convnet_kernel(*refs, cfg):
    """Entire ConvNet forward; all intermediates stay in VMEM scratch.

    Inputs : patches0, w0, b0, [w_l, b_l]*, wf, bf
    Output : (N, OUTP) f32 (lane-padded FC result)
    Scratch: [pad_l, y_l, a_l]*
    """
    n_layers = len(cfg['layers'])
    it = iter(refs)
    patches_ref = next(it)
    w0_ref, b0_ref = next(it), next(it)
    wl_refs, bl_refs = [], []
    for _ in range(n_layers):
        wl_refs.append(next(it))
        bl_refs.append(next(it))
    wf_ref, bf_ref = next(it), next(it)
    out_ref = next(it)
    pad_refs, y_refs, a_refs = [], [], []
    for _ in range(n_layers):
        pad_refs.append(next(it))
        y_refs.append(next(it))
        a_refs.append(next(it))

    N = cfg['N']

    # ---- layer 0: one merged matmul over all pool offsets, bias + LeakyReLU once,
    #      running max over tile-aligned pool-offset row groups ----------------------
    l0 = cfg['layer0']
    y0 = jnp.dot(patches_ref[...], w0_ref[...],
                 preferred_element_type=jnp.float32) + b0_ref[...]
    y0 = _leaky_relu(y0)
    R0 = l0['R']
    act = y0[0:R0]
    for p in range(1, l0['P']):
        act = jnp.maximum(act, y0[p * R0:(p + 1) * R0])     # (R0, C0), rows = (n, h, w)

    # ---- layers >= 1: ring-padded staging, fused im2col matmul, slab pooling -------
    for li, lc in enumerate(cfg['layers']):
        H, W, Hp, Wp = lc['H'], lc['W'], lc['Hp'], lc['Wp']
        Cin, Cout = lc['Cin'], lc['Cout']
        ph_lo, pw_lo, halo = lc['ph_lo'], lc['pw_lo'], lc['halo']
        Rp = N * Hp * Wp
        pad_ref, y_ref, a_ref = pad_refs[li], y_refs[li], a_refs[li]

        # (a) zero the haloed, ring-padded staging buffer (ring/halo must read as 0),
        #     then scatter the compact activation (one contiguous W-row chunk per (n,h)).
        pad_ref[...] = jnp.zeros(pad_ref.shape, pad_ref.dtype)
        for n in range(N):
            for h in range(H):
                src0 = (n * H + h) * W
                dst0 = halo + n * Hp * Wp + (h + ph_lo) * Wp + pw_lo
                pad_ref[pl.ds(dst0, W), :] = act[src0:src0 + W]

        # (b) im2col: lane-concat the KH*KW row-shifted full-slab windows (no masks --
        #     boundary taps land on the zero ring), one bf16 cast, ONE MXU matmul.
        windows = [pad_ref[pl.ds(halo + dh * Wp + dw, Rp), :] for dh, dw in lc['taps']]
        slab = jnp.concatenate(windows, axis=-1).astype(jnp.bfloat16)     # (Rp, T*Cin)
        yl = jnp.dot(slab, wl_refs[li][...], preferred_element_type=jnp.float32)
        yl = _leaky_relu(yl + bl_refs[li][...])                           # (Rp, Cout) f32

        # (c) max pool (floor mode): whole-slab max of row-shifted reads, then one
        #     strided corner gather per (n, hq).
        pH, pW = lc['pool']
        Hq, Wq = H // pH, W // pW
        tail = y_ref.shape[0] - Rp
        if tail > 0:
            y_ref[pl.ds(Rp, tail), :] = jnp.zeros((tail, Cout), jnp.float32)
        y_ref[pl.ds(0, Rp), :] = yl
        m = yl
        for i in range(pH):
            for j in range(pW):
                if i == 0 and j == 0:
                    continue
                m = jnp.maximum(m, y_ref[pl.ds(i * Wp + j, Rp), :])
        y_ref[pl.ds(0, Rp), :] = m        # pooled value now sits at each window corner
        for n in range(N):
            for hq in range(Hq):
                base = n * Hp * Wp + (pH * hq + ph_lo) * Wp + pw_lo
                if pW > 1:
                    blk = y_ref[pl.ds(base, Wq, stride=pW), :]
                else:
                    blk = y_ref[pl.ds(base, Wq), :]
                a_ref[pl.ds((n * Hq + hq) * Wq, Wq), :] = blk
        if li + 1 < n_layers:
            act = a_ref[...]              # compact pooled activation, rows = (n, hq, wq)

    # ---- FC: NCHW flatten folded into wf; lane-dense (N, OUTP) output store --------
    S, OUTP = cfg['fc']['S'], cfg['fc']['OUTP']
    a_last = a_refs[-1]
    acc = jnp.zeros((N, OUTP), jnp.float32)
    for s in range(S):
        if N > 1:
            rows = a_last[pl.ds(s, N, stride=S), :]
        else:
            rows = a_last[pl.ds(s, 1), :]
        acc = acc + jnp.dot(rows.astype(jnp.bfloat16), wf_ref[s],
                            preferred_element_type=jnp.float32)
    out_ref[...] = acc + bf_ref[...]


# ----------------------------------------------------------------------------
# Glue: layer-0 im2col (pool-offset grouped), parameter prep, forward pass
# ----------------------------------------------------------------------------
def _round_up(x, m):
    return ((x + m - 1) // m) * m


def _im2col_pool_grouped(x_nhwc, ksize, stride, dilation, pad, pool):
    """Layer-0 patches grouped by pooling offset: (pH*pW, N*Hq*Wq, KH*KW*Cin)."""
    N, H, W, Cin = x_nhwc.shape
    KH, KW = ksize
    sH, sW = stride
    dH, dW = dilation
    (ph_lo, ph_hi), (pw_lo, pw_hi) = pad
    xp = jnp.pad(x_nhwc, ((0, 0), (ph_lo, ph_hi), (pw_lo, pw_hi), (0, 0)))
    Hp, Wp = xp.shape[1], xp.shape[2]
    Hout = (Hp - dH * (KH - 1) - 1) // sH + 1
    Wout = (Wp - dW * (KW - 1) - 1) // sW + 1
    cols = []
    for kh in range(KH):
        for kw in range(KW):
            h0, w0 = kh * dH, kw * dW
            cols.append(xp[:, h0:h0 + (Hout - 1) * sH + 1:sH,
                              w0:w0 + (Wout - 1) * sW + 1:sW, :])
    patch = jnp.concatenate(cols, axis=-1)                  # (N, Hout, Wout, K)
    K = patch.shape[-1]
    pH, pW = pool
    Hq, Wq = Hout // pH, Wout // pW
    pr = patch[:, :Hq * pH, :Wq * pW, :].reshape(N, Hq, pH, Wq, pW, K)
    pr = jnp.transpose(pr, (2, 4, 0, 1, 3, 5)).reshape(pH * pW, N * Hq * Wq, K)
    return pr, Hq, Wq, K


def _layer_padding(i, ksize, stride, dilation, H_in, W_in):
    if i == 0:
        p0 = ((H_in - 1) * stride[0] - H_in + dilation[0] * (ksize[0] - 1) + 1) // 2
        p1 = ((W_in - 1) * stride[1] - W_in + dilation[1] * (ksize[1] - 1) + 1) // 2
        return (p0, p0), (p1, p1)
    th = dilation[0] * (ksize[0] - 1)           # torch 'same' (stride must be 1)
    tw = dilation[1] * (ksize[1] - 1)
    return (th // 2, th - th // 2), (tw // 2, tw - tw // 2)


def init_convnet(key, layers, input_channels, out_dim, H_in, W_in):
    """Deterministic synthetic parameters (Xavier-uniform conv/fc weights)."""
    params = []
    cin, H, W = input_channels, H_in, W_in
    for i, (cout, ksize, stride, dilation, max_pool) in enumerate(layers):
        KH, KW = ksize
        key, k1, k2, k3, k4, k5, k6 = jax.random.split(key, 7)
        fan_in, fan_out = cin * KH * KW, cout * KH * KW
        bound = (6.0 / (fan_in + fan_out)) ** 0.5
        w = jax.random.uniform(k1, (cout, cin, KH, KW), jnp.float32, -bound, bound)
        b = jax.random.uniform(k2, (cout,), jnp.float32, -0.1, 0.1)
        gamma = 1.0 + 0.1 * jax.random.normal(k3, (cout,), jnp.float32)
        beta = 0.1 * jax.random.normal(k4, (cout,), jnp.float32)
        run_mean = 0.1 * jax.random.normal(k5, (cout,), jnp.float32)
        run_var = 1.0 + 0.1 * jax.random.uniform(k6, (cout,), jnp.float32)
        pad = _layer_padding(i, ksize, stride, dilation, H_in, W_in)
        params.append(dict(w=w, b=b, gamma=gamma, beta=beta, mean=run_mean,
                           var=run_var, ksize=ksize, stride=stride,
                           dilation=dilation, pool=max_pool, pad=pad, cout=cout))
        Hout = (H + pad[0][0] + pad[0][1] - dilation[0] * (KH - 1) - 1) // stride[0] + 1
        Wout = (W + pad[1][0] + pad[1][1] - dilation[1] * (KW - 1) - 1) // stride[1] + 1
        H, W = Hout // max_pool[0], Wout // max_pool[1]
        cin = cout
    flattened_size = cin * H * W
    key, kf1, kf2 = jax.random.split(key, 3)
    fbound = (6.0 / (flattened_size + out_dim)) ** 0.5
    fc_w = jax.random.uniform(kf1, (out_dim, flattened_size), jnp.float32, -fbound, fbound)
    fc_b = jax.random.uniform(kf2, (out_dim,), jnp.float32, -0.1, 0.1)
    return params, fc_w, fc_b


def prepare_fused(params, fc_w, fc_b, batch, H_in, W_in, out_dim):
    """Static parameter prep (hoisted out of forward): BN folding, weight layouts,
    padded-geometry/tap tables, flatten permutation, lane padding, bf16 casts."""
    assert len(params) >= 2, "fused path expects at least two conv layers"
    eps = 1e-5
    N = batch

    # ----- layer 0 (host im2col patch path, merged over pool offsets) -----
    p0 = params[0]
    KH, KW = p0['ksize']
    Cin0 = p0['w'].shape[1]
    C0 = p0['cout']
    scale0 = p0['gamma'] * lax.rsqrt(p0['var'] + eps)
    w0 = jnp.transpose(p0['w'], (2, 3, 1, 0)).reshape(KH * KW * Cin0, C0)
    w0 = (w0 * scale0[None, :]).astype(jnp.bfloat16)
    b0 = (p0['beta'] + scale0 * (p0['b'] - p0['mean'])).reshape(1, C0).astype(jnp.float32)

    (ph_lo, ph_hi), (pw_lo, pw_hi) = p0['pad']
    Hc = (H_in + ph_lo + ph_hi - p0['dilation'][0] * (KH - 1) - 1) // p0['stride'][0] + 1
    Wc = (W_in + pw_lo + pw_hi - p0['dilation'][1] * (KW - 1) - 1) // p0['stride'][1] + 1
    H, W = Hc // p0['pool'][0], Wc // p0['pool'][1]
    layer0 = dict(P=p0['pool'][0] * p0['pool'][1], R=N * H * W, K=KH * KW * Cin0, C=C0)

    # ----- layers >= 1 (in-kernel ring-padded im2col conv) -----
    layer_cfgs, layer_ws, layer_bs = [], [], []
    Cin = C0
    for p in params[1:]:
        KH, KW = p['ksize']
        dH, dW = p['dilation']
        assert tuple(p['stride']) == (1, 1), "'same'-padded layers require stride 1"
        Cout = p['cout']
        scale = p['gamma'] * lax.rsqrt(p['var'] + eps)
        w = jnp.transpose(p['w'], (2, 3, 1, 0)).reshape(KH * KW * Cin, Cout)
        w = (w * scale[None, :]).astype(jnp.bfloat16)
        b = (p['beta'] + scale * (p['b'] - p['mean'])).reshape(1, Cout).astype(jnp.float32)

        th, tw = dH * (KH - 1), dW * (KW - 1)
        lph_lo, lph_hi = th // 2, th - th // 2      # torch 'same'
        lpw_lo, lpw_hi = tw // 2, tw - tw // 2
        Hp, Wp = H + lph_lo + lph_hi, W + lpw_lo + lpw_hi
        taps = tuple((kh * dH - lph_lo, kw * dW - lpw_lo)
                     for kh in range(KH) for kw in range(KW))
        max_shift = max(abs(dh * Wp + dw) for dh, dw in taps)
        halo = _round_up(max(max_shift, 1), 8)

        pH, pW = p['pool']
        layer_cfgs.append(dict(H=H, W=W, Hp=Hp, Wp=Wp, ph_lo=lph_lo, pw_lo=lpw_lo,
                               halo=halo, Cin=Cin, Cout=Cout, taps=taps,
                               pool=(pH, pW)))
        layer_ws.append(w)
        layer_bs.append(b)
        H, W, Cin = H // pH, W // pW, Cout

    # ----- FC: fold NCHW flatten into the weight; pad output to 128 lanes -----
    S = H * W
    assert fc_w.shape == (out_dim, Cin * S)
    OUTP = max(128, _round_up(out_dim, 128))
    wf = jnp.transpose(fc_w.reshape(out_dim, Cin, S), (2, 1, 0))    # (S, C, out)
    wf = jnp.pad(wf, ((0, 0), (0, 0), (0, OUTP - out_dim))).astype(jnp.bfloat16)
    bf = jnp.pad(fc_b, (0, OUTP - out_dim)).reshape(1, OUTP).astype(jnp.float32)

    cfg = dict(N=N, out_dim=out_dim, layer0=layer0, layers=tuple(layer_cfgs),
               fc=dict(S=S, OUTP=OUTP),
               l0_geom=dict(ksize=p0['ksize'], stride=p0['stride'],
                            dilation=p0['dilation'], pad=p0['pad'], pool=p0['pool']))
    prepared = dict(w0=w0, b0=b0, layer_ws=tuple(layer_ws), layer_bs=tuple(layer_bs),
                    wf=wf, bf=bf)
    return cfg, prepared


def convnet_forward(x_nchw, prepared, *, cfg):
    x = jnp.transpose(x_nchw, (0, 2, 3, 1)).astype(jnp.float32)     # NCHW -> NHWC
    g = cfg['l0_geom']
    patches, _, _, _ = _im2col_pool_grouped(
        x, g['ksize'], g['stride'], g['dilation'], g['pad'], g['pool'])
    l0 = cfg['layer0']
    P, R, K = l0['P'], l0['R'], l0['K']
    assert patches.shape == (P, R, K), patches.shape
    patches = patches.reshape(P * R, K).astype(jnp.bfloat16)

    N = cfg['N']
    scratch = []
    for lc in cfg['layers']:
        Rp = N * lc['Hp'] * lc['Wp']
        pH, pW = lc['pool']
        tail = _round_up((pH - 1) * lc['Wp'] + (pW - 1), 8) if (pH * pW > 1) else 0
        Rq = N * (lc['H'] // pH) * (lc['W'] // pW)
        scratch += [pltpu.VMEM((2 * lc['halo'] + Rp, lc['Cin']), jnp.float32),  # staging
                    pltpu.VMEM((Rp + tail, lc['Cout']), jnp.float32),           # conv out
                    pltpu.VMEM((Rq, lc['Cout']), jnp.float32)]                  # pooled

    args = [patches, prepared['w0'], prepared['b0']]
    for w, b in zip(prepared['layer_ws'], prepared['layer_bs']):
        args += [w, b]
    args += [prepared['wf'], prepared['bf']]

    vmem = pl.BlockSpec(memory_space=pltpu.MemorySpace.VMEM)
    out = pl.pallas_call(
        functools.partial(_fused_convnet_kernel, cfg=cfg),
        out_shape=jax.ShapeDtypeStruct((N, cfg['fc']['OUTP']), jnp.float32),
        in_specs=[vmem] * len(args),
        out_specs=vmem,
        scratch_shapes=scratch,
        compiler_params=pltpu.CompilerParams(vmem_limit_bytes=32 * 1024 * 1024),
    )(*args)
    return out[:, :cfg['out_dim']]


# ----------------------------------------------------------------------------
# Pure-JAX reference (eval-mode), for a sanity check
# ----------------------------------------------------------------------------
def convnet_reference(x_nchw, params, fc_w, fc_b):
    eps = 1e-5
    x = jnp.transpose(x_nchw, (0, 2, 3, 1)).astype(jnp.float32)
    for p in params:
        w = jnp.transpose(p['w'], (2, 3, 1, 0))                     # HWIO
        y = lax.conv_general_dilated(
            x, w, window_strides=p['stride'],
            padding=[p['pad'][0], p['pad'][1]], rhs_dilation=p['dilation'],
            dimension_numbers=('NHWC', 'HWIO', 'NHWC'))
        y = y + p['b'][None, None, None, :]
        y = (y - p['mean']) / jnp.sqrt(p['var'] + eps) * p['gamma'] + p['beta']
        y = jnp.where(y >= 0, y, 0.01 * y)
        pH, pW = p['pool']
        y = lax.reduce_window(y, -jnp.inf, lax.max,
                              (1, pH, pW, 1), (1, pH, pW, 1), 'VALID')
        x = y
    feat = jnp.transpose(x, (0, 3, 1, 2)).reshape(x.shape[0], -1)   # NCHW flatten
    return feat @ fc_w.T + fc_b


# ----------------------------------------------------------------------------
if __name__ == "__main__":
    key = jax.random.PRNGKey(0)
    # layer config: (out_channels, kernel_size, stride, dilation, max_pool)
    layers = [
        (8,  (3, 3), (1, 1), (1, 1), (2, 2)),
        (16, (3, 3), (1, 1), (1, 1), (2, 2)),
    ]
    input_channels, out_dim = 1, 2
    batch, H_in, W_in = 2, 16, 16

    kp, kx = jax.random.split(key)
    params, fc_w, fc_b = init_convnet(kp, layers, input_channels, out_dim, H_in, W_in)
    x = jax.random.normal(kx, (batch, input_channels, H_in, W_in), jnp.float32)

    cfg, prepared = prepare_fused(params, fc_w, fc_b, batch, H_in, W_in, out_dim)
    fwd = jax.jit(functools.partial(convnet_forward, cfg=cfg))
    out = jax.block_until_ready(fwd(x, prepared))

    ref = convnet_reference(x, params, fc_w, fc_b)
    assert out.shape == (batch, out_dim), out.shape
    assert bool(jnp.all(jnp.isfinite(out)))
    max_err = float(jnp.max(jnp.abs(out - ref)))
    assert max_err < 0.2, (max_err, out, ref)    # bf16 matmuls -> loose tolerance
    print("KERNEL_OK")
</pallas_src>

<mosaic_0001>
module attributes {stable_mosaic.version = 11 : i64} {
  func.func @_fused_convnet_kernel(%arg0: memref<512x9xbf16, #tpu.memory_space<vmem>>, %arg1: memref<9x8xbf16, #tpu.memory_space<vmem>>, %arg2: memref<1x8xf32, #tpu.memory_space<vmem>>, %arg3: memref<72x16xbf16, #tpu.memory_space<vmem>>, %arg4: memref<1x16xf32, #tpu.memory_space<vmem>>, %arg5: memref<16x16x128xbf16, #tpu.memory_space<vmem>>, %arg6: memref<1x128xf32, #tpu.memory_space<vmem>>, %arg7: memref<2x128xf32, #tpu.memory_space<vmem>>, %arg8: memref<232x8xf32, #tpu.memory_space<vmem>>, %arg9: memref<216x16xf32, #tpu.memory_space<vmem>>, %arg10: memref<32x16xf32, #tpu.memory_space<vmem>>) attributes {dimension_semantics = [], scalar_prefetch = 0 : i64, scratch_operands = 3 : i64, tpu.core_type = #tpu.core_type<tc>} {
    %c0 = arith.constant 0 : index
    %c0_0 = arith.constant 0 : index
    %0 = vector.load %arg0[%c0, %c0_0] : memref<512x9xbf16, #tpu.memory_space<vmem>>, vector<512x9xbf16>
    %c0_1 = arith.constant 0 : index
    %c0_2 = arith.constant 0 : index
    %1 = vector.load %arg1[%c0_1, %c0_2] : memref<9x8xbf16, #tpu.memory_space<vmem>>, vector<9x8xbf16>
    %cst = arith.constant dense<0.000000e+00> : vector<512x8xf32>
    %2 = tpu.matmul %0, %1, %cst {dimension_numbers = #tpu.dot_dimension_numbers<[1], [0], [0], [1], [0, 0, 1, 1], [], []>} : vector<512x9xbf16>, vector<9x8xbf16>, vector<512x8xf32> -> vector<512x8xf32>
    %c0_3 = arith.constant 0 : index
    %c0_4 = arith.constant 0 : index
    %3 = vector.load %arg2[%c0_3, %c0_4] : memref<1x8xf32, #tpu.memory_space<vmem>>, vector<1x8xf32>
    %4 = vector.broadcast %3 : vector<1x8xf32> to vector<512x8xf32>
    %5 = arith.addf %2, %4 : vector<512x8xf32>
    %cst_5 = arith.constant 0.000000e+00 : f32
    %6 = vector.broadcast %cst_5 : f32 to vector<512x8xf32>
    %7 = arith.cmpf oge, %5, %6 : vector<512x8xf32>
    %cst_6 = arith.constant 0.00999999977 : f32
    %8 = vector.broadcast %cst_6 : f32 to vector<512x8xf32>
    %9 = arith.mulf %8, %5 : vector<512x8xf32>
    %10 = arith.select %7, %5, %9 : vector<512x8xi1>, vector<512x8xf32>
    %11 = vector.extract_strided_slice %10 {offsets = [0, 0], sizes = [128, 8], strides = [1, 1]} : vector<512x8xf32> to vector<128x8xf32>
    %12 = vector.extract_strided_slice %10 {offsets = [128, 0], sizes = [128, 8], strides = [1, 1]} : vector<512x8xf32> to vector<128x8xf32>
    %13 = arith.maximumf %11, %12 : vector<128x8xf32>
    %14 = vector.extract_strided_slice %10 {offsets = [256, 0], sizes = [128, 8], strides = [1, 1]} : vector<512x8xf32> to vector<128x8xf32>
    %15 = arith.maximumf %13, %14 : vector<128x8xf32>
    %16 = vector.extract_strided_slice %10 {offsets = [384, 0], sizes = [128, 8], strides = [1, 1]} : vector<512x8xf32> to vector<128x8xf32>
    %17 = arith.maximumf %15, %16 : vector<128x8xf32>
    %cst_7 = arith.constant 0.000000e+00 : f32
    %18 = vector.broadcast %cst_7 : f32 to vector<232x8xf32>
    %c0_8 = arith.constant 0 : index
    %c0_9 = arith.constant 0 : index
    %19 = vector.load %arg8[%c0_8, %c0_9] : memref<232x8xf32, #tpu.memory_space<vmem>>, vector<232x8xf32>
    tpu.vector_store %arg8[%c0_8, %c0_9], %18 {strides = array<i32>} : memref<232x8xf32, #tpu.memory_space<vmem>>, vector<232x8xf32>,
    %20 = vector.extract_strided_slice %17 {offsets = [0, 0], sizes = [8, 8], strides = [1, 1]} : vector<128x8xf32> to vector<8x8xf32>
    %c27 = arith.constant 27 : index
    %c0_10 = arith.constant 0 : index
    %21 = vector.load %arg8[%c27, %c0_10] : memref<232x8xf32, #tpu.memory_space<vmem>>, vector<8x8xf32>
    tpu.vector_store %arg8[%c27, %c0_10], %20 {strides = array<i32>} : memref<232x8xf32, #tpu.memory_space<vmem>>, vector<8x8xf32>,
    %22 = vector.extract_strided_slice %17 {offsets = [8, 0], sizes = [8, 8], strides = [1, 1]} : vector<128x8xf32> to vector<8x8xf32>
    %c37 = arith.constant 37 : index
    %c0_11 = arith.constant 0 : index
    %23 = vector.load %arg8[%c37, %c0_11] : memref<232x8xf32, #tpu.memory_space<vmem>>, vector<8x8xf32>
    tpu.vector_store %arg8[%c37, %c0_11], %22 {strides = array<i32>} : memref<232x8xf32, #tpu.memory_space<vmem>>, vector<8x8xf32>,
    %24 = vector.extract_strided_slice %17 {offsets = [16, 0], sizes = [8, 8], strides = [1, 1]} : vector<128x8xf32> to vector<8x8xf32>
    %c47 = arith.constant 47 : index
    %c0_12 = arith.constant 0 : index
    %25 = vector.load %arg8[%c47, %c0_12] : memref<232x8xf32, #tpu.memory_space<vmem>>, vector<8x8xf32>
    tpu.vector_store %arg8[%c47, %c0_12], %24 {strides = array<i32>} : memref<232x8xf32, #tpu.memory_space<vmem>>, vector<8x8xf32>,
    %26 = vector.extract_strided_slice %17 {offsets = [24, 0], sizes = [8, 8], strides = [1, 1]} : vector<128x8xf32> to vector<8x8xf32>
    %c57 = arith.constant 57 : index
    %c0_13 = arith.constant 0 : index
    %27 = vector.load %arg8[%c57, %c0_13] : memref<232x8xf32, #tpu.memory_space<vmem>>, vector<8x8xf32>
    tpu.vector_store %arg8[%c57, %c0_13], %26 {strides = array<i32>} : memref<232x8xf32, #tpu.memory_space<vmem>>, vector<8x8xf32>,
    %28 = vector.extract_strided_slice %17 {offsets = [32, 0], sizes = [8, 8], strides = [1, 1]} : vector<128x8xf32> to vector<8x8xf32>
    %c67 = arith.constant 67 : index
    %c0_14 = arith.constant 0 : index
    %29 = vector.load %arg8[%c67, %c0_14] : memref<232x8xf32, #tpu.memory_space<vmem>>, vector<8x8xf32>
    tpu.vector_store %arg8[%c67, %c0_14], %28 {strides = array<i32>} : memref<232x8xf32, #tpu.memory_space<vmem>>, vector<8x8xf32>,
    %30 = vector.extract_strided_slice %17 {offsets = [40, 0], sizes = [8, 8], strides = [1, 1]} : vector<128x8xf32> to vector<8x8xf32>
    %c77 = arith.constant 77 : index
    %c0_15 = arith.constant 0 : index
    %31 = vector.load %arg8[%c77, %c0_15] : memref<232x8xf32, #tpu.memory_space<vmem>>, vector<8x8xf32>
    tpu.vector_store %arg8[%c77, %c0_15], %30 {strides = array<i32>} : memref<232x8xf32, #tpu.memory_space<vmem>>, vector<8x8xf32>,
    %32 = vector.extract_strided_slice %17 {offsets = [48, 0], sizes = [8, 8], strides = [1, 1]} : vector<128x8xf32> to vector<8x8xf32>
    %c87 = arith.constant 87 : index
    %c0_16 = arith.constant 0 : index
    %33 = vector.load %arg8[%c87, %c0_16] : memref<232x8xf32, #tpu.memory_space<vmem>>, vector<8x8xf32>
    tpu.vector_store %arg8[%c87, %c0_16], %32 {strides = array<i32>} : memref<232x8xf32, #tpu.memory_space<vmem>>, vector<8x8xf32>,
    %34 = vector.extract_strided_slice %17 {offsets = [56, 0], sizes = [8, 8], strides = [1, 1]} : vector<128x8xf32> to vector<8x8xf32>
    %c97 = arith.constant 97 : index
    %c0_17 = arith.constant 0 : index
    %35 = vector.load %arg8[%c97, %c0_17] : memref<232x8xf32, #tpu.memory_space<vmem>>, vector<8x8xf32>
    tpu.vector_store %arg8[%c97, %c0_17], %34 {strides = array<i32>} : memref<232x8xf32, #tpu.memory_space<vmem>>, vector<8x8xf32>,
    %36 = vector.extract_strided_slice %17 {offsets = [64, 0], sizes = [8, 8], strides = [1, 1]} : vector<128x8xf32> to vector<8x8xf32>
    %c127 = arith.constant 127 : index
    %c0_18 = arith.constant 0 : index
    %37 = vector.load %arg8[%c127, %c0_18] : memref<232x8xf32, #tpu.memory_space<vmem>>, vector<8x8xf32>
    tpu.vector_store %arg8[%c127, %c0_18], %36 {strides = array<i32>} : memref<232x8xf32, #tpu.memory_space<vmem>>, vector<8x8xf32>,
    %38 = vector.extract_strided_slice %17 {offsets = [72, 0], sizes = [8, 8], strides = [1, 1]} : vector<128x8xf32> to vector<8x8xf32>
    %c137 = arith.constant 137 : index
    %c0_19 = arith.constant 0 : index
    %39 = vector.load %arg8[%c137, %c0_19] : memref<232x8xf32, #tpu.memory_space<vmem>>, vector<8x8xf32>
    tpu.vector_store %arg8[%c137, %c0_19], %38 {strides = array<i32>} : memref<232x8xf32, #tpu.memory_space<vmem>>, vector<8x8xf32>,
    %40 = vector.extract_strided_slice %17 {offsets = [80, 0], sizes = [8, 8], strides = [1, 1]} : vector<128x8xf32> to vector<8x8xf32>
    %c147 = arith.constant 147 : index
    %c0_20 = arith.constant 0 : index
    %41 = vector.load %arg8[%c147, %c0_20] : memref<232x8xf32, #tpu.memory_space<vmem>>, vector<8x8xf32>
    tpu.vector_store %arg8[%c147, %c0_20], %40 {strides = array<i32>} : memref<232x8xf32, #tpu.memory_space<vmem>>, vector<8x8xf32>,
    %42 = vector.extract_strided_slice %17 {offsets = [88, 0], sizes = [8, 8], strides = [1, 1]} : vector<128x8xf32> to vector<8x8xf32>
    %c157 = arith.constant 157 : index
    %c0_21 = arith.constant 0 : index
    %43 = vector.load %arg8[%c157, %c0_21] : memref<232x8xf32, #tpu.memory_space<vmem>>, vector<8x8xf32>
    tpu.vector_store %arg8[%c157, %c0_21], %42 {strides = array<i32>} : memref<232x8xf32, #tpu.memory_space<vmem>>, vector<8x8xf32>,
    %44 = vector.extract_strided_slice %17 {offsets = [96, 0], sizes = [8, 8], strides = [1, 1]} : vector<128x8xf32> to vector<8x8xf32>
    %c167 = arith.constant 167 : index
    %c0_22 = arith.constant 0 : index
    %45 = vector.load %arg8[%c167, %c0_22] : memref<232x8xf32, #tpu.memory_space<vmem>>, vector<8x8xf32>
    tpu.vector_store %arg8[%c167, %c0_22], %44 {strides = array<i32>} : memref<232x8xf32, #tpu.memory_space<vmem>>, vector<8x8xf32>,
    %46 = vector.extract_strided_slice %17 {offsets = [104, 0], sizes = [8, 8], strides = [1, 1]} : vector<128x8xf32> to vector<8x8xf32>
    %c177 = arith.constant 177 : index
    %c0_23 = arith.constant 0 : index
    %47 = vector.load %arg8[%c177, %c0_23] : memref<232x8xf32, #tpu.memory_space<vmem>>, vector<8x8xf32>
    tpu.vector_store %arg8[%c177, %c0_23], %46 {strides = array<i32>} : memref<232x8xf32, #tpu.memory_space<vmem>>, vector<8x8xf32>,
    %48 = vector.extract_strided_slice %17 {offsets = [112, 0], sizes = [8, 8], strides = [1, 1]} : vector<128x8xf32> to vector<8x8xf32>
    %c187 = arith.constant 187 : index
    %c0_24 = arith.constant 0 : index
    %49 = vector.load %arg8[%c187, %c0_24] : memref<232x8xf32, #tpu.memory_space<vmem>>, vector<8x8xf32>
    tpu.vector_store %arg8[%c187, %c0_24], %48 {strides = array<i32>} : memref<232x8xf32, #tpu.memory_space<vmem>>, vector<8x8xf32>,
    %50 = vector.extract_strided_slice %17 {offsets = [120, 0], sizes = [8, 8], strides = [1, 1]} : vector<128x8xf32> to vector<8x8xf32>
    %c197 = arith.constant 197 : index
    %c0_25 = arith.constant 0 : index
    %51 = vector.load %arg8[%c197, %c0_25] : memref<232x8xf32, #tpu.memory_space<vmem>>, vector<8x8xf32>
    tpu.vector_store %arg8[%c197, %c0_25], %50 {strides = array<i32>} : memref<232x8xf32, #tpu.memory_space<vmem>>, vector<8x8xf32>,
    %c5 = arith.constant 5 : index
    %c0_26 = arith.constant 0 : index
    %52 = vector.load %arg8[%c5, %c0_26] : memref<232x8xf32, #tpu.memory_space<vmem>>, vector<200x8xf32>
    %c6 = arith.constant 6 : index
    %c0_27 = arith.constant 0 : index
    %53 = vector.load %arg8[%c6, %c0_27] : memref<232x8xf32, #tpu.memory_space<vmem>>, vector<200x8xf32>
    %c7 = arith.constant 7 : index
    %c0_28 = arith.constant 0 : index
    %54 = vector.load %arg8[%c7, %c0_28] : memref<232x8xf32, #tpu.memory_space<vmem>>, vector<200x8xf32>
    %c15 = arith.constant 15 : index
    %c0_29 = arith.constant 0 : index
    %55 = vector.load %arg8[%c15, %c0_29] : memref<232x8xf32, #tpu.memory_space<vmem>>, vector<200x8xf32>
    %c16 = arith.constant 16 : index
    %c0_30 = arith.constant 0 : index
    %56 = vector.load %arg8[%c16, %c0_30] : memref<232x8xf32, #tpu.memory_space<vmem>>, vector<200x8xf32>
    %c17 = arith.constant 17 : index
    %c0_31 = arith.constant 0 : index
    %57 = vector.load %arg8[%c17, %c0_31] : memref<232x8xf32, #tpu.memory_space<vmem>>, vector<200x8xf32>
    %c25 = arith.constant 25 : index
    %c0_32 = arith.constant 0 : index
    %58 = vector.load %arg8[%c25, %c0_32] : memref<232x8xf32, #tpu.memory_space<vmem>>, vector<200x8xf32>
    %c26 = arith.constant 26 : index
    %c0_33 = arith.constant 0 : index
    %59 = vector.load %arg8[%c26, %c0_33] : memref<232x8xf32, #tpu.memory_space<vmem>>, vector<200x8xf32>
    %c27_34 = arith.constant 27 : index
    %c0_35 = arith.constant 0 : index
    %60 = vector.load %arg8[%c27_34, %c0_35] : memref<232x8xf32, #tpu.memory_space<vmem>>, vector<200x8xf32>
    %61 = tpu.concatenate %52, %53, %54, %55, %56, %57, %58, %59, %60 in 1 : vector<200x8xf32>, vector<200x8xf32>, vector<200x8xf32>, vector<200x8xf32>, vector<200x8xf32>, vector<200x8xf32>, vector<200x8xf32>, vector<200x8xf32>, vector<200x8xf32> -> vector<200x72xf32>
    %62 = arith.truncf %61 : vector<200x72xf32> to vector<200x72xbf16>
    %c0_36 = arith.constant 0 : index
    %c0_37 = arith.constant 0 : index
    %63 = vector.load %arg3[%c0_36, %c0_37] : memref<72x16xbf16, #tpu.memory_space<vmem>>, vector<72x16xbf16>
    %cst_38 = arith.constant dense<0.000000e+00> : vector<200x16xf32>
    %64 = tpu.matmul %62, %63, %cst_38 {dimension_numbers = #tpu.dot_dimension_numbers<[1], [0], [0], [1], [0, 0, 1, 1], [], []>} : vector<200x72xbf16>, vector<72x16xbf16>, vector<200x16xf32> -> vector<200x16xf32>
    %c0_39 = arith.constant 0 : index
    %c0_40 = arith.constant 0 : index
    %65 = vector.load %arg4[%c0_39, %c0_40] : memref<1x16xf32, #tpu.memory_space<vmem>>, vector<1x16xf32>
    %66 = vector.broadcast %65 : vector<1x16xf32> to vector<200x16xf32>
    %67 = arith.addf %64, %66 : vector<200x16xf32>
    %cst_41 = arith.constant 0.000000e+00 : f32
    %68 = vector.broadcast %cst_41 : f32 to vector<200x16xf32>
    %69 = arith.cmpf oge, %67, %68 : vector<200x16xf32>
    %cst_42 = arith.constant 0.00999999977 : f32
    %70 = vector.broadcast %cst_42 : f32 to vector<200x16xf32>
    %71 = arith.mulf %70, %67 : vector<200x16xf32>
    %72 = arith.select %69, %67, %71 : vector<200x16xi1>, vector<200x16xf32>
    %cst_43 = arith.constant 0.000000e+00 : f32
    %73 = vector.broadcast %cst_43 : f32 to vector<16x16xf32>
    %c200 = arith.constant 200 : index
    %c0_44 = arith.constant 0 : index
    %74 = vector.load %arg9[%c200, %c0_44] : memref<216x16xf32, #tpu.memory_space<vmem>>, vector<16x16xf32>
    tpu.vector_store %arg9[%c200, %c0_44], %73 {strides = array<i32>} : memref<216x16xf32, #tpu.memory_space<vmem>>, vector<16x16xf32>,
    %c0_45 = arith.constant 0 : index
    %c0_46 = arith.constant 0 : index
    %75 = vector.load %arg9[%c0_45, %c0_46] : memref<216x16xf32, #tpu.memory_space<vmem>>, vector<200x16xf32>
    tpu.vector_store %arg9[%c0_45, %c0_46], %72 {strides = array<i32>} : memref<216x16xf32, #tpu.memory_space<vmem>>, vector<200x16xf32>,
    %c1 = arith.constant 1 : index
    %c0_47 = arith.constant 0 : index
    %76 = vector.load %arg9[%c1, %c0_47] : memref<216x16xf32, #tpu.memory_space<vmem>>, vector<200x16xf32>
    %77 = arith.maximumf %72, %76 : vector<200x16xf32>
    %c10 = arith.constant 10 : index
    %c0_48 = arith.constant 0 : index
    %78 = vector.load %arg9[%c10, %c0_48] : memref<216x16xf32, #tpu.memory_space<vmem>>, vector<200x16xf32>
    %79 = arith.maximumf %77, %78 : vector<200x16xf32>
    %c11 = arith.constant 11 : index
    %c0_49 = arith.constant 0 : index
    %80 = vector.load %arg9[%c11, %c0_49] : memref<216x16xf32, #tpu.memory_space<vmem>>, vector<200x16xf32>
    %81 = arith.maximumf %79, %80 : vector<200x16xf32>
    %c0_50 = arith.constant 0 : index
    %c0_51 = arith.constant 0 : index
    %82 = vector.load %arg9[%c0_50, %c0_51] : memref<216x16xf32, #tpu.memory_space<vmem>>, vector<200x16xf32>
    tpu.vector_store %arg9[%c0_50, %c0_51], %81 {strides = array<i32>} : memref<216x16xf32, #tpu.memory_space<vmem>>, vector<200x16xf32>,
    %c11_52 = arith.constant 11 : index
    %c0_53 = arith.constant 0 : index
    %83 = tpu.strided_load %arg9[%c11_52, %c0_53] {strides = array<i32: 2, 1>} : memref<216x16xf32, #tpu.memory_space<vmem>>, vector<4x16xf32>
    %c0_54 = arith.constant 0 : index
    %c0_55 = arith.constant 0 : index
    %84 = vector.load %arg10[%c0_54, %c0_55] : memref<32x16xf32, #tpu.memory_space<vmem>>, vector<4x16xf32>
    tpu.vector_store %arg10[%c0_54, %c0_55], %83 {strides = array<i32>} : memref<32x16xf32, #tpu.memory_space<vmem>>, vector<4x16xf32>,
    %c31 = arith.constant 31 : index
    %c0_56 = arith.constant 0 : index
    %85 = tpu.strided_load %arg9[%c31, %c0_56] {strides = array<i32: 2, 1>} : memref<216x16xf32, #tpu.memory_space<vmem>>, vector<4x16xf32>
    %c4 = arith.constant 4 : index
    %c0_57 = arith.constant 0 : index
    %86 = vector.load %arg10[%c4, %c0_57] : memref<32x16xf32, #tpu.memory_space<vmem>>, vector<4x16xf32>
    tpu.vector_store %arg10[%c4, %c0_57], %85 {strides = array<i32>} : memref<32x16xf32, #tpu.memory_space<vmem>>, vector<4x16xf32>,
    %c51 = arith.constant 51 : index
    %c0_58 = arith.constant 0 : index
    %87 = tpu.strided_load %arg9[%c51, %c0_58] {strides = array<i32: 2, 1>} : memref<216x16xf32, #tpu.memory_space<vmem>>, vector<4x16xf32>
    %c8 = arith.constant 8 : index
    %c0_59 = arith.constant 0 : index
    %88 = vector.load %arg10[%c8, %c0_59] : memref<32x16xf32, #tpu.memory_space<vmem>>, vector<4x16xf32>
    tpu.vector_store %arg10[%c8, %c0_59], %87 {strides = array<i32>} : memref<32x16xf32, #tpu.memory_space<vmem>>, vector<4x16xf32>,
    %c71 = arith.constant 71 : index
    %c0_60 = arith.constant 0 : index
    %89 = tpu.strided_load %arg9[%c71, %c0_60] {strides = array<i32: 2, 1>} : memref<216x16xf32, #tpu.memory_space<vmem>>, vector<4x16xf32>
    %c12 = arith.constant 12 : index
    %c0_61 = arith.constant 0 : index
    %90 = vector.load %arg10[%c12, %c0_61] : memref<32x16xf32, #tpu.memory_space<vmem>>, vector<4x16xf32>
    tpu.vector_store %arg10[%c12, %c0_61], %89 {strides = array<i32>} : memref<32x16xf32, #tpu.memory_space<vmem>>, vector<4x16xf32>,
    %c111 = arith.constant 111 : index
    %c0_62 = arith.constant 0 : index
    %91 = tpu.strided_load %arg9[%c111, %c0_62] {strides = array<i32: 2, 1>} : memref<216x16xf32, #tpu.memory_space<vmem>>, vector<4x16xf32>
    %c16_63 = arith.constant 16 : index
    %c0_64 = arith.constant 0 : index
    %92 = vector.load %arg10[%c16_63, %c0_64] : memref<32x16xf32, #tpu.memory_space<vmem>>, vector<4x16xf32>
    tpu.vector_store %arg10[%c16_63, %c0_64], %91 {strides = array<i32>} : memref<32x16xf32, #tpu.memory_space<vmem>>, vector<4x16xf32>,
    %c131 = arith.constant 131 : index
    %c0_65 = arith.constant 0 : index
    %93 = tpu.strided_load %arg9[%c131, %c0_65] {strides = array<i32: 2, 1>} : memref<216x16xf32, #tpu.memory_space<vmem>>, vector<4x16xf32>
    %c20 = arith.constant 20 : index
    %c0_66 = arith.constant 0 : index
    %94 = vector.load %arg10[%c20, %c0_66] : memref<32x16xf32, #tpu.memory_space<vmem>>, vector<4x16xf32>
    tpu.vector_store %arg10[%c20, %c0_66], %93 {strides = array<i32>} : memref<32x16xf32, #tpu.memory_space<vmem>>, vector<4x16xf32>,
    %c151 = arith.constant 151 : index
    %c0_67 = arith.constant 0 : index
    %95 = tpu.strided_load %arg9[%c151, %c0_67] {strides = array<i32: 2, 1>} : memref<216x16xf32, #tpu.memory_space<vmem>>, vector<4x16xf32>
    %c24 = arith.constant 24 : index
    %c0_68 = arith.constant 0 : index
    %96 = vector.load %arg10[%c24, %c0_68] : memref<32x16xf32, #tpu.memory_space<vmem>>, vector<4x16xf32>
    tpu.vector_store %arg10[%c24, %c0_68], %95 {strides = array<i32>} : memref<32x16xf32, #tpu.memory_space<vmem>>, vector<4x16xf32>,
    %c171 = arith.constant 171 : index
    %c0_69 = arith.constant 0 : index
    %97 = tpu.strided_load %arg9[%c171, %c0_69] {strides = array<i32: 2, 1>} : memref<216x16xf32, #tpu.memory_space<vmem>>, vector<4x16xf32>
    %c28 = arith.constant 28 : index
    %c0_70 = arith.constant 0 : index
    %98 = vector.load %arg10[%c28, %c0_70] : memref<32x16xf32, #tpu.memory_space<vmem>>, vector<4x16xf32>
    tpu.vector_store %arg10[%c28, %c0_70], %97 {strides = array<i32>} : memref<32x16xf32, #tpu.memory_space<vmem>>, vector<4x16xf32>,
    %cst_71 = arith.constant 0.000000e+00 : f32
    %99 = vector.broadcast %cst_71 : f32 to vector<2x128xf32>
    %c0_72 = arith.constant 0 : index
    %c0_73 = arith.constant 0 : index
    %100 = tpu.strided_load %arg10[%c0_72, %c0_73] {strides = array<i32: 16, 1>} : memref<32x16xf32, #tpu.memory_space<vmem>>, vector<2x16xf32>
    %101 = arith.truncf %100 : vector<2x16xf32> to vector<2x16xbf16>
    %c0_74 = arith.constant 0 : index
    %c0_75 = arith.constant 0 : index
    %c0_76 = arith.constant 0 : index
    %102 = vector.load %arg5[%c0_74, %c0_75, %c0_76] : memref<16x16x128xbf16, #tpu.memory_space<vmem>>, vector<1x16x128xbf16>
    %103 = vector.shape_cast %102 : vector<1x16x128xbf16> to vector<16x128xbf16>
    %cst_77 = arith.constant dense<0.000000e+00> : vector<2x128xf32>
    %104 = tpu.matmul %101, %103, %cst_77 {dimension_numbers = #tpu.dot_dimension_numbers<[1], [0], [0], [1], [0, 0, 1, 1], [], []>} : vector<2x16xbf16>, vector<16x128xbf16>, vector<2x128xf32> -> vector<2x128xf32>
    %105 = arith.addf %99, %104 : vector<2x128xf32>
    %c1_78 = arith.constant 1 : index
    %c0_79 = arith.constant 0 : index
    %106 = tpu.strided_load %arg10[%c1_78, %c0_79] {strides = array<i32: 16, 1>} : memref<32x16xf32, #tpu.memory_space<vmem>>, vector<2x16xf32>
    %107 = arith.truncf %106 : vector<2x16xf32> to vector<2x16xbf16>
    %c1_80 = arith.constant 1 : index
    %c0_81 = arith.constant 0 : index
    %c0_82 = arith.constant 0 : index
    %108 = vector.load %arg5[%c1_80, %c0_81, %c0_82] : memref<16x16x128xbf16, #tpu.memory_space<vmem>>, vector<1x16x128xbf16>
    %109 = vector.shape_cast %108 : vector<1x16x128xbf16> to vector<16x128xbf16>
    %cst_83 = arith.constant dense<0.000000e+00> : vector<2x128xf32>
    %110 = tpu.matmul %107, %109, %cst_83 {dimension_numbers = #tpu.dot_dimension_numbers<[1], [0], [0], [1], [0, 0, 1, 1], [], []>} : vector<2x16xbf16>, vector<16x128xbf16>, vector<2x128xf32> -> vector<2x128xf32>
    %111 = arith.addf %105, %110 : vector<2x128xf32>
    %c2 = arith.constant 2 : index
    %c0_84 = arith.constant 0 : index
    %112 = tpu.strided_load %arg10[%c2, %c0_84] {strides = array<i32: 16, 1>} : memref<32x16xf32, #tpu.memory_space<vmem>>, vector<2x16xf32>
    %113 = arith.truncf %112 : vector<2x16xf32> to vector<2x16xbf16>
    %c2_85 = arith.constant 2 : index
    %c0_86 = arith.constant 0 : index
    %c0_87 = arith.constant 0 : index
    %114 = vector.load %arg5[%c2_85, %c0_86, %c0_87] : memref<16x16x128xbf16, #tpu.memory_space<vmem>>, vector<1x16x128xbf16>
    %115 = vector.shape_cast %114 : vector<1x16x128xbf16> to vector<16x128xbf16>
    %cst_88 = arith.constant dense<0.000000e+00> : vector<2x128xf32>
    %116 = tpu.matmul %113, %115, %cst_88 {dimension_numbers = #tpu.dot_dimension_numbers<[1], [0], [0], [1], [0, 0, 1, 1], [], []>} : vector<2x16xbf16>, vector<16x128xbf16>, vector<2x128xf32> -> vector<2x128xf32>
    %117 = arith.addf %111, %116 : vector<2x128xf32>
    %c3 = arith.constant 3 : index
    %c0_89 = arith.constant 0 : index
    %118 = tpu.strided_load %arg10[%c3, %c0_89] {strides = array<i32: 16, 1>} : memref<32x16xf32, #tpu.memory_space<vmem>>, vector<2x16xf32>
    %119 = arith.truncf %118 : vector<2x16xf32> to vector<2x16xbf16>
    %c3_90 = arith.constant 3 : index
    %c0_91 = arith.constant 0 : index
    %c0_92 = arith.constant 0 : index
    %120 = vector.load %arg5[%c3_90, %c0_91, %c0_92] : memref<16x16x128xbf16, #tpu.memory_space<vmem>>, vector<1x16x128xbf16>
    %121 = vector.shape_cast %120 : vector<1x16x128xbf16> to vector<16x128xbf16>
    %cst_93 = arith.constant dense<0.000000e+00> : vector<2x128xf32>
    %122 = tpu.matmul %119, %121, %cst_93 {dimension_numbers = #tpu.dot_dimension_numbers<[1], [0], [0], [1], [0, 0, 1, 1], [], []>} : vector<2x16xbf16>, vector<16x128xbf16>, vector<2x128xf32> -> vector<2x128xf32>
    %123 = arith.addf %117, %122 : vector<2x128xf32>
    %c4_94 = arith.constant 4 : index
    %c0_95 = arith.constant 0 : index
    %124 = tpu.strided_load %arg10[%c4_94, %c0_95] {strides = array<i32: 16, 1>} : memref<32x16xf32, #tpu.memory_space<vmem>>, vector<2x16xf32>
    %125 = arith.truncf %124 : vector<2x16xf32> to vector<2x16xbf16>
    %c4_96 = arith.constant 4 : index
    %c0_97 = arith.constant 0 : index
    %c0_98 = arith.constant 0 : index
    %126 = vector.load %arg5[%c4_96, %c0_97, %c0_98] : memref<16x16x128xbf16, #tpu.memory_space<vmem>>, vector<1x16x128xbf16>
    %127 = vector.shape_cast %126 : vector<1x16x128xbf16> to vector<16x128xbf16>
    %cst_99 = arith.constant dense<0.000000e+00> : vector<2x128xf32>
    %128 = tpu.matmul %125, %127, %cst_99 {dimension_numbers = #tpu.dot_dimension_numbers<[1], [0], [0], [1], [0, 0, 1, 1], [], []>} : vector<2x16xbf16>, vector<16x128xbf16>, vector<2x128xf32> -> vector<2x128xf32>
    %129 = arith.addf %123, %128 : vector<2x128xf32>
    %c5_100 = arith.constant 5 : index
    %c0_101 = arith.constant 0 : index
    %130 = tpu.strided_load %arg10[%c5_100, %c0_101] {strides = array<i32: 16, 1>} : memref<32x16xf32, #tpu.memory_space<vmem>>, vector<2x16xf32>
    %131 = arith.truncf %130 : vector<2x16xf32> to vector<2x16xbf16>
    %c5_102 = arith.constant 5 : index
    %c0_103 = arith.constant 0 : index
    %c0_104 = arith.constant 0 : index
    %132 = vector.load %arg5[%c5_102, %c0_103, %c0_104] : memref<16x16x128xbf16, #tpu.memory_space<vmem>>, vector<1x16x128xbf16>
    %133 = vector.shape_cast %132 : vector<1x16x128xbf16> to vector<16x128xbf16>
    %cst_105 = arith.constant dense<0.000000e+00> : vector<2x128xf32>
    %134 = tpu.matmul %131, %133, %cst_105 {dimension_numbers = #tpu.dot_dimension_numbers<[1], [0], [0], [1], [0, 0, 1, 1], [], []>} : vector<2x16xbf16>, vector<16x128xbf16>, vector<2x128xf32> -> vector<2x128xf32>
    %135 = arith.addf %129, %134 : vector<2x128xf32>
    %c6_106 = arith.constant 6 : index
    %c0_107 = arith.constant 0 : index
    %136 = tpu.strided_load %arg10[%c6_106, %c0_107] {strides = array<i32: 16, 1>} : memref<32x16xf32, #tpu.memory_space<vmem>>, vector<2x16xf32>
    %137 = arith.truncf %136 : vector<2x16xf32> to vector<2x16xbf16>
    %c6_108 = arith.constant 6 : index
    %c0_109 = arith.constant 0 : index
    %c0_110 = arith.constant 0 : index
    %138 = vector.load %arg5[%c6_108, %c0_109, %c0_110] : memref<16x16x128xbf16, #tpu.memory_space<vmem>>, vector<1x16x128xbf16>
    %139 = vector.shape_cast %138 : vector<1x16x128xbf16> to vector<16x128xbf16>
    %cst_111 = arith.constant dense<0.000000e+00> : vector<2x128xf32>
    %140 = tpu.matmul %137, %139, %cst_111 {dimension_numbers = #tpu.dot_dimension_numbers<[1], [0], [0], [1], [0, 0, 1, 1], [], []>} : vector<2x16xbf16>, vector<16x128xbf16>, vector<2x128xf32> -> vector<2x128xf32>
    %141 = arith.addf %135, %140 : vector<2x128xf32>
    %c7_112 = arith.constant 7 : index
    %c0_113 = arith.constant 0 : index
    %142 = tpu.strided_load %arg10[%c7_112, %c0_113] {strides = array<i32: 16, 1>} : memref<32x16xf32, #tpu.memory_space<vmem>>, vector<2x16xf32>
    %143 = arith.truncf %142 : vector<2x16xf32> to vector<2x16xbf16>
    %c7_114 = arith.constant 7 : index
    %c0_115 = arith.constant 0 : index
    %c0_116 = arith.constant 0 : index
    %144 = vector.load %arg5[%c7_114, %c0_115, %c0_116] : memref<16x16x128xbf16, #tpu.memory_space<vmem>>, vector<1x16x128xbf16>
    %145 = vector.shape_cast %144 : vector<1x16x128xbf16> to vector<16x128xbf16>
    %cst_117 = arith.constant dense<0.000000e+00> : vector<2x128xf32>
    %146 = tpu.matmul %143, %145, %cst_117 {dimension_numbers = #tpu.dot_dimension_numbers<[1], [0], [0], [1], [0, 0, 1, 1], [], []>} : vector<2x16xbf16>, vector<16x128xbf16>, vector<2x128xf32> -> vector<2x128xf32>
    %147 = arith.addf %141, %146 : vector<2x128xf32>
    %c8_118 = arith.constant 8 : index
    %c0_119 = arith.constant 0 : index
    %148 = tpu.strided_load %arg10[%c8_118, %c0_119] {strides = array<i32: 16, 1>} : memref<32x16xf32, #tpu.memory_space<vmem>>, vector<2x16xf32>
    %149 = arith.truncf %148 : vector<2x16xf32> to vector<2x16xbf16>
    %c8_120 = arith.constant 8 : index
    %c0_121 = arith.constant 0 : index
    %c0_122 = arith.constant 0 : index
    %150 = vector.load %arg5[%c8_120, %c0_121, %c0_122] : memref<16x16x128xbf16, #tpu.memory_space<vmem>>, vector<1x16x128xbf16>
    %151 = vector.shape_cast %150 : vector<1x16x128xbf16> to vector<16x128xbf16>
    %cst_123 = arith.constant dense<0.000000e+00> : vector<2x128xf32>
    %152 = tpu.matmul %149, %151, %cst_123 {dimension_numbers = #tpu.dot_dimension_numbers<[1], [0], [0], [1], [0, 0, 1, 1], [], []>} : vector<2x16xbf16>, vector<16x128xbf16>, vector<2x128xf32> -> vector<2x128xf32>
    %153 = arith.addf %147, %152 : vector<2x128xf32>
    %c9 = arith.constant 9 : index
    %c0_124 = arith.constant 0 : index
    %154 = tpu.strided_load %arg10[%c9, %c0_124] {strides = array<i32: 16, 1>} : memref<32x16xf32, #tpu.memory_space<vmem>>, vector<2x16xf32>
    %155 = arith.truncf %154 : vector<2x16xf32> to vector<2x16xbf16>
    %c9_125 = arith.constant 9 : index
    %c0_126 = arith.constant 0 : index
    %c0_127 = arith.constant 0 : index
    %156 = vector.load %arg5[%c9_125, %c0_126, %c0_127] : memref<16x16x128xbf16, #tpu.memory_space<vmem>>, vector<1x16x128xbf16>
    %157 = vector.shape_cast %156 : vector<1x16x128xbf16> to vector<16x128xbf16>
    %cst_128 = arith.constant dense<0.000000e+00> : vector<2x128xf32>
    %158 = tpu.matmul %155, %157, %cst_128 {dimension_numbers = #tpu.dot_dimension_numbers<[1], [0], [0], [1], [0, 0, 1, 1], [], []>} : vector<2x16xbf16>, vector<16x128xbf16>, vector<2x128xf32> -> vector<2x128xf32>
    %159 = arith.addf %153, %158 : vector<2x128xf32>
    %c10_129 = arith.constant 10 : index
    %c0_130 = arith.constant 0 : index
    %160 = tpu.strided_load %arg10[%c10_129, %c0_130] {strides = array<i32: 16, 1>} : memref<32x16xf32, #tpu.memory_space<vmem>>, vector<2x16xf32>
    %161 = arith.truncf %160 : vector<2x16xf32> to vector<2x16xbf16>
    %c10_131 = arith.constant 10 : index
    %c0_132 = arith.constant 0 : index
    %c0_133 = arith.constant 0 : index
    %162 = vector.load %arg5[%c10_131, %c0_132, %c0_133] : memref<16x16x128xbf16, #tpu.memory_space<vmem>>, vector<1x16x128xbf16>
    %163 = vector.shape_cast %162 : vector<1x16x128xbf16> to vector<16x128xbf16>
    %cst_134 = arith.constant dense<0.000000e+00> : vector<2x128xf32>
    %164 = tpu.matmul %161, %163, %cst_134 {dimension_numbers = #tpu.dot_dimension_numbers<[1], [0], [0], [1], [0, 0, 1, 1], [], []>} : vector<2x16xbf16>, vector<16x128xbf16>, vector<2x128xf32> -> vector<2x128xf32>
    %165 = arith.addf %159, %164 : vector<2x128xf32>
    %c11_135 = arith.constant 11 : index
    %c0_136 = arith.constant 0 : index
    %166 = tpu.strided_load %arg10[%c11_135, %c0_136] {strides = array<i32: 16, 1>} : memref<32x16xf32, #tpu.memory_space<vmem>>, vector<2x16xf32>
    %167 = arith.truncf %166 : vector<2x16xf32> to vector<2x16xbf16>
    %c11_137 = arith.constant 11 : index
    %c0_138 = arith.constant 0 : index
    %c0_139 = arith.constant 0 : index
    %168 = vector.load %arg5[%c11_137, %c0_138, %c0_139] : memref<16x16x128xbf16, #tpu.memory_space<vmem>>, vector<1x16x128xbf16>
    %169 = vector.shape_cast %168 : vector<1x16x128xbf16> to vector<16x128xbf16>
    %cst_140 = arith.constant dense<0.000000e+00> : vector<2x128xf32>
    %170 = tpu.matmul %167, %169, %cst_140 {dimension_numbers = #tpu.dot_dimension_numbers<[1], [0], [0], [1], [0, 0, 1, 1], [], []>} : vector<2x16xbf16>, vector<16x128xbf16>, vector<2x128xf32> -> vector<2x128xf32>
    %171 = arith.addf %165, %170 : vector<2x128xf32>
    %c12_141 = arith.constant 12 : index
    %c0_142 = arith.constant 0 : index
    %172 = tpu.strided_load %arg10[%c12_141, %c0_142] {strides = array<i32: 16, 1>} : memref<32x16xf32, #tpu.memory_space<vmem>>, vector<2x16xf32>
    %173 = arith.truncf %172 : vector<2x16xf32> to vector<2x16xbf16>
    %c12_143 = arith.constant 12 : index
    %c0_144 = arith.constant 0 : index
    %c0_145 = arith.constant 0 : index
    %174 = vector.load %arg5[%c12_143, %c0_144, %c0_145] : memref<16x16x128xbf16, #tpu.memory_space<vmem>>, vector<1x16x128xbf16>
    %175 = vector.shape_cast %174 : vector<1x16x128xbf16> to vector<16x128xbf16>
    %cst_146 = arith.constant dense<0.000000e+00> : vector<2x128xf32>
    %176 = tpu.matmul %173, %175, %cst_146 {dimension_numbers = #tpu.dot_dimension_numbers<[1], [0], [0], [1], [0, 0, 1, 1], [], []>} : vector<2x16xbf16>, vector<16x128xbf16>, vector<2x128xf32> -> vector<2x128xf32>
    %177 = arith.addf %171, %176 : vector<2x128xf32>
    %c13 = arith.constant 13 : index
    %c0_147 = arith.constant 0 : index
    %178 = tpu.strided_load %arg10[%c13, %c0_147] {strides = array<i32: 16, 1>} : memref<32x16xf32, #tpu.memory_space<vmem>>, vector<2x16xf32>
    %179 = arith.truncf %178 : vector<2x16xf32> to vector<2x16xbf16>
    %c13_148 = arith.constant 13 : index
    %c0_149 = arith.constant 0 : index
    %c0_150 = arith.constant 0 : index
    %180 = vector.load %arg5[%c13_148, %c0_149, %c0_150] : memref<16x16x128xbf16, #tpu.memory_space<vmem>>, vector<1x16x128xbf16>
    %181 = vector.shape_cast %180 : vector<1x16x128xbf16> to vector<16x128xbf16>
    %cst_151 = arith.constant dense<0.000000e+00> : vector<2x128xf32>
    %182 = tpu.matmul %179, %181, %cst_151 {dimension_numbers = #tpu.dot_dimension_numbers<[1], [0], [0], [1], [0, 0, 1, 1], [], []>} : vector<2x16xbf16>, vector<16x128xbf16>, vector<2x128xf32> -> vector<2x128xf32>
    %183 = arith.addf %177, %182 : vector<2x128xf32>
    %c14 = arith.constant 14 : index
    %c0_152 = arith.constant 0 : index
    %184 = tpu.strided_load %arg10[%c14, %c0_152] {strides = array<i32: 16, 1>} : memref<32x16xf32, #tpu.memory_space<vmem>>, vector<2x16xf32>
    %185 = arith.truncf %184 : vector<2x16xf32> to vector<2x16xbf16>
    %c14_153 = arith.constant 14 : index
    %c0_154 = arith.constant 0 : index
    %c0_155 = arith.constant 0 : index
    %186 = vector.load %arg5[%c14_153, %c0_154, %c0_155] : memref<16x16x128xbf16, #tpu.memory_space<vmem>>, vector<1x16x128xbf16>
    %187 = vector.shape_cast %186 : vector<1x16x128xbf16> to vector<16x128xbf16>
    %cst_156 = arith.constant dense<0.000000e+00> : vector<2x128xf32>
    %188 = tpu.matmul %185, %187, %cst_156 {dimension_numbers = #tpu.dot_dimension_numbers<[1], [0], [0], [1], [0, 0, 1, 1], [], []>} : vector<2x16xbf16>, vector<16x128xbf16>, vector<2x128xf32> -> vector<2x128xf32>
    %189 = arith.addf %183, %188 : vector<2x128xf32>
    %c15_157 = arith.constant 15 : index
    %c0_158 = arith.constant 0 : index
    %190 = tpu.strided_load %arg10[%c15_157, %c0_158] {strides = array<i32: 16, 1>} : memref<32x16xf32, #tpu.memory_space<vmem>>, vector<2x16xf32>
    %191 = arith.truncf %190 : vector<2x16xf32> to vector<2x16xbf16>
    %c15_159 = arith.constant 15 : index
    %c0_160 = arith.constant 0 : index
    %c0_161 = arith.constant 0 : index
    %192 = vector.load %arg5[%c15_159, %c0_160, %c0_161] : memref<16x16x128xbf16, #tpu.memory_space<vmem>>, vector<1x16x128xbf16>
    %193 = vector.shape_cast %192 : vector<1x16x128xbf16> to vector<16x128xbf16>
    %cst_162 = arith.constant dense<0.000000e+00> : vector<2x128xf32>
    %194 = tpu.matmul %191, %193, %cst_162 {dimension_numbers = #tpu.dot_dimension_numbers<[1], [0], [0], [1], [0, 0, 1, 1], [], []>} : vector<2x16xbf16>, vector<16x128xbf16>, vector<2x128xf32> -> vector<2x128xf32>
    %195 = arith.addf %189, %194 : vector<2x128xf32>
    %c0_163 = arith.constant 0 : index
    %c0_164 = arith.constant 0 : index
    %196 = vector.load %arg6[%c0_163, %c0_164] : memref<1x128xf32, #tpu.memory_space<vmem>>, vector<1x128xf32>
    %197 = vector.broadcast %196 : vector<1x128xf32> to vector<2x128xf32>
    %198 = arith.addf %195, %197 : vector<2x128xf32>
    %c0_165 = arith.constant 0 : index
    %c0_166 = arith.constant 0 : index
    %199 = vector.load %arg7[%c0_165, %c0_166] : memref<2x128xf32, #tpu.memory_space<vmem>>, vector<2x128xf32>
    tpu.vector_store %arg7[%c0_165, %c0_166], %198 {strides = array<i32>} : memref<2x128xf32, #tpu.memory_space<vmem>>, vector<2x128xf32>,
    return
  }
}

</mosaic_0001>

<llo_original>
// kernel: convnet_forward.1
$region0: #{convnet_forward.1}
  #allocation0 [shape = 'u32[]', space=smem, size = 0x4, offset = 0x4, fixed_abs, tag = 'smem constant byte address 0x4 - core index']
  #allocation1 [shape = 'u32[72,128]{1,0:T(1,128)}', space=vmem, size = 0x9000, scoped, tag = 'internal scratch']
  #allocation2 [shape = 'f32[232,8]{1,0:T(8,128)}', space=vmem, size = 0x1d000, scoped, tag = 'scratch operand']
  #allocation3 [shape = 'f32[216,16]{1,0:T(8,128)}', space=vmem, size = 0x1b000, scoped, tag = 'scratch operand']
  #allocation4 [shape = 'f32[32,16]{1,0:T(8,128)}', space=vmem, size = 0x4000, scoped, tag = 'scratch operand']
  %s0 = inlined_call_operand.vmem [shape: bf16[512,9], index: 0, kind: input, shape index: {}]
  %s1 = inlined_call_operand.vmem [shape: bf16[9,8], index: 1, kind: input, shape index: {}]
  %s2 = inlined_call_operand.vmem [shape: f32[1,8], index: 2, kind: input, shape index: {}]
  %s3 = inlined_call_operand.vmem [shape: bf16[72,16], index: 3, kind: input, shape index: {}]
  %s4 = inlined_call_operand.vmem [shape: f32[1,16], index: 4, kind: input, shape index: {}]
  %s5 = inlined_call_operand.vmem [shape: bf16[16,16,128], index: 5, kind: input, shape index: {}]
  %s6 = inlined_call_operand.vmem [shape: f32[1,128], index: 6, kind: input, shape index: {}]
  %s7 = inlined_call_operand.hbm [shape: f32[2,128], index: 7, kind: output, shape index: {}]
  %s8 = sld [smem:[#allocation0]]
  $region38: #{convnet_forward.1} parent=0
    _
  %s10 = ssub.s32 1, %s8
  %s11 = scalar_select 0, %s10, %s8
  $region1: #{convnet_forward.1} parent=0
    #allocation5 [shape = 'u8[1024]{0}', space=vmem, size = 0x400, scoped, tag = 'output window, operand 0, single buffered']
    #allocation6 [shape = 's32[1]{0}', space=sflag, size = 0x4, scoped, tag = 'scoped memory for convnet_forward.1']
    %12 = vsyncpa [#allocation6], 0
    // Predicated region
    $region2: #{convnet_forward.1} parent=1 // pred_check
      _
    $region3: #{convnet_forward.1} parent=1 // pred_check_branch
      %14 = sbr.rel (0) target = $region5
    $region4: #{convnet_forward.1} parent=1 // pred_region
      _
    $region5: #{convnet_forward.1} parent=1 // pred_fallthru
      _
    // Predicated region
    $region6: #{convnet_forward.1} parent=1 // pred_check
      _
    $region7: #{convnet_forward.1} parent=1 // pred_check_branch
      %16 = sbr.rel (0) target = $region9
    $region8: #{convnet_forward.1} parent=1 // pred_region
      _
    $region9: #{convnet_forward.1} parent=1 // pred_fallthru
      _
    // Predicated region
    $region10: #{convnet_forward.1} parent=1 // pred_check
      _
    $region11: #{convnet_forward.1} parent=1 // pred_check_branch
      %18 = sbr.rel (0) target = $region13
    $region12: #{convnet_forward.1} parent=1 // pred_region
      _
    $region13: #{convnet_forward.1} parent=1 // pred_fallthru
      _
    // Predicated region
    $region14: #{convnet_forward.1} parent=1 // pred_check
      _
    $region15: #{convnet_forward.1} parent=1 // pred_check_branch
      %20 = sbr.rel (0) target = $region17
    $region16: #{convnet_forward.1} parent=1 // pred_region
      _
    $region17: #{convnet_forward.1} parent=1 // pred_fallthru
      _
    // Predicated region
    $region18: #{convnet_forward.1} parent=1 // pred_check
      _
    $region19: #{convnet_forward.1} parent=1 // pred_check_branch
      %22 = sbr.rel (0) target = $region21
    $region20: #{convnet_forward.1} parent=1 // pred_region
      _
    $region21: #{convnet_forward.1} parent=1 // pred_fallthru
      _
    // Predicated region
    $region22: #{convnet_forward.1} parent=1 // pred_check
      _
    $region23: #{convnet_forward.1} parent=1 // pred_check_branch
      %24 = sbr.rel (0) target = $region25
    $region24: #{convnet_forward.1} parent=1 // pred_region
      _
    $region25: #{convnet_forward.1} parent=1 // pred_fallthru
      _
    // Predicated region
    $region26: #{convnet_forward.1} parent=1 // pred_check
      _
    $region27: #{convnet_forward.1} parent=1 // pred_check_branch
      %26 = sbr.rel (0) target = $region29
    $region28: #{convnet_forward.1} parent=1 // pred_region
      _
    $region29: #{convnet_forward.1} parent=1 // pred_fallthru
      _
    %v28 = vld [vmem:[%s0] sm:$0xf]
    %v29 = vld [vmem:[%s0 + $0x4] sm:$0xf]
    %v30 = vld [vmem:[%s0 + $0x8] sm:$0xf]
    %v31 = vld [vmem:[%s0 + $0xc] sm:$0xf]
    %v32 = vld [vmem:[%s0 + $0x10] sm:$0xf]
    %v33 = vld [vmem:[%s0 + $0x14] sm:$0xf]
    %v34 = vld [vmem:[%s0 + $0x18] sm:$0xf]
    %v35 = vld [vmem:[%s0 + $0x1c] sm:$0xf]
    %v36 = vld [vmem:[%s0 + $0x20] sm:$0xf]
    %v37 = vld [vmem:[%s0 + $0x24] sm:$0xf]
    %v38 = vld [vmem:[%s0 + $0x28] sm:$0xf]
    %v39 = vld [vmem:[%s0 + $0x2c] sm:$0xf]
    %v40 = vld [vmem:[%s0 + $0x30] sm:$0xf]
    %v41 = vld [vmem:[%s0 + $0x34] sm:$0xf]
    %v42 = vld [vmem:[%s0 + $0x38] sm:$0xf]
    %v43 = vld [vmem:[%s0 + $0x3c] sm:$0xf]
    %v44 = vld [vmem:[%s0 + $0x40] sm:$0xf]
    %v45 = vld [vmem:[%s0 + $0x44] sm:$0xf]
    %v46 = vld [vmem:[%s0 + $0x48] sm:$0xf]
    %v47 = vld [vmem:[%s0 + $0x4c] sm:$0xf]
    %v48 = vld [vmem:[%s0 + $0x50] sm:$0xf]
    %v49 = vld [vmem:[%s0 + $0x54] sm:$0xf]
    %v50 = vld [vmem:[%s0 + $0x58] sm:$0xf]
    %v51 = vld [vmem:[%s0 + $0x5c] sm:$0xf]
    %v52 = vld [vmem:[%s0 + $0x60] sm:$0xf]
    %v53 = vld [vmem:[%s0 + $0x64] sm:$0xf]
    %v54 = vld [vmem:[%s0 + $0x68] sm:$0xf]
    %v55 = vld [vmem:[%s0 + $0x6c] sm:$0xf]
    %v56 = vld [vmem:[%s0 + $0x70] sm:$0xf]
    %v57 = vld [vmem:[%s0 + $0x74] sm:$0xf]
    %v58 = vld [vmem:[%s0 + $0x78] sm:$0xf]
    %v59 = vld [vmem:[%s0 + $0x7c] sm:$0xf]
    %v60 = vld [vmem:[%s0 + $0x80] sm:$0xf]
    %v61 = vld [vmem:[%s0 + $0x84] sm:$0xf]
    %v62 = vld [vmem:[%s0 + $0x88] sm:$0xf]
    %v63 = vld [vmem:[%s0 + $0x8c] sm:$0xf]
    %v64 = vld [vmem:[%s0 + $0x90] sm:$0xf]
    %v65 = vld [vmem:[%s0 + $0x94] sm:$0xf]
    %v66 = vld [vmem:[%s0 + $0x98] sm:$0xf]
    %v67 = vld [vmem:[%s0 + $0x9c] sm:$0xf]
    %v68 = vld [vmem:[%s0 + $0xa0] sm:$0xf]
    %v69 = vld [vmem:[%s0 + $0xa4] sm:$0xf]
    %v70 = vld [vmem:[%s0 + $0xa8] sm:$0xf]
    %v71 = vld [vmem:[%s0 + $0xac] sm:$0xf]
    %v72 = vld [vmem:[%s0 + $0xb0] sm:$0xf]
    %v73 = vld [vmem:[%s0 + $0xb4] sm:$0xf]
    %v74 = vld [vmem:[%s0 + $0xb8] sm:$0xf]
    %v75 = vld [vmem:[%s0 + $0xbc] sm:$0xf]
    %v76 = vld [vmem:[%s0 + $0xc0] sm:$0xf]
    %v77 = vld [vmem:[%s0 + $0xc4] sm:$0xf]
    %v78 = vld [vmem:[%s0 + $0xc8] sm:$0xf]
    %v79 = vld [vmem:[%s0 + $0xcc] sm:$0xf]
    %v80 = vld [vmem:[%s0 + $0xd0] sm:$0xf]
    %v81 = vld [vmem:[%s0 + $0xd4] sm:$0xf]
    %v82 = vld [vmem:[%s0 + $0xd8] sm:$0xf]
    %v83 = vld [vmem:[%s0 + $0xdc] sm:$0xf]
    %v84 = vld [vmem:[%s0 + $0xe0] sm:$0xf]
    %v85 = vld [vmem:[%s0 + $0xe4] sm:$0xf]
    %v86 = vld [vmem:[%s0 + $0xe8] sm:$0xf]
    %v87 = vld [vmem:[%s0 + $0xec] sm:$0xf]
    %v88 = vld [vmem:[%s0 + $0xf0] sm:$0xf]
    %v89 = vld [vmem:[%s0 + $0xf4] sm:$0xf]
    %v90 = vld [vmem:[%s0 + $0xf8] sm:$0xf]
    %v91 = vld [vmem:[%s0 + $0xfc] sm:$0xf]
    %v92 = vld [vmem:[%s1] sm:$0xf]
    %v93 = vld [vmem:[%s1 + $0x4] sm:$0x1]
    %v94 = vld [vmem:[%s2] sm:$0x1]
    %v96 = vperm.slane %v94, 0
    %v162 = vunpack.c.l.b16 %v28
    %v163 = vunpack.c.l.b16 %v29
    %v164 = vunpack.c.l.b16 %v30
    %v165 = vunpack.c.l.b16 %v31
    %v166 = vunpack.c.l.b16 %v32
    %v167 = vunpack.c.l.b16 %v33
    %v168 = vunpack.c.l.b16 %v34
    %v169 = vunpack.c.l.b16 %v35
    %v170 = vunpack.c.l.b16 %v36
    %v171 = vunpack.c.l.b16 %v37
    %v172 = vunpack.c.l.b16 %v38
    %v173 = vunpack.c.l.b16 %v39
    %v174 = vunpack.c.l.b16 %v40
    %v175 = vunpack.c.l.b16 %v41
    %v176 = vunpack.c.l.b16 %v42
    %v177 = vunpack.c.l.b16 %v43
    %v178 = vunpack.c.l.b16 %v44
    %v179 = vunpack.c.l.b16 %v45
    %v180 = vunpack.c.l.b16 %v46
    %v181 = vunpack.c.l.b16 %v47
    %v182 = vunpack.c.l.b16 %v48
    %v183 = vunpack.c.l.b16 %v49
    %v184 = vunpack.c.l.b16 %v50
    %v185 = vunpack.c.l.b16 %v51
    %v186 = vunpack.c.l.b16 %v52
    %v187 = vunpack.c.l.b16 %v53
    %v188 = vunpack.c.l.b16 %v54
    %v189 = vunpack.c.l.b16 %v55
    %v190 = vunpack.c.l.b16 %v56
    %v191 = vunpack.c.l.b16 %v57
    %v192 = vunpack.c.l.b16 %v58
    %v193 = vunpack.c.l.b16 %v59
    %v194 = vunpack.c.l.b16 %v60
    %v195 = vunpack.c.l.b16 %v61
    %v196 = vunpack.c.l.b16 %v62
    %v197 = vunpack.c.l.b16 %v63
    %v198 = vunpack.c.l.b16 %v64
    %v199 = vunpack.c.l.b16 %v65
    %v200 = vunpack.c.l.b16 %v66
    %v201 = vunpack.c.l.b16 %v67
    %v202 = vunpack.c.l.b16 %v68
    %v203 = vunpack.c.l.b16 %v69
    %v204 = vunpack.c.l.b16 %v70
    %v205 = vunpack.c.l.b16 %v71
    %v206 = vunpack.c.l.b16 %v72
    %v207 = vunpack.c.l.b16 %v73
    %v208 = vunpack.c.l.b16 %v74
    %v209 = vunpack.c.l.b16 %v75
    %v210 = vunpack.c.l.b16 %v76
    %v211 = vunpack.c.l.b16 %v77
    %v212 = vunpack.c.l.b16 %v78
    %v213 = vunpack.c.l.b16 %v79
    %v214 = vunpack.c.l.b16 %v80
    %v215 = vunpack.c.l.b16 %v81
    %v216 = vunpack.c.l.b16 %v82
    %v217 = vunpack.c.l.b16 %v83
    %v218 = vunpack.c.l.b16 %v84
    %v219 = vunpack.c.l.b16 %v85
    %v220 = vunpack.c.l.b16 %v86
    %v221 = vunpack.c.l.b16 %v87
    %v222 = vunpack.c.l.b16 %v88
    %v223 = vunpack.c.l.b16 %v89
    %v224 = vunpack.c.l.b16 %v90
    %v225 = vunpack.c.l.b16 %v91
    %v226 = vpack.c.b16 %v163, %v162
    %v227 = vpack.c.b16 %v165, %v164
    %v228 = vpack.c.b16 %v167, %v166
    %v229 = vpack.c.b16 %v169, %v168
    %v230 = vpack.c.b16 %v171, %v170
    %v231 = vpack.c.b16 %v173, %v172
    %v232 = vpack.c.b16 %v175, %v174
    %v233 = vpack.c.b16 %v177, %v176
    %v234 = vpack.c.b16 %v179, %v178
    %v235 = vpack.c.b16 %v181, %v180
    %v236 = vpack.c.b16 %v183, %v182
    %v237 = vpack.c.b16 %v185, %v184
    %v238 = vpack.c.b16 %v187, %v186
    %v239 = vpack.c.b16 %v189, %v188
    %v240 = vpack.c.b16 %v191, %v190
    %v241 = vpack.c.b16 %v193, %v192
    %v242 = vpack.c.b16 %v195, %v194
    %v243 = vpack.c.b16 %v197, %v196
    %v244 = vpack.c.b16 %v199, %v198
    %v245 = vpack.c.b16 %v201, %v200
    %v246 = vpack.c.b16 %v203, %v202
    %v247 = vpack.c.b16 %v205, %v204
    %v248 = vpack.c.b16 %v207, %v206
    %v249 = vpack.c.b16 %v209, %v208
    %v250 = vpack.c.b16 %v211, %v210
    %v251 = vpack.c.b16 %v213, %v212
    %v252 = vpack.c.b16 %v215, %v214
    %v253 = vpack.c.b16 %v217, %v216
    %v254 = vpack.c.b16 %v219, %v218
    %v255 = vpack.c.b16 %v221, %v220
    %v256 = vpack.c.b16 %v223, %v222
    %v257 = vpack.c.b16 %v225, %v224
    %v260 = vunpack.c.l.b16 %v92
    %v261 = vunpack.c.l.b16 %v93
    %v262 = vpack.c.b16 %v261, %v260
    %vm263 = vcmask 72704
    %v265 = vsel %vm263, %v226, 0
    %v268 = vsel %vm263, %v227, 0
    %v271 = vsel %vm263, %v228, 0
    %v274 = vsel %vm263, %v229, 0
    %v277 = vsel %vm263, %v230, 0
    %v280 = vsel %vm263, %v231, 0
    %v283 = vsel %vm263, %v232, 0
    %v286 = vsel %vm263, %v233, 0
    %v289 = vsel %vm263, %v234, 0
    %v292 = vsel %vm263, %v235, 0
    %v295 = vsel %vm263, %v236, 0
    %v298 = vsel %vm263, %v237, 0
    %v301 = vsel %vm263, %v238, 0
    %v304 = vsel %vm263, %v239, 0
    %v307 = vsel %vm263, %v240, 0
    %v310 = vsel %vm263, %v241, 0
    %v313 = vsel %vm263, %v242, 0
    %v316 = vsel %vm263, %v243, 0
    %v319 = vsel %vm263, %v244, 0
    %v322 = vsel %vm263, %v245, 0
    %v325 = vsel %vm263, %v246, 0
    %v328 = vsel %vm263, %v247, 0
    %v331 = vsel %vm263, %v248, 0
    %v334 = vsel %vm263, %v249, 0
    %v337 = vsel %vm263, %v250, 0
    %v340 = vsel %vm263, %v251, 0
    %v343 = vsel %vm263, %v252, 0
    %v346 = vsel %vm263, %v253, 0
    %v349 = vsel %vm263, %v254, 0
    %v352 = vsel %vm263, %v255, 0
    %v355 = vsel %vm263, %v256, 0
    %v358 = vsel %vm263, %v257, 0
    %vm360 = vcmask 1043456
    %vm361 = vcmask 1044480
    %v362 = vsel %vm360, 4294967295, 65535
    %v363 = vsel %vm361, %v362, 0
    %v365 = vand.u32 %v262, %v363
    %367 = vmatpush.bf16.msra.mxu0 0
    %368 = vmatpush.bf16.msra.mxu0 0
    %369 = vmatpush.bf16.msra.mxu0 0
    %370 = vmatpush.bf16.msra.mxu0 0
    %371 = vmatpush.bf16.msra.mxu0 0
    %372 = vmatpush.bf16.msra.mxu0 0
    %373 = vmatpush.bf16.msra.mxu0 0
    %374 = vmatpush.bf16.msra.mxu0 %v365
    %375 = vmatmul.bf16.gmra.mxu0 %v265
    %v376 = vpop.f32.mrf.mxu0
    %v377 = vadd.f32 %v96, %v376
    %v378 = vpop.f32.mrf.mxu0
    %v379 = vadd.f32 %v96, %v378
    %380 = vmatmul.bf16.gmra.mxu0 %v268
    %v381 = vpop.f32.mrf.mxu0
    %v382 = vadd.f32 %v96, %v381
    %v383 = vpop.f32.mrf.mxu0
    %v384 = vadd.f32 %v96, %v383
    %385 = vmatmul.bf16.gmra.mxu0 %v271
    %v386 = vpop.f32.mrf.mxu0
    %v387 = vadd.f32 %v96, %v386
    %v388 = vpop.f32.mrf.mxu0
    %v389 = vadd.f32 %v96, %v388
    %390 = vmatmul.bf16.gmra.mxu0 %v274
    %v391 = vpop.f32.mrf.mxu0
    %v392 = vadd.f32 %v96, %v391
    %v393 = vpop.f32.mrf.mxu0
    %v394 = vadd.f32 %v96, %v393
    %395 = vmatmul.bf16.gmra.mxu0 %v277
    %v396 = vpop.f32.mrf.mxu0
    %v397 = vadd.f32 %v96, %v396
    %v398 = vpop.f32.mrf.mxu0
    %v399 = vadd.f32 %v96, %v398
    %400 = vmatmul.bf16.gmra.mxu0 %v280
    %v401 = vpop.f32.mrf.mxu0
    %v402 = vadd.f32 %v96, %v401
    %v403 = vpop.f32.mrf.mxu0
    %v404 = vadd.f32 %v96, %v403
    %405 = vmatmul.bf16.gmra.mxu0 %v283
    %v406 = vpop.f32.mrf.mxu0
    %v407 = vadd.f32 %v96, %v406
    %v408 = vpop.f32.mrf.mxu0
    %v409 = vadd.f32 %v96, %v408
    %410 = vmatmul.bf16.gmra.mxu0 %v286
    %v411 = vpop.f32.mrf.mxu0
    %v412 = vadd.f32 %v96, %v411
    %v413 = vpop.f32.mrf.mxu0
    %v414 = vadd.f32 %v96, %v413
    %415 = vmatmul.bf16.gmra.mxu0 %v289
    %v416 = vpop.f32.mrf.mxu0
    %v417 = vadd.f32 %v96, %v416
    %v418 = vpop.f32.mrf.mxu0
    %v419 = vadd.f32 %v96, %v418
    %420 = vmatmul.bf16.gmra.mxu0 %v292
    %v421 = vpop.f32.mrf.mxu0
    %v422 = vadd.f32 %v96, %v421
    %v423 = vpop.f32.mrf.mxu0
    %v424 = vadd.f32 %v96, %v423
    %425 = vmatmul.bf16.gmra.mxu0 %v295
    %v426 = vpop.f32.mrf.mxu0
    %v427 = vadd.f32 %v96, %v426
    %v428 = vpop.f32.mrf.mxu0
    %v429 = vadd.f32 %v96, %v428
    %430 = vmatmul.bf16.gmra.mxu0 %v298
    %v431 = vpop.f32.mrf.mxu0
    %v432 = vadd.f32 %v96, %v431
    %v433 = vpop.f32.mrf.mxu0
    %v434 = vadd.f32 %v96, %v433
    %435 = vmatmul.bf16.gmra.mxu0 %v301
    %v436 = vpop.f32.mrf.mxu0
    %v437 = vadd.f32 %v96, %v436
    %v438 = vpop.f32.mrf.mxu0
    %v439 = vadd.f32 %v96, %v438
    %440 = vmatmul.bf16.gmra.mxu0 %v304
    %v441 = vpop.f32.mrf.mxu0
    %v442 = vadd.f32 %v96, %v441
    %v443 = vpop.f32.mrf.mxu0
    %v444 = vadd.f32 %v96, %v443
    %445 = vmatmul.bf16.gmra.mxu0 %v307
    %v446 = vpop.f32.mrf.mxu0
    %v447 = vadd.f32 %v96, %v446
    %v448 = vpop.f32.mrf.mxu0
    %v449 = vadd.f32 %v96, %v448
    %450 = vmatmul.bf16.gmra.mxu0 %v310
    %v451 = vpop.f32.mrf.mxu0
    %v452 = vadd.f32 %v96, %v451
    %v453 = vpop.f32.mrf.mxu0
    %v454 = vadd.f32 %v96, %v453
    %455 = vmatmul.bf16.gmra.mxu0 %v313
    %v456 = vpop.f32.mrf.mxu0
    %v457 = vadd.f32 %v96, %v456
    %v458 = vpop.f32.mrf.mxu0
    %v459 = vadd.f32 %v96, %v458
    %460 = vmatmul.bf16.gmra.mxu0 %v316
    %v461 = vpop.f32.mrf.mxu0
    %v462 = vadd.f32 %v96, %v461
    %v463 = vpop.f32.mrf.mxu0
    %v464 = vadd.f32 %v96, %v463
    %465 = vmatmul.bf16.gmra.mxu0 %v319
    %v466 = vpop.f32.mrf.mxu0
    %v467 = vadd.f32 %v96, %v466
    %v468 = vpop.f32.mrf.mxu0
    %v469 = vadd.f32 %v96, %v468
    %470 = vmatmul.bf16.gmra.mxu0 %v322
    %v471 = vpop.f32.mrf.mxu0
    %v472 = vadd.f32 %v96, %v471
    %v473 = vpop.f32.mrf.mxu0
    %v474 = vadd.f32 %v96, %v473
    %475 = vmatmul.bf16.gmra.mxu0 %v325
    %v476 = vpop.f32.mrf.mxu0
    %v477 = vadd.f32 %v96, %v476
    %v478 = vpop.f32.mrf.mxu0
    %v479 = vadd.f32 %v96, %v478
    %480 = vmatmul.bf16.gmra.mxu0 %v328
    %v481 = vpop.f32.mrf.mxu0
    %v482 = vadd.f32 %v96, %v481
    %v483 = vpop.f32.mrf.mxu0
    %v484 = vadd.f32 %v96, %v483
    %485 = vmatmul.bf16.gmra.mxu0 %v331
    %v486 = vpop.f32.mrf.mxu0
    %v487 = vadd.f32 %v96, %v486
    %v488 = vpop.f32.mrf.mxu0
    %v489 = vadd.f32 %v96, %v488
    %490 = vmatmul.bf16.gmra.mxu0 %v334
    %v491 = vpop.f32.mrf.mxu0
    %v492 = vadd.f32 %v96, %v491
    %v493 = vpop.f32.mrf.mxu0
    %v494 = vadd.f32 %v96, %v493
    %495 = vmatmul.bf16.gmra.mxu0 %v337
    %v496 = vpop.f32.mrf.mxu0
    %v497 = vadd.f32 %v96, %v496
    %v498 = vpop.f32.mrf.mxu0
    %v499 = vadd.f32 %v96, %v498
    %500 = vmatmul.bf16.gmra.mxu0 %v340
    %v501 = vpop.f32.mrf.mxu0
    %v502 = vadd.f32 %v96, %v501
    %v503 = vpop.f32.mrf.mxu0
    %v504 = vadd.f32 %v96, %v503
    %505 = vmatmul.bf16.gmra.mxu0 %v343
    %v506 = vpop.f32.mrf.mxu0
    %v507 = vadd.f32 %v96, %v506
    %v508 = vpop.f32.mrf.mxu0
    %v509 = vadd.f32 %v96, %v508
    %510 = vmatmul.bf16.gmra.mxu0 %v346
    %v511 = vpop.f32.mrf.mxu0
    %v512 = vadd.f32 %v96, %v511
    %v513 = vpop.f32.mrf.mxu0
    %v514 = vadd.f32 %v96, %v513
    %515 = vmatmul.bf16.gmra.mxu0 %v349
    %v516 = vpop.f32.mrf.mxu0
    %v517 = vadd.f32 %v96, %v516
    %v518 = vpop.f32.mrf.mxu0
    %v519 = vadd.f32 %v96, %v518
    %520 = vmatmul.bf16.gmra.mxu0 %v352
    %v521 = vpop.f32.mrf.mxu0
    %v522 = vadd.f32 %v96, %v521
    %v523 = vpop.f32.mrf.mxu0
    %v524 = vadd.f32 %v96, %v523
    %525 = vmatmul.bf16.gmra.mxu0 %v355
    %v526 = vpop.f32.mrf.mxu0
    %v527 = vadd.f32 %v96, %v526
    %v528 = vpop.f32.mrf.mxu0
    %v529 = vadd.f32 %v96, %v528
    %530 = vmatmul.bf16.gmra.mxu0 %v358
    %v531 = vpop.f32.mrf.mxu0
    %v532 = vadd.f32 %v96, %v531
    %v533 = vpop.f32.mrf.mxu0
    %v534 = vadd.f32 %v96, %v533
    %535 = vdwg.mxu0
    %vm536 = vcmp.ge.f32.partialorder %v377, 0.0
    %vm537 = vcmp.ge.f32.partialorder %v379, 0.0
    %vm538 = vcmp.ge.f32.partialorder %v382, 0.0
    %vm539 = vcmp.ge.f32.partialorder %v384, 0.0
    %vm540 = vcmp.ge.f32.partialorder %v387, 0.0
    %vm541 = vcmp.ge.f32.partialorder %v389, 0.0
    %vm542 = vcmp.ge.f32.partialorder %v392, 0.0
    %vm543 = vcmp.ge.f32.partialorder %v394, 0.0
    %vm544 = vcmp.ge.f32.partialorder %v397, 0.0
    %vm545 = vcmp.ge.f32.partialorder %v399, 0.0
    %vm546 = vcmp.ge.f32.partialorder %v402, 0.0
    %vm547 = vcmp.ge.f32.partialorder %v404, 0.0
    %vm548 = vcmp.ge.f32.partialorder %v407, 0.0
    %vm549 = vcmp.ge.f32.partialorder %v409, 0.0
    %vm550 = vcmp.ge.f32.partialorder %v412, 0.0
    %vm551 = vcmp.ge.f32.partialorder %v414, 0.0
    %vm552 = vcmp.ge.f32.partialorder %v417, 0.0
    %vm553 = vcmp.ge.f32.partialorder %v419, 0.0
    %vm554 = vcmp.ge.f32.partialorder %v422, 0.0
    %vm555 = vcmp.ge.f32.partialorder %v424, 0.0
    %vm556 = vcmp.ge.f32.partialorder %v427, 0.0
    %vm557 = vcmp.ge.f32.partialorder %v429, 0.0
    %vm558 = vcmp.ge.f32.partialorder %v432, 0.0
    %vm559 = vcmp.ge.f32.partialorder %v434, 0.0
    %vm560 = vcmp.ge.f32.partialorder %v437, 0.0
    %vm561 = vcmp.ge.f32.partialorder %v439, 0.0
    %vm562 = vcmp.ge.f32.partialorder %v442, 0.0
    %vm563 = vcmp.ge.f32.partialorder %v444, 0.0
    %vm564 = vcmp.ge.f32.partialorder %v447, 0.0
    %vm565 = vcmp.ge.f32.partialorder %v449, 0.0
    %vm566 = vcmp.ge.f32.partialorder %v452, 0.0
    %vm567 = vcmp.ge.f32.partialorder %v454, 0.0
    %vm568 = vcmp.ge.f32.partialorder %v457, 0.0
    %vm569 = vcmp.ge.f32.partialorder %v459, 0.0
    %vm570 = vcmp.ge.f32.partialorder %v462, 0.0
    %vm571 = vcmp.ge.f32.partialorder %v464, 0.0
    %vm572 = vcmp.ge.f32.partialorder %v467, 0.0
    %vm573 = vcmp.ge.f32.partialorder %v469, 0.0
    %vm574 = vcmp.ge.f32.partialorder %v472, 0.0
    %vm575 = vcmp.ge.f32.partialorder %v474, 0.0
    %vm576 = vcmp.ge.f32.partialorder %v477, 0.0
    %vm577 = vcmp.ge.f32.partialorder %v479, 0.0
    %vm578 = vcmp.ge.f32.partialorder %v482, 0.0
    %vm579 = vcmp.ge.f32.partialorder %v484, 0.0
    %vm580 = vcmp.ge.f32.partialorder %v487, 0.0
    %vm581 = vcmp.ge.f32.partialorder %v489, 0.0
    %vm582 = vcmp.ge.f32.partialorder %v492, 0.0
    %vm583 = vcmp.ge.f32.partialorder %v494, 0.0
    %vm584 = vcmp.ge.f32.partialorder %v497, 0.0
    %vm585 = vcmp.ge.f32.partialorder %v499, 0.0
    %vm586 = vcmp.ge.f32.partialorder %v502, 0.0
    %vm587 = vcmp.ge.f32.partialorder %v504, 0.0
    %vm588 = vcmp.ge.f32.partialorder %v507, 0.0
    %vm589 = vcmp.ge.f32.partialorder %v509, 0.0
    %vm590 = vcmp.ge.f32.partialorder %v512, 0.0
    %vm591 = vcmp.ge.f32.partialorder %v514, 0.0
    %vm592 = vcmp.ge.f32.partialorder %v517, 0.0
    %vm593 = vcmp.ge.f32.partialorder %v519, 0.0
    %vm594 = vcmp.ge.f32.partialorder %v522, 0.0
    %vm595 = vcmp.ge.f32.partialorder %v524, 0.0
    %vm596 = vcmp.ge.f32.partialorder %v527, 0.0
    %vm597 = vcmp.ge.f32.partialorder %v529, 0.0
    %vm598 = vcmp.ge.f32.partialorder %v532, 0.0
    %vm599 = vcmp.ge.f32.partialorder %v534, 0.0
    %v600 = vmul.f32 %v377, 0.01
    %v601 = vmul.f32 %v379, 0.01
    %v602 = vmul.f32 %v382, 0.01
    %v603 = vmul.f32 %v384, 0.01
    %v604 = vmul.f32 %v387, 0.01
    %v605 = vmul.f32 %v389, 0.01
    %v606 = vmul.f32 %v392, 0.01
    %v607 = vmul.f32 %v394, 0.01
    %v608 = vmul.f32 %v397, 0.01
    %v609 = vmul.f32 %v399, 0.01
    %v610 = vmul.f32 %v402, 0.01
    %v611 = vmul.f32 %v404, 0.01
    %v612 = vmul.f32 %v407, 0.01
    %v613 = vmul.f32 %v409, 0.01
    %v614 = vmul.f32 %v412, 0.01
    %v615 = vmul.f32 %v414, 0.01
    %v616 = vmul.f32 %v417, 0.01
    %v617 = vmul.f32 %v419, 0.01
    %v618 = vmul.f32 %v422, 0.01
    %v619 = vmul.f32 %v424, 0.01
    %v620 = vmul.f32 %v427, 0.01
    %v621 = vmul.f32 %v429, 0.01
    %v622 = vmul.f32 %v432, 0.01
    %v623 = vmul.f32 %v434, 0.01
    %v624 = vmul.f32 %v437, 0.01
    %v625 = vmul.f32 %v439, 0.01
    %v626 = vmul.f32 %v442, 0.01
    %v627 = vmul.f32 %v444, 0.01
    %v628 = vmul.f32 %v447, 0.01
    %v629 = vmul.f32 %v449, 0.01
    %v630 = vmul.f32 %v452, 0.01
    %v631 = vmul.f32 %v454, 0.01
    %v632 = vmul.f32 %v457, 0.01
    %v633 = vmul.f32 %v459, 0.01
    %v634 = vmul.f32 %v462, 0.01
    %v635 = vmul.f32 %v464, 0.01
    %v636 = vmul.f32 %v467, 0.01
    %v637 = vmul.f32 %v469, 0.01
    %v638 = vmul.f32 %v472, 0.01
    %v639 = vmul.f32 %v474, 0.01
    %v640 = vmul.f32 %v477, 0.01
    %v641 = vmul.f32 %v479, 0.01
    %v642 = vmul.f32 %v482, 0.01
    %v643 = vmul.f32 %v484, 0.01
    %v644 = vmul.f32 %v487, 0.01
    %v645 = vmul.f32 %v489, 0.01
    %v646 = vmul.f32 %v492, 0.01
    %v647 = vmul.f32 %v494, 0.01
    %v648 = vmul.f32 %v497, 0.01
    %v649 = vmul.f32 %v499, 0.01
    %v650 = vmul.f32 %v502, 0.01
    %v651 = vmul.f32 %v504, 0.01
    %v652 = vmul.f32 %v507, 0.01
    %v653 = vmul.f32 %v509, 0.01
    %v654 = vmul.f32 %v512, 0.01
    %v655 = vmul.f32 %v514, 0.01
    %v656 = vmul.f32 %v517, 0.01
    %v657 = vmul.f32 %v519, 0.01
    %v658 = vmul.f32 %v522, 0.01
    %v659 = vmul.f32 %v524, 0.01
    %v660 = vmul.f32 %v527, 0.01
    %v661 = vmul.f32 %v529, 0.01
    %v662 = vmul.f32 %v532, 0.01
    %v663 = vmul.f32 %v534, 0.01
    %v664 = vsel %vm536, %v377, %v600
    %v665 = vsel %vm537, %v379, %v601
    %v666 = vsel %vm538, %v382, %v602
    %v667 = vsel %vm539, %v384, %v603
    %v668 = vsel %vm540, %v387, %v604
    %v669 = vsel %vm541, %v389, %v605
    %v670 = vsel %vm542, %v392, %v606
    %v671 = vsel %vm543, %v394, %v607
    %v672 = vsel %vm544, %v397, %v608
    %v673 = vsel %vm545, %v399, %v609
    %v674 = vsel %vm546, %v402, %v610
    %v675 = vsel %vm547, %v404, %v611
    %v676 = vsel %vm548, %v407, %v612
    %v677 = vsel %vm549, %v409, %v613
    %v678 = vsel %vm550, %v412, %v614
    %v679 = vsel %vm551, %v414, %v615
    %v680 = vsel %vm552, %v417, %v616
    %v681 = vsel %vm553, %v419, %v617
    %v682 = vsel %vm554, %v422, %v618
    %v683 = vsel %vm555, %v424, %v619
    %v684 = vsel %vm556, %v427, %v620
    %v685 = vsel %vm557, %v429, %v621
    %v686 = vsel %vm558, %v432, %v622
    %v687 = vsel %vm559, %v434, %v623
    %v688 = vsel %vm560, %v437, %v624
    %v689 = vsel %vm561, %v439, %v625
    %v690 = vsel %vm562, %v442, %v626
    %v691 = vsel %vm563, %v444, %v627
    %v692 = vsel %vm564, %v447, %v628
    %v693 = vsel %vm565, %v449, %v629
    %v694 = vsel %vm566, %v452, %v630
    %v695 = vsel %vm567, %v454, %v631
    %v696 = vsel %vm568, %v457, %v632
    %v697 = vsel %vm569, %v459, %v633
    %v698 = vsel %vm570, %v462, %v634
    %v699 = vsel %vm571, %v464, %v635
    %v700 = vsel %vm572, %v467, %v636
    %v701 = vsel %vm573, %v469, %v637
    %v702 = vsel %vm574, %v472, %v638
    %v703 = vsel %vm575, %v474, %v639
    %v704 = vsel %vm576, %v477, %v640
    %v705 = vsel %vm577, %v479, %v641
    %v706 = vsel %vm578, %v482, %v642
    %v707 = vsel %vm579, %v484, %v643
    %v708 = vsel %vm580, %v487, %v644
    %v709 = vsel %vm581, %v489, %v645
    %v710 = vsel %vm582, %v492, %v646
    %v711 = vsel %vm583, %v494, %v647
    %v712 = vsel %vm584, %v497, %v648
    %v713 = vsel %vm585, %v499, %v649
    %v714 = vsel %vm586, %v502, %v650
    %v715 = vsel %vm587, %v504, %v651
    %v716 = vsel %vm588, %v507, %v652
    %v717 = vsel %vm589, %v509, %v653
    %v718 = vsel %vm590, %v512, %v654
    %v719 = vsel %vm591, %v514, %v655
    %v720 = vsel %vm592, %v517, %v656
    %v721 = vsel %vm593, %v519, %v657
    %v722 = vsel %vm594, %v522, %v658
    %v723 = vsel %vm595, %v524, %v659
    %v724 = vsel %vm596, %v527, %v660
    %v725 = vsel %vm597, %v529, %v661
    %v726 = vsel %vm598, %v532, %v662
    %v727 = vsel %vm599, %v534, %v663
    %v728 = vmax.f32 %v664, %v680
    %v729 = vmax.f32 %v665, %v681
    %v730 = vmax.f32 %v666, %v682
    %v731 = vmax.f32 %v667, %v683
    %v732 = vmax.f32 %v668, %v684
    %v733 = vmax.f32 %v669, %v685
    %v734 = vmax.f32 %v670, %v686
    %v735 = vmax.f32 %v671, %v687
    %v736 = vmax.f32 %v672, %v688
    %v737 = vmax.f32 %v673, %v689
    %v738 = vmax.f32 %v674, %v690
    %v739 = vmax.f32 %v675, %v691
    %v740 = vmax.f32 %v676, %v692
    %v741 = vmax.f32 %v677, %v693
    %v742 = vmax.f32 %v678, %v694
    %v743 = vmax.f32 %v679, %v695
    %v744 = vmax.f32 %v728, %v696
    %v745 = vmax.f32 %v729, %v697
    %v746 = vmax.f32 %v730, %v698
    %v747 = vmax.f32 %v731, %v699
    %v748 = vmax.f32 %v732, %v700
    %v749 = vmax.f32 %v733, %v701
    %v750 = vmax.f32 %v734, %v702
    %v751 = vmax.f32 %v735, %v703
    %v752 = vmax.f32 %v736, %v704
    %v753 = vmax.f32 %v737, %v705
    %v754 = vmax.f32 %v738, %v706
    %v755 = vmax.f32 %v739, %v707
    %v756 = vmax.f32 %v740, %v708
    %v757 = vmax.f32 %v741, %v709
    %v758 = vmax.f32 %v742, %v710
    %v759 = vmax.f32 %v743, %v711
    %v760 = vmax.f32 %v744, %v712
    %v761 = vmax.f32 %v745, %v713
    %v762 = vmax.f32 %v746, %v714
    %v763 = vmax.f32 %v747, %v715
    %v764 = vmax.f32 %v748, %v716
    %v765 = vmax.f32 %v749, %v717
    %v766 = vmax.f32 %v750, %v718
    %v767 = vmax.f32 %v751, %v719
    %v768 = vmax.f32 %v752, %v720
    %v769 = vmax.f32 %v753, %v721
    %v770 = vmax.f32 %v754, %v722
    %v771 = vmax.f32 %v755, %v723
    %v772 = vmax.f32 %v756, %v724
    %v773 = vmax.f32 %v757, %v725
    %v774 = vmax.f32 %v758, %v726
    %v775 = vmax.f32 %v759, %v727
    %vm776 = vcmask 64512
    %777 = vst.msk [vmem:[#allocation2] sm:$0xff] %vm776, 0.0
    %778 = vst.msk [vmem:[#allocation2 + $0x8] sm:$0xff] %vm776, 0.0
    %779 = vst.msk [vmem:[#allocation2 + $0x10] sm:$0xff] %vm776, 0.0
    %780 = vst.msk [vmem:[#allocation2 + $0x18] sm:$0xff] %vm776, 0.0
    %781 = vst.msk [vmem:[#allocation2 + $0x20] sm:$0xff] %vm776, 0.0
    %782 = vst.msk [vmem:[#allocation2 + $0x28] sm:$0xff] %vm776, 0.0
    %783 = vst.msk [vmem:[#allocation2 + $0x30] sm:$0xff] %vm776, 0.0
    %784 = vst.msk [vmem:[#allocation2 + $0x38] sm:$0xff] %vm776, 0.0
    %785 = vst.msk [vmem:[#allocation2 + $0x40] sm:$0xff] %vm776, 0.0
    %786 = vst.msk [vmem:[#allocation2 + $0x48] sm:$0xff] %vm776, 0.0
    %787 = vst.msk [vmem:[#allocation2 + $0x50] sm:$0xff] %vm776, 0.0
    %788 = vst.msk [vmem:[#allocation2 + $0x58] sm:$0xff] %vm776, 0.0
    %789 = vst.msk [vmem:[#allocation2 + $0x60] sm:$0xff] %vm776, 0.0
    %790 = vst.msk [vmem:[#allocation2 + $0x68] sm:$0xff] %vm776, 0.0
    %791 = vst.msk [vmem:[#allocation2 + $0x70] sm:$0xff] %vm776, 0.0
    %792 = vst.msk [vmem:[#allocation2 + $0x78] sm:$0xff] %vm776, 0.0
    %793 = vst.msk [vmem:[#allocation2 + $0x80] sm:$0xff] %vm776, 0.0
    %794 = vst.msk [vmem:[#allocation2 + $0x88] sm:$0xff] %vm776, 0.0
    %795 = vst.msk [vmem:[#allocation2 + $0x90] sm:$0xff] %vm776, 0.0
    %796 = vst.msk [vmem:[#allocation2 + $0x98] sm:$0xff] %vm776, 0.0
    %797 = vst.msk [vmem:[#allocation2 + $0xa0] sm:$0xff] %vm776, 0.0
    %798 = vst.msk [vmem:[#allocation2 + $0xa8] sm:$0xff] %vm776, 0.0
    %799 = vst.msk [vmem:[#allocation2 + $0xb0] sm:$0xff] %vm776, 0.0
    %800 = vst.msk [vmem:[#allocation2 + $0xb8] sm:$0xff] %vm776, 0.0
    %801 = vst.msk [vmem:[#allocation2 + $0xc0] sm:$0xff] %vm776, 0.0
    %802 = vst.msk [vmem:[#allocation2 + $0xc8] sm:$0xff] %vm776, 0.0
    %803 = vst.msk [vmem:[#allocation2 + $0xd0] sm:$0xff] %vm776, 0.0
    %804 = vst.msk [vmem:[#allocation2 + $0xd8] sm:$0xff] %vm776, 0.0
    %805 = vst.msk [vmem:[#allocation2 + $0xe0] sm:$0xff] %vm776, 0.0
    %806 = vst.msk [vmem:[#allocation2 + $0x1b] sm:$0xff] %vm776, %v760
    %807 = vst.msk [vmem:[#allocation2 + $0x25] sm:$0xff] %vm776, %v761
    %808 = vst.msk [vmem:[#allocation2 + $0x2f] sm:$0xff] %vm776, %v762
    %809 = vst.msk [vmem:[#allocation2 + $0x39] sm:$0xff] %vm776, %v763
    %810 = vst.msk [vmem:[#allocation2 + $0x43] sm:$0xff] %vm776, %v764
    %811 = vst.msk [vmem:[#allocation2 + $0x4d] sm:$0xff] %vm776, %v765
    %812 = vst.msk [vmem:[#allocation2 + $0x57] sm:$0xff] %vm776, %v766
    %813 = vst.msk [vmem:[#allocation2 + $0x61] sm:$0xff] %vm776, %v767
    %814 = vst.msk [vmem:[#allocation2 + $0x7f] sm:$0xff] %vm776, %v768
    %815 = vst.msk [vmem:[#allocation2 + $0x89] sm:$0xff] %vm776, %v769
    %816 = vst.msk [vmem:[#allocation2 + $0x93] sm:$0xff] %vm776, %v770
    %817 = vst.msk [vmem:[#allocation2 + $0x9d] sm:$0xff] %vm776, %v771
    %818 = vst.msk [vmem:[#allocation2 + $0xa7] sm:$0xff] %vm776, %v772
    %819 = vst.msk [vmem:[#allocation2 + $0xb1] sm:$0xff] %vm776, %v773
    %820 = vst.msk [vmem:[#allocation2 + $0xbb] sm:$0xff] %vm776, %v774
    %821 = vst.msk [vmem:[#allocation2 + $0xc5] sm:$0xff] %vm776, %v775
    %v822 = vld [vmem:[#allocation2 + $0x5] sm:$0xff]
    %v823 = vld [vmem:[#allocation2 + $0xd] sm:$0xff]
    %v824 = vld [vmem:[#allocation2 + $0x15] sm:$0xff]
    %v825 = vld [vmem:[#allocation2 + $0x1d] sm:$0xff]
    %v826 = vld [vmem:[#allocation2 + $0x25] sm:$0xff]
    %v827 = vld [vmem:[#allocation2 + $0x2d] sm:$0xff]
    %v828 = vld [vmem:[#allocation2 + $0x35] sm:$0xff]
    %v829 = vld [vmem:[#allocation2 + $0x3d] sm:$0xff]
    %v830 = vld [vmem:[#allocation2 + $0x45] sm:$0xff]
    %v831 = vld [vmem:[#allocation2 + $0x4d] sm:$0xff]
    %v832 = vld [vmem:[#allocation2 + $0x55] sm:$0xff]
    %v833 = vld [vmem:[#allocation2 + $0x5d] sm:$0xff]
    %v834 = vld [vmem:[#allocation2 + $0x65] sm:$0xff]
    %v835 = vld [vmem:[#allocation2 + $0x6d] sm:$0xff]
    %v836 = vld [vmem:[#allocation2 + $0x75] sm:$0xff]
    %v837 = vld [vmem:[#allocation2 + $0x7d] sm:$0xff]
    %v838 = vld [vmem:[#allocation2 + $0x85] sm:$0xff]
    %v839 = vld [vmem:[#allocation2 + $0x8d] sm:$0xff]
    %v840 = vld [vmem:[#allocation2 + $0x95] sm:$0xff]
    %v841 = vld [vmem:[#allocation2 + $0x9d] sm:$0xff]
    %v842 = vld [vmem:[#allocation2 + $0xa5] sm:$0xff]
    %v843 = vld [vmem:[#allocation2 + $0xad] sm:$0xff]
    %v844 = vld [vmem:[#allocation2 + $0xb5] sm:$0xff]
    %v845 = vld [vmem:[#allocation2 + $0xbd] sm:$0xff]
    %v846 = vld [vmem:[#allocation2 + $0xc5] sm:$0xff]
    %v847 = vld [vmem:[#allocation2 + $0x6] sm:$0xff]
    %v848 = vld [vmem:[#allocation2 + $0xe] sm:$0xff]
    %v849 = vld [vmem:[#allocation2 + $0x16] sm:$0xff]
    %v850 = vld [vmem:[#allocation2 + $0x1e] sm:$0xff]
    %v851 = vld [vmem:[#allocation2 + $0x26] sm:$0xff]
    %v852 = vld [vmem:[#allocation2 + $0x2e] sm:$0xff]
    %v853 = vld [vmem:[#allocation2 + $0x36] sm:$0xff]
    %v854 = vld [vmem:[#allocation2 + $0x3e] sm:$0xff]
    %v855 = vld [vmem:[#allocation2 + $0x46] sm:$0xff]
    %v856 = vld [vmem:[#allocation2 + $0x4e] sm:$0xff]
    %v857 = vld [vmem:[#allocation2 + $0x56] sm:$0xff]
    %v858 = vld [vmem:[#allocation2 + $0x5e] sm:$0xff]
    %v859 = vld [vmem:[#allocation2 + $0x66] sm:$0xff]
    %v860 = vld [vmem:[#allocation2 + $0x6e] sm:$0xff]
    %v861 = vld [vmem:[#allocation2 + $0x76] sm:$0xff]
    %v862 = vld [vmem:[#allocation2 + $0x7e] sm:$0xff]
    %v863 = vld [vmem:[#allocation2 + $0x86] sm:$0xff]
    %v864 = vld [vmem:[#allocation2 + $0x8e] sm:$0xff]
    %v865 = vld [vmem:[#allocation2 + $0x96] sm:$0xff]
    %v866 = vld [vmem:[#allocation2 + $0x9e] sm:$0xff]
    %v867 = vld [vmem:[#allocation2 + $0xa6] sm:$0xff]
    %v868 = vld [vmem:[#allocation2 + $0xae] sm:$0xff]
    %v869 = vld [vmem:[#allocation2 + $0xb6] sm:$0xff]
    %v870 = vld [vmem:[#allocation2 + $0xbe] sm:$0xff]
    %v871 = vld [vmem:[#allocation2 + $0xc6] sm:$0xff]
    %v872 = vld [vmem:[#allocation2 + $0x7] sm:$0xff]
    %v873 = vld [vmem:[#allocation2 + $0xf] sm:$0xff]
    %v874 = vld [vmem:[#allocation2 + $0x17] sm:$0xff]
    %v875 = vld [vmem:[#allocation2 + $0x1f] sm:$0xff]
    %v876 = vld [vmem:[#allocation2 + $0x27] sm:$0xff]
    %v877 = vld [vmem:[#allocation2 + $0x2f] sm:$0xff]
    %v878 = vld [vmem:[#allocation2 + $0x37] sm:$0xff]
    %v879 = vld [vmem:[#allocation2 + $0x3f] sm:$0xff]
    %v880 = vld [vmem:[#allocation2 + $0x47] sm:$0xff]
    %v881 = vld [vmem:[#allocation2 + $0x4f] sm:$0xff]
    %v882 = vld [vmem:[#allocation2 + $0x57] sm:$0xff]
    %v883 = vld [vmem:[#allocation2 + $0x5f] sm:$0xff]
    %v884 = vld [vmem:[#allocation2 + $0x67] sm:$0xff]
    %v885 = vld [vmem:[#allocation2 + $0x6f] sm:$0xff]
    %v886 = vld [vmem:[#allocation2 + $0x77] sm:$0xff]
    %v887 = vld [vmem:[#allocation2 + $0x7f] sm:$0xff]
    %v888 = vld [vmem:[#allocation2 + $0x87] sm:$0xff]
    %v889 = vld [vmem:[#allocation2 + $0x8f] sm:$0xff]
    %v890 = vld [vmem:[#allocation2 + $0x97] sm:$0xff]
    %v891 = vld [vmem:[#allocation2 + $0x9f] sm:$0xff]
    %v892 = vld [vmem:[#allocation2 + $0xa7] sm:$0xff]
    %v893 = vld [vmem:[#allocation2 + $0xaf] sm:$0xff]
    %v894 = vld [vmem:[#allocation2 + $0xb7] sm:$0xff]
    %v895 = vld [vmem:[#allocation2 + $0xbf] sm:$0xff]
    %v896 = vld [vmem:[#allocation2 + $0xc7] sm:$0xff]
    %v897 = vld [vmem:[#allocation2 + $0xcf] sm:$0xff]
    %v898 = vld [vmem:[#allocation2 + $0x10] sm:$0xff]
    %v899 = vld [vmem:[#allocation2 + $0x18] sm:$0xff]
    %v900 = vld [vmem:[#allocation2 + $0x20] sm:$0xff]
    %v901 = vld [vmem:[#allocation2 + $0x28] sm:$0xff]
    %v902 = vld [vmem:[#allocation2 + $0x30] sm:$0xff]
    %v903 = vld [vmem:[#allocation2 + $0x38] sm:$0xff]
    %v904 = vld [vmem:[#allocation2 + $0x40] sm:$0xff]
    %v905 = vld [vmem:[#allocation2 + $0x48] sm:$0xff]
    %v906 = vld [vmem:[#allocation2 + $0x50] sm:$0xff]
    %v907 = vld [vmem:[#allocation2 + $0x58] sm:$0xff]
    %v908 = vld [vmem:[#allocation2 + $0x60] sm:$0xff]
    %v909 = vld [vmem:[#allocation2 + $0x68] sm:$0xff]
    %v910 = vld [vmem:[#allocation2 + $0x70] sm:$0xff]
    %v911 = vld [vmem:[#allocation2 + $0x78] sm:$0xff]
    %v912 = vld [vmem:[#allocation2 + $0x80] sm:$0xff]
    %v913 = vld [vmem:[#allocation2 + $0x88] sm:$0xff]
    %v914 = vld [vmem:[#allocation2 + $0x90] sm:$0xff]
    %v915 = vld [vmem:[#allocation2 + $0x98] sm:$0xff]
    %v916 = vld [vmem:[#allocation2 + $0xa0] sm:$0xff]
    %v917 = vld [vmem:[#allocation2 + $0xa8] sm:$0xff]
    %v918 = vld [vmem:[#allocation2 + $0xb0] sm:$0xff]
    %v919 = vld [vmem:[#allocation2 + $0xb8] sm:$0xff]
    %v920 = vld [vmem:[#allocation2 + $0xc0] sm:$0xff]
    %v921 = vld [vmem:[#allocation2 + $0xc8] sm:$0xff]
    %v922 = vld [vmem:[#allocation2 + $0xd0] sm:$0xff]
    %v923 = vld [vmem:[#allocation2 + $0x11] sm:$0xff]
    %v924 = vld [vmem:[#allocation2 + $0x19] sm:$0xff]
    %v925 = vld [vmem:[#allocation2 + $0x21] sm:$0xff]
    %v926 = vld [vmem:[#allocation2 + $0x29] sm:$0xff]
    %v927 = vld [vmem:[#allocation2 + $0x31] sm:$0xff]
    %v928 = vld [vmem:[#allocation2 + $0x39] sm:$0xff]
    %v929 = vld [vmem:[#allocation2 + $0x41] sm:$0xff]
    %v930 = vld [vmem:[#allocation2 + $0x49] sm:$0xff]
    %v931 = vld [vmem:[#allocation2 + $0x51] sm:$0xff]
    %v932 = vld [vmem:[#allocation2 + $0x59] sm:$0xff]
    %v933 = vld [vmem:[#allocation2 + $0x61] sm:$0xff]
    %v934 = vld [vmem:[#allocation2 + $0x69] sm:$0xff]
    %v935 = vld [vmem:[#allocation2 + $0x71] sm:$0xff]
    %v936 = vld [vmem:[#allocation2 + $0x79] sm:$0xff]
    %v937 = vld [vmem:[#allocation2 + $0x81] sm:$0xff]
    %v938 = vld [vmem:[#allocation2 + $0x89] sm:$0xff]
    %v939 = vld [vmem:[#allocation2 + $0x91] sm:$0xff]
    %v940 = vld [vmem:[#allocation2 + $0x99] sm:$0xff]
    %v941 = vld [vmem:[#allocation2 + $0xa1] sm:$0xff]
    %v942 = vld [vmem:[#allocation2 + $0xa9] sm:$0xff]
    %v943 = vld [vmem:[#allocation2 + $0xb1] sm:$0xff]
    %v944 = vld [vmem:[#allocation2 + $0xb9] sm:$0xff]
    %v945 = vld [vmem:[#allocation2 + $0xc1] sm:$0xff]
    %v946 = vld [vmem:[#allocation2 + $0xc9] sm:$0xff]
    %v947 = vld [vmem:[#allocation2 + $0xd1] sm:$0xff]
    %v948 = vld [vmem:[#allocation2 + $0xd9] sm:$0xff]
    %v949 = vld [vmem:[#allocation2 + $0x1a] sm:$0xff]
    %v950 = vld [vmem:[#allocation2 + $0x22] sm:$0xff]
    %v951 = vld [vmem:[#allocation2 + $0x2a] sm:$0xff]
    %v952 = vld [vmem:[#allocation2 + $0x32] sm:$0xff]
    %v953 = vld [vmem:[#allocation2 + $0x3a] sm:$0xff]
    %v954 = vld [vmem:[#allocation2 + $0x42] sm:$0xff]
    %v955 = vld [vmem:[#allocation2 + $0x4a] sm:$0xff]
    %v956 = vld [vmem:[#allocation2 + $0x52] sm:$0xff]
    %v957 = vld [vmem:[#allocation2 + $0x5a] sm:$0xff]
    %v958 = vld [vmem:[#allocation2 + $0x62] sm:$0xff]
    %v959 = vld [vmem:[#allocation2 + $0x6a] sm:$0xff]
    %v960 = vld [vmem:[#allocation2 + $0x72] sm:$0xff]
    %v961 = vld [vmem:[#allocation2 + $0x7a] sm:$0xff]
    %v962 = vld [vmem:[#allocation2 + $0x82] sm:$0xff]
    %v963 = vld [vmem:[#allocation2 + $0x8a] sm:$0xff]
    %v964 = vld [vmem:[#allocation2 + $0x92] sm:$0xff]
    %v965 = vld [vmem:[#allocation2 + $0x9a] sm:$0xff]
    %v966 = vld [vmem:[#allocation2 + $0xa2] sm:$0xff]
    %v967 = vld [vmem:[#allocation2 + $0xaa] sm:$0xff]
    %v968 = vld [vmem:[#allocation2 + $0xb2] sm:$0xff]
    %v969 = vld [vmem:[#allocation2 + $0xba] sm:$0xff]
    %v970 = vld [vmem:[#allocation2 + $0xc2] sm:$0xff]
    %v971 = vld [vmem:[#allocation2 + $0xca] sm:$0xff]
    %v972 = vld [vmem:[#allocation2 + $0xd2] sm:$0xff]
    %v973 = vld [vmem:[#allocation2 + $0xda] sm:$0xff]
    %v974 = vld [vmem:[#allocation2 + $0x1b] sm:$0xff]
    %v975 = vld [vmem:[#allocation2 + $0x23] sm:$0xff]
    %v976 = vld [vmem:[#allocation2 + $0x2b] sm:$0xff]
    %v977 = vld [vmem:[#allocation2 + $0x33] sm:$0xff]
    %v978 = vld [vmem:[#allocation2 + $0x3b] sm:$0xff]
    %v979 = vld [vmem:[#allocation2 + $0x43] sm:$0xff]
    %v980 = vld [vmem:[#allocation2 + $0x4b] sm:$0xff]
    %v981 = vld [vmem:[#allocation2 + $0x53] sm:$0xff]
    %v982 = vld [vmem:[#allocation2 + $0x5b] sm:$0xff]
    %v983 = vld [vmem:[#allocation2 + $0x63] sm:$0xff]
    %v984 = vld [vmem:[#allocation2 + $0x6b] sm:$0xff]
    %v985 = vld [vmem:[#allocation2 + $0x73] sm:$0xff]
    %v986 = vld [vmem:[#allocation2 + $0x7b] sm:$0xff]
    %v987 = vld [vmem:[#allocation2 + $0x83] sm:$0xff]
    %v988 = vld [vmem:[#allocation2 + $0x8b] sm:$0xff]
    %v989 = vld [vmem:[#allocation2 + $0x93] sm:$0xff]
    %v990 = vld [vmem:[#allocation2 + $0x9b] sm:$0xff]
    %v991 = vld [vmem:[#allocation2 + $0xa3] sm:$0xff]
    %v992 = vld [vmem:[#allocation2 + $0xab] sm:$0xff]
    %v993 = vld [vmem:[#allocation2 + $0xb3] sm:$0xff]
    %v994 = vld [vmem:[#allocation2 + $0xbb] sm:$0xff]
    %v995 = vld [vmem:[#allocation2 + $0xc3] sm:$0xff]
    %v996 = vld [vmem:[#allocation2 + $0xcb] sm:$0xff]
    %v997 = vld [vmem:[#allocation2 + $0xd3] sm:$0xff]
    %v998 = vld [vmem:[#allocation2 + $0xdb] sm:$0xff]
    %1024 = vrot.lane.b32.xlu0 %v847, 8
    %v1025 = vpop.permute.xlu0 %1024
    %1026 = vrot.lane.b32.xlu0 %v848, 8
    %v1027 = vpop.permute.xlu0 %1026
    %1028 = vrot.lane.b32.xlu0 %v849, 8
    %v1029 = vpop.permute.xlu0 %1028
    %1030 = vrot.lane.b32.xlu0 %v850, 8
    %v1031 = vpop.permute.xlu0 %1030
    %1032 = vrot.lane.b32.xlu0 %v851, 8
    %v1033 = vpop.permute.xlu0 %1032
    %1034 = vrot.lane.b32.xlu0 %v852, 8
    %v1035 = vpop.permute.xlu0 %1034
    %1036 = vrot.lane.b32.xlu0 %v853, 8
    %v1037 = vpop.permute.xlu0 %1036
    %1038 = vrot.lane.b32.xlu0 %v854, 8
    %v1039 = vpop.permute.xlu0 %1038
    %1040 = vrot.lane.b32.xlu0 %v855, 8
    %v1041 = vpop.permute.xlu0 %1040
    %1042 = vrot.lane.b32.xlu0 %v856, 8
    %v1043 = vpop.permute.xlu0 %1042
    %1044 = vrot.lane.b32.xlu0 %v857, 8
    %v1045 = vpop.permute.xlu0 %1044
    %1046 = vrot.lane.b32.xlu0 %v858, 8
    %v1047 = vpop.permute.xlu0 %1046
    %1048 = vrot.lane.b32.xlu0 %v859, 8
    %v1049 = vpop.permute.xlu0 %1048
    %1050 = vrot.lane.b32.xlu0 %v860, 8
    %v1051 = vpop.permute.xlu0 %1050
    %1052 = vrot.lane.b32.xlu0 %v861, 8
    %v1053 = vpop.permute.xlu0 %1052
    %1054 = vrot.lane.b32.xlu0 %v862, 8
    %v1055 = vpop.permute.xlu0 %1054
    %1056 = vrot.lane.b32.xlu0 %v863, 8
    %v1057 = vpop.permute.xlu0 %1056
    %1058 = vrot.lane.b32.xlu0 %v864, 8
    %v1059 = vpop.permute.xlu0 %1058
    %1060 = vrot.lane.b32.xlu0 %v865, 8
    %v1061 = vpop.permute.xlu0 %1060
    %1062 = vrot.lane.b32.xlu0 %v866, 8
    %v1063 = vpop.permute.xlu0 %1062
    %1064 = vrot.lane.b32.xlu0 %v867, 8
    %v1065 = vpop.permute.xlu0 %1064
    %1066 = vrot.lane.b32.xlu0 %v868, 8
    %v1067 = vpop.permute.xlu0 %1066
    %1068 = vrot.lane.b32.xlu0 %v869, 8
    %v1069 = vpop.permute.xlu0 %1068
    %1070 = vrot.lane.b32.xlu0 %v870, 8
    %v1071 = vpop.permute.xlu0 %1070
    %1072 = vrot.lane.b32.xlu0 %v871, 8
    %v1073 = vpop.permute.xlu0 %1072
    %1124 = vrot.lane.b32.xlu0 %v872, 16
    %v1125 = vpop.permute.xlu0 %1124
    %1126 = vrot.lane.b32.xlu0 %v873, 16
    %v1127 = vpop.permute.xlu0 %1126
    %1128 = vrot.lane.b32.xlu0 %v874, 16
    %v1129 = vpop.permute.xlu0 %1128
    %1130 = vrot.lane.b32.xlu0 %v875, 16
    %v1131 = vpop.permute.xlu0 %1130
    %1132 = vrot.lane.b32.xlu0 %v876, 16
    %v1133 = vpop.permute.xlu0 %1132
    %1134 = vrot.lane.b32.xlu0 %v877, 16
    %v1135 = vpop.permute.xlu0 %1134
    %1136 = vrot.lane.b32.xlu0 %v878, 16
    %v1137 = vpop.permute.xlu0 %1136
    %1138 = vrot.lane.b32.xlu0 %v879, 16
    %v1139 = vpop.permute.xlu0 %1138
    %1140 = vrot.lane.b32.xlu0 %v880, 16
    %v1141 = vpop.permute.xlu0 %1140
    %1142 = vrot.lane.b32.xlu0 %v881, 16
    %v1143 = vpop.permute.xlu0 %1142
    %1144 = vrot.lane.b32.xlu0 %v882, 16
    %v1145 = vpop.permute.xlu0 %1144
    %1146 = vrot.lane.b32.xlu0 %v883, 16
    %v1147 = vpop.permute.xlu0 %1146
    %1148 = vrot.lane.b32.xlu0 %v884, 16
    %v1149 = vpop.permute.xlu0 %1148
    %1150 = vrot.lane.b32.xlu0 %v885, 16
    %v1151 = vpop.permute.xlu0 %1150
    %1152 = vrot.lane.b32.xlu0 %v886, 16
    %v1153 = vpop.permute.xlu0 %1152
    %1154 = vrot.lane.b32.xlu0 %v887, 16
    %v1155 = vpop.permute.xlu0 %1154
    %1156 = vrot.lane.b32.xlu0 %v888, 16
    %v1157 = vpop.permute.xlu0 %1156
    %1158 = vrot.lane.b32.xlu0 %v889, 16
    %v1159 = vpop.permute.xlu0 %1158
    %1160 = vrot.lane.b32.xlu0 %v890, 16
    %v1161 = vpop.permute.xlu0 %1160
    %1162 = vrot.lane.b32.xlu0 %v891, 16
    %v1163 = vpop.permute.xlu0 %1162
    %1164 = vrot.lane.b32.xlu0 %v892, 16
    %v1165 = vpop.permute.xlu0 %1164
    %1166 = vrot.lane.b32.xlu0 %v893, 16
    %v1167 = vpop.permute.xlu0 %1166
    %1168 = vrot.lane.b32.xlu0 %v894, 16
    %v1169 = vpop.permute.xlu0 %1168
    %1170 = vrot.lane.b32.xlu0 %v895, 16
    %v1171 = vpop.permute.xlu0 %1170
    %1172 = vrot.lane.b32.xlu0 %v896, 16
    %v1173 = vpop.permute.xlu0 %1172
    %1200 = vrot.lane.b32.xlu0 %v873, 24
    %v1201 = vpop.permute.xlu0 %1200
    %1202 = vrot.lane.b32.xlu0 %v874, 24
    %v1203 = vpop.permute.xlu0 %1202
    %1204 = vrot.lane.b32.xlu0 %v875, 24
    %v1205 = vpop.permute.xlu0 %1204
    %1206 = vrot.lane.b32.xlu0 %v876, 24
    %v1207 = vpop.permute.xlu0 %1206
    %1208 = vrot.lane.b32.xlu0 %v877, 24
    %v1209 = vpop.permute.xlu0 %1208
    %1210 = vrot.lane.b32.xlu0 %v878, 24
    %v1211 = vpop.permute.xlu0 %1210
    %1212 = vrot.lane.b32.xlu0 %v879, 24
    %v1213 = vpop.permute.xlu0 %1212
    %1214 = vrot.lane.b32.xlu0 %v880, 24
    %v1215 = vpop.permute.xlu0 %1214
    %1216 = vrot.lane.b32.xlu0 %v881, 24
    %v1217 = vpop.permute.xlu0 %1216
    %1218 = vrot.lane.b32.xlu0 %v882, 24
    %v1219 = vpop.permute.xlu0 %1218
    %1220 = vrot.lane.b32.xlu0 %v883, 24
    %v1221 = vpop.permute.xlu0 %1220
    %1222 = vrot.lane.b32.xlu0 %v884, 24
    %v1223 = vpop.permute.xlu0 %1222
    %1224 = vrot.lane.b32.xlu0 %v885, 24
    %v1225 = vpop.permute.xlu0 %1224
    %1226 = vrot.lane.b32.xlu0 %v886, 24
    %v1227 = vpop.permute.xlu0 %1226
    %1228 = vrot.lane.b32.xlu0 %v887, 24
    %v1229 = vpop.permute.xlu0 %1228
    %1230 = vrot.lane.b32.xlu0 %v888, 24
    %v1231 = vpop.permute.xlu0 %1230
    %1232 = vrot.lane.b32.xlu0 %v889, 24
    %v1233 = vpop.permute.xlu0 %1232
    %1234 = vrot.lane.b32.xlu0 %v890, 24
    %v1235 = vpop.permute.xlu0 %1234
    %1236 = vrot.lane.b32.xlu0 %v891, 24
    %v1237 = vpop.permute.xlu0 %1236
    %1238 = vrot.lane.b32.xlu0 %v892, 24
    %v1239 = vpop.permute.xlu0 %1238
    %1240 = vrot.lane.b32.xlu0 %v893, 24
    %v1241 = vpop.permute.xlu0 %1240
    %1242 = vrot.lane.b32.xlu0 %v894, 24
    %v1243 = vpop.permute.xlu0 %1242
    %1244 = vrot.lane.b32.xlu0 %v895, 24
    %v1245 = vpop.permute.xlu0 %1244
    %1246 = vrot.lane.b32.xlu0 %v896, 24
    %v1247 = vpop.permute.xlu0 %1246
    %1248 = vrot.lane.b32.xlu0 %v897, 24
    %v1249 = vpop.permute.xlu0 %1248
    %1300 = vrot.lane.b32.xlu0 %v898, 32
    %v1301 = vpop.permute.xlu0 %1300
    %1302 = vrot.lane.b32.xlu0 %v899, 32
    %v1303 = vpop.permute.xlu0 %1302
    %1304 = vrot.lane.b32.xlu0 %v900, 32
    %v1305 = vpop.permute.xlu0 %1304
    %1306 = vrot.lane.b32.xlu0 %v901, 32
    %v1307 = vpop.permute.xlu0 %1306
    %1308 = vrot.lane.b32.xlu0 %v902, 32
    %v1309 = vpop.permute.xlu0 %1308
    %1310 = vrot.lane.b32.xlu0 %v903, 32
    %v1311 = vpop.permute.xlu0 %1310
    %1312 = vrot.lane.b32.xlu0 %v904, 32
    %v1313 = vpop.permute.xlu0 %1312
    %1314 = vrot.lane.b32.xlu0 %v905, 32
    %v1315 = vpop.permute.xlu0 %1314
    %1316 = vrot.lane.b32.xlu0 %v906, 32
    %v1317 = vpop.permute.xlu0 %1316
    %1318 = vrot.lane.b32.xlu0 %v907, 32
    %v1319 = vpop.permute.xlu0 %1318
    %1320 = vrot.lane.b32.xlu0 %v908, 32
    %v1321 = vpop.permute.xlu0 %1320
    %1322 = vrot.lane.b32.xlu0 %v909, 32
    %v1323 = vpop.permute.xlu0 %1322
    %1324 = vrot.lane.b32.xlu0 %v910, 32
    %v1325 = vpop.permute.xlu0 %1324
    %1326 = vrot.lane.b32.xlu0 %v911, 32
    %v1327 = vpop.permute.xlu0 %1326
    %1328 = vrot.lane.b32.xlu0 %v912, 32
    %v1329 = vpop.permute.xlu0 %1328
    %1330 = vrot.lane.b32.xlu0 %v913, 32
    %v1331 = vpop.permute.xlu0 %1330
    %1332 = vrot.lane.b32.xlu0 %v914, 32
    %v1333 = vpop.permute.xlu0 %1332
    %1334 = vrot.lane.b32.xlu0 %v915, 32
    %v1335 = vpop.permute.xlu0 %1334
    %1336 = vrot.lane.b32.xlu0 %v916, 32
    %v1337 = vpop.permute.xlu0 %1336
    %1338 = vrot.lane.b32.xlu0 %v917, 32
    %v1339 = vpop.permute.xlu0 %1338
    %1340 = vrot.lane.b32.xlu0 %v918, 32
    %v1341 = vpop.permute.xlu0 %1340
    %1342 = vrot.lane.b32.xlu0 %v919, 32
    %v1343 = vpop.permute.xlu0 %1342
    %1344 = vrot.lane.b32.xlu0 %v920, 32
    %v1345 = vpop.permute.xlu0 %1344
    %1346 = vrot.lane.b32.xlu0 %v921, 32
    %v1347 = vpop.permute.xlu0 %1346
    %1348 = vrot.lane.b32.xlu0 %v922, 32
    %v1349 = vpop.permute.xlu0 %1348
    %1400 = vrot.lane.b32.xlu0 %v923, 40
    %v1401 = vpop.permute.xlu0 %1400
    %1402 = vrot.lane.b32.xlu0 %v924, 40
    %v1403 = vpop.permute.xlu0 %1402
    %1404 = vrot.lane.b32.xlu0 %v925, 40
    %v1405 = vpop.permute.xlu0 %1404
    %1406 = vrot.lane.b32.xlu0 %v926, 40
    %v1407 = vpop.permute.xlu0 %1406
    %1408 = vrot.lane.b32.xlu0 %v927, 40
    %v1409 = vpop.permute.xlu0 %1408
    %1410 = vrot.lane.b32.xlu0 %v928, 40
    %v1411 = vpop.permute.xlu0 %1410
    %1412 = vrot.lane.b32.xlu0 %v929, 40
    %v1413 = vpop.permute.xlu0 %1412
    %1414 = vrot.lane.b32.xlu0 %v930, 40
    %v1415 = vpop.permute.xlu0 %1414
    %1416 = vrot.lane.b32.xlu0 %v931, 40
    %v1417 = vpop.permute.xlu0 %1416
    %1418 = vrot.lane.b32.xlu0 %v932, 40
    %v1419 = vpop.permute.xlu0 %1418
    %1420 = vrot.lane.b32.xlu0 %v933, 40
    %v1421 = vpop.permute.xlu0 %1420
    %1422 = vrot.lane.b32.xlu0 %v934, 40
    %v1423 = vpop.permute.xlu0 %1422
    %1424 = vrot.lane.b32.xlu0 %v935, 40
    %v1425 = vpop.permute.xlu0 %1424
    %1426 = vrot.lane.b32.xlu0 %v936, 40
    %v1427 = vpop.permute.xlu0 %1426
    %1428 = vrot.lane.b32.xlu0 %v937, 40
    %v1429 = vpop.permute.xlu0 %1428
    %1430 = vrot.lane.b32.xlu0 %v938, 40
    %v1431 = vpop.permute.xlu0 %1430
    %1432 = vrot.lane.b32.xlu0 %v939, 40
    %v1433 = vpop.permute.xlu0 %1432
    %1434 = vrot.lane.b32.xlu0 %v940, 40
    %v1435 = vpop.permute.xlu0 %1434
    %1436 = vrot.lane.b32.xlu0 %v941, 40
    %v1437 = vpop.permute.xlu0 %1436
    %1438 = vrot.lane.b32.xlu0 %v942, 40
    %v1439 = vpop.permute.xlu0 %1438
    %1440 = vrot.lane.b32.xlu0 %v943, 40
    %v1441 = vpop.permute.xlu0 %1440
    %1442 = vrot.lane.b32.xlu0 %v944, 40
    %v1443 = vpop.permute.xlu0 %1442
    %1444 = vrot.lane.b32.xlu0 %v945, 40
    %v1445 = vpop.permute.xlu0 %1444
    %1446 = vrot.lane.b32.xlu0 %v946, 40
    %v1447 = vpop.permute.xlu0 %1446
    %1448 = vrot.lane.b32.xlu0 %v947, 40
    %v1449 = vpop.permute.xlu0 %1448
    %1476 = vrot.lane.b32.xlu0 %v924, 48
    %v1477 = vpop.permute.xlu0 %1476
    %1478 = vrot.lane.b32.xlu0 %v925, 48
    %v1479 = vpop.permute.xlu0 %1478
    %1480 = vrot.lane.b32.xlu0 %v926, 48
    %v1481 = vpop.permute.xlu0 %1480
    %1482 = vrot.lane.b32.xlu0 %v927, 48
    %v1483 = vpop.permute.xlu0 %1482
    %1484 = vrot.lane.b32.xlu0 %v928, 48
    %v1485 = vpop.permute.xlu0 %1484
    %1486 = vrot.lane.b32.xlu0 %v929, 48
    %v1487 = vpop.permute.xlu0 %1486
    %1488 = vrot.lane.b32.xlu0 %v930, 48
    %v1489 = vpop.permute.xlu0 %1488
    %1490 = vrot.lane.b32.xlu0 %v931, 48
    %v1491 = vpop.permute.xlu0 %1490
    %1492 = vrot.lane.b32.xlu0 %v932, 48
    %v1493 = vpop.permute.xlu0 %1492
    %1494 = vrot.lane.b32.xlu0 %v933, 48
    %v1495 = vpop.permute.xlu0 %1494
    %1496 = vrot.lane.b32.xlu0 %v934, 48
    %v1497 = vpop.permute.xlu0 %1496
    %1498 = vrot.lane.b32.xlu0 %v935, 48
    %v1499 = vpop.permute.xlu0 %1498
    %1500 = vrot.lane.b32.xlu0 %v936, 48
    %v1501 = vpop.permute.xlu0 %1500
    %1502 = vrot.lane.b32.xlu0 %v937, 48
    %v1503 = vpop.permute.xlu0 %1502
    %1504 = vrot.lane.b32.xlu0 %v938, 48
    %v1505 = vpop.permute.xlu0 %1504
    %1506 = vrot.lane.b32.xlu0 %v939, 48
    %v1507 = vpop.permute.xlu0 %1506
    %1508 = vrot.lane.b32.xlu0 %v940, 48
    %v1509 = vpop.permute.xlu0 %1508
    %1510 = vrot.lane.b32.xlu0 %v941, 48
    %v1511 = vpop.permute.xlu0 %1510
    %1512 = vrot.lane.b32.xlu0 %v942, 48
    %v1513 = vpop.permute.xlu0 %1512
    %1514 = vrot.lane.b32.xlu0 %v943, 48
    %v1515 = vpop.permute.xlu0 %1514
    %1516 = vrot.lane.b32.xlu0 %v944, 48
    %v1517 = vpop.permute.xlu0 %1516
    %1518 = vrot.lane.b32.xlu0 %v945, 48
    %v1519 = vpop.permute.xlu0 %1518
    %1520 = vrot.lane.b32.xlu0 %v946, 48
    %v1521 = vpop.permute.xlu0 %1520
    %1522 = vrot.lane.b32.xlu0 %v947, 48
    %v1523 = vpop.permute.xlu0 %1522
    %1524 = vrot.lane.b32.xlu0 %v948, 48
    %v1525 = vpop.permute.xlu0 %1524
    %1576 = vrot.lane.b32.xlu0 %v949, 56
    %v1577 = vpop.permute.xlu0 %1576
    %1578 = vrot.lane.b32.xlu0 %v950, 56
    %v1579 = vpop.permute.xlu0 %1578
    %1580 = vrot.lane.b32.xlu0 %v951, 56
    %v1581 = vpop.permute.xlu0 %1580
    %1582 = vrot.lane.b32.xlu0 %v952, 56
    %v1583 = vpop.permute.xlu0 %1582
    %1584 = vrot.lane.b32.xlu0 %v953, 56
    %v1585 = vpop.permute.xlu0 %1584
    %1586 = vrot.lane.b32.xlu0 %v954, 56
    %v1587 = vpop.permute.xlu0 %1586
    %1588 = vrot.lane.b32.xlu0 %v955, 56
    %v1589 = vpop.permute.xlu0 %1588
    %1590 = vrot.lane.b32.xlu0 %v956, 56
    %v1591 = vpop.permute.xlu0 %1590
    %1592 = vrot.lane.b32.xlu0 %v957, 56
    %v1593 = vpop.permute.xlu0 %1592
    %1594 = vrot.lane.b32.xlu0 %v958, 56
    %v1595 = vpop.permute.xlu0 %1594
    %1596 = vrot.lane.b32.xlu0 %v959, 56
    %v1597 = vpop.permute.xlu0 %1596
    %1598 = vrot.lane.b32.xlu0 %v960, 56
    %v1599 = vpop.permute.xlu0 %1598
    %1600 = vrot.lane.b32.xlu0 %v961, 56
    %v1601 = vpop.permute.xlu0 %1600
    %1602 = vrot.lane.b32.xlu0 %v962, 56
    %v1603 = vpop.permute.xlu0 %1602
    %1604 = vrot.lane.b32.xlu0 %v963, 56
    %v1605 = vpop.permute.xlu0 %1604
    %1606 = vrot.lane.b32.xlu0 %v964, 56
    %v1607 = vpop.permute.xlu0 %1606
    %1608 = vrot.lane.b32.xlu0 %v965, 56
    %v1609 = vpop.permute.xlu0 %1608
    %1610 = vrot.lane.b32.xlu0 %v966, 56
    %v1611 = vpop.permute.xlu0 %1610
    %1612 = vrot.lane.b32.xlu0 %v967, 56
    %v1613 = vpop.permute.xlu0 %1612
    %1614 = vrot.lane.b32.xlu0 %v968, 56
    %v1615 = vpop.permute.xlu0 %1614
    %1616 = vrot.lane.b32.xlu0 %v969, 56
    %v1617 = vpop.permute.xlu0 %1616
    %1618 = vrot.lane.b32.xlu0 %v970, 56
    %v1619 = vpop.permute.xlu0 %1618
    %1620 = vrot.lane.b32.xlu0 %v971, 56
    %v1621 = vpop.permute.xlu0 %1620
    %1622 = vrot.lane.b32.xlu0 %v972, 56
    %v1623 = vpop.permute.xlu0 %1622
    %1624 = vrot.lane.b32.xlu0 %v973, 56
    %v1625 = vpop.permute.xlu0 %1624
    %1676 = vrot.lane.b32.xlu0 %v974, 64
    %v1677 = vpop.permute.xlu0 %1676
    %1678 = vrot.lane.b32.xlu0 %v975, 64
    %v1679 = vpop.permute.xlu0 %1678
    %1680 = vrot.lane.b32.xlu0 %v976, 64
    %v1681 = vpop.permute.xlu0 %1680
    %1682 = vrot.lane.b32.xlu0 %v977, 64
    %v1683 = vpop.permute.xlu0 %1682
    %1684 = vrot.lane.b32.xlu0 %v978, 64
    %v1685 = vpop.permute.xlu0 %1684
    %1686 = vrot.lane.b32.xlu0 %v979, 64
    %v1687 = vpop.permute.xlu0 %1686
    %1688 = vrot.lane.b32.xlu0 %v980, 64
    %v1689 = vpop.permute.xlu0 %1688
    %1690 = vrot.lane.b32.xlu0 %v981, 64
    %v1691 = vpop.permute.xlu0 %1690
    %1692 = vrot.lane.b32.xlu0 %v982, 64
    %v1693 = vpop.permute.xlu0 %1692
    %1694 = vrot.lane.b32.xlu0 %v983, 64
    %v1695 = vpop.permute.xlu0 %1694
    %1696 = vrot.lane.b32.xlu0 %v984, 64
    %v1697 = vpop.permute.xlu0 %1696
    %1698 = vrot.lane.b32.xlu0 %v985, 64
    %v1699 = vpop.permute.xlu0 %1698
    %1700 = vrot.lane.b32.xlu0 %v986, 64
    %v1701 = vpop.permute.xlu0 %1700
    %1702 = vrot.lane.b32.xlu0 %v987, 64
    %v1703 = vpop.permute.xlu0 %1702
    %1704 = vrot.lane.b32.xlu0 %v988, 64
    %v1705 = vpop.permute.xlu0 %1704
    %1706 = vrot.lane.b32.xlu0 %v989, 64
    %v1707 = vpop.permute.xlu0 %1706
    %1708 = vrot.lane.b32.xlu0 %v990, 64
    %v1709 = vpop.permute.xlu0 %1708
    %1710 = vrot.lane.b32.xlu0 %v991, 64
    %v1711 = vpop.permute.xlu0 %1710
    %1712 = vrot.lane.b32.xlu0 %v992, 64
    %v1713 = vpop.permute.xlu0 %1712
    %1714 = vrot.lane.b32.xlu0 %v993, 64
    %v1715 = vpop.permute.xlu0 %1714
    %1716 = vrot.lane.b32.xlu0 %v994, 64
    %v1717 = vpop.permute.xlu0 %1716
    %1718 = vrot.lane.b32.xlu0 %v995, 64
    %v1719 = vpop.permute.xlu0 %1718
    %1720 = vrot.lane.b32.xlu0 %v996, 64
    %v1721 = vpop.permute.xlu0 %1720
    %1722 = vrot.lane.b32.xlu0 %v997, 64
    %v1723 = vpop.permute.xlu0 %1722
    %1724 = vrot.lane.b32.xlu0 %v998, 64
    %v1725 = vpop.permute.xlu0 %1724
    %v1751 = vsel %vm776, %v822, %v1025
    %v1752 = vsel %vm776, %v823, %v1027
    %v1753 = vsel %vm776, %v824, %v1029
    %v1754 = vsel %vm776, %v825, %v1031
    %v1755 = vsel %vm776, %v826, %v1033
    %v1756 = vsel %vm776, %v827, %v1035
    %v1757 = vsel %vm776, %v828, %v1037
    %v1758 = vsel %vm776, %v829, %v1039
    %v1759 = vsel %vm776, %v830, %v1041
    %v1760 = vsel %vm776, %v831, %v1043
    %v1761 = vsel %vm776, %v832, %v1045
    %v1762 = vsel %vm776, %v833, %v1047
    %v1763 = vsel %vm776, %v834, %v1049
    %v1764 = vsel %vm776, %v835, %v1051
    %v1765 = vsel %vm776, %v836, %v1053
    %v1766 = vsel %vm776, %v837, %v1055
    %v1767 = vsel %vm776, %v838, %v1057
    %v1768 = vsel %vm776, %v839, %v1059
    %v1769 = vsel %vm776, %v840, %v1061
    %v1770 = vsel %vm776, %v841, %v1063
    %v1771 = vsel %vm776, %v842, %v1065
    %v1772 = vsel %vm776, %v843, %v1067
    %v1773 = vsel %vm776, %v844, %v1069
    %v1774 = vsel %vm776, %v845, %v1071
    %v1775 = vsel %vm776, %v846, %v1073
    %vm1776 = vcmask 130048
    %v1777 = vsel %vm1776, %v1751, %v1125
    %v1778 = vsel %vm1776, %v1752, %v1127
    %v1779 = vsel %vm1776, %v1753, %v1129
    %v1780 = vsel %vm1776, %v1754, %v1131
    %v1781 = vsel %vm1776, %v1755, %v1133
    %v1782 = vsel %vm1776, %v1756, %v1135
    %v1783 = vsel %vm1776, %v1757, %v1137
    %v1784 = vsel %vm1776, %v1758, %v1139
    %v1785 = vsel %vm1776, %v1759, %v1141
    %v1786 = vsel %vm1776, %v1760, %v1143
    %v1787 = vsel %vm1776, %v1761, %v1145
    %v1788 = vsel %vm1776, %v1762, %v1147
    %v1789 = vsel %vm1776, %v1763, %v1149
    %v1790 = vsel %vm1776, %v1764, %v1151
    %v1791 = vsel %vm1776, %v1765, %v1153
    %v1792 = vsel %vm1776, %v1766, %v1155
    %v1793 = vsel %vm1776, %v1767, %v1157
    %v1794 = vsel %vm1776, %v1768, %v1159
    %v1795 = vsel %vm1776, %v1769, %v1161
    %v1796 = vsel %vm1776, %v1770, %v1163
    %v1797 = vsel %vm1776, %v1771, %v1165
    %v1798 = vsel %vm1776, %v1772, %v1167
    %v1799 = vsel %vm1776, %v1773, %v1169
    %v1800 = vsel %vm1776, %v1774, %v1171
    %v1801 = vsel %vm1776, %v1775, %v1173
    %vm1802 = vcmask 195584
    %v1803 = vsel %vm1802, %v1777, %v1201
    %v1804 = vsel %vm1802, %v1778, %v1203
    %v1805 = vsel %vm1802, %v1779, %v1205
    %v1806 = vsel %vm1802, %v1780, %v1207
    %v1807 = vsel %vm1802, %v1781, %v1209
    %v1808 = vsel %vm1802, %v1782, %v1211
    %v1809 = vsel %vm1802, %v1783, %v1213
    %v1810 = vsel %vm1802, %v1784, %v1215
    %v1811 = vsel %vm1802, %v1785, %v1217
    %v1812 = vsel %vm1802, %v1786, %v1219
    %v1813 = vsel %vm1802, %v1787, %v1221
    %v1814 = vsel %vm1802, %v1788, %v1223
    %v1815 = vsel %vm1802, %v1789, %v1225
    %v1816 = vsel %vm1802, %v1790, %v1227
    %v1817 = vsel %vm1802, %v1791, %v1229
    %v1818 = vsel %vm1802, %v1792, %v1231
    %v1819 = vsel %vm1802, %v1793, %v1233
    %v1820 = vsel %vm1802, %v1794, %v1235
    %v1821 = vsel %vm1802, %v1795, %v1237
    %v1822 = vsel %vm1802, %v1796, %v1239
    %v1823 = vsel %vm1802, %v1797, %v1241
    %v1824 = vsel %vm1802, %v1798, %v1243
    %v1825 = vsel %vm1802, %v1799, %v1245
    %v1826 = vsel %vm1802, %v1800, %v1247
    %v1827 = vsel %vm1802, %v1801, %v1249
    %vm1828 = vcmask 261120
    %v1829 = vsel %vm1828, %v1803, %v1301
    %v1830 = vsel %vm1828, %v1804, %v1303
    %v1831 = vsel %vm1828, %v1805, %v1305
    %v1832 = vsel %vm1828, %v1806, %v1307
    %v1833 = vsel %vm1828, %v1807, %v1309
    %v1834 = vsel %vm1828, %v1808, %v1311
    %v1835 = vsel %vm1828, %v1809, %v1313
    %v1836 = vsel %vm1828, %v1810, %v1315
    %v1837 = vsel %vm1828, %v1811, %v1317
    %v1838 = vsel %vm1828, %v1812, %v1319
    %v1839 = vsel %vm1828, %v1813, %v1321
    %v1840 = vsel %vm1828, %v1814, %v1323
    %v1841 = vsel %vm1828, %v1815, %v1325
    %v1842 = vsel %vm1828, %v1816, %v1327
    %v1843 = vsel %vm1828, %v1817, %v1329
    %v1844 = vsel %vm1828, %v1818, %v1331
    %v1845 = vsel %vm1828, %v1819, %v1333
    %v1846 = vsel %vm1828, %v1820, %v1335
    %v1847 = vsel %vm1828, %v1821, %v1337
    %v1848 = vsel %vm1828, %v1822, %v1339
    %v1849 = vsel %vm1828, %v1823, %v1341
    %v1850 = vsel %vm1828, %v1824, %v1343
    %v1851 = vsel %vm1828, %v1825, %v1345
    %v1852 = vsel %vm1828, %v1826, %v1347
    %v1853 = vsel %vm1828, %v1827, %v1349
    %vm1854 = vcmask 326656
    %v1855 = vsel %vm1854, %v1829, %v1401
    %v1856 = vsel %vm1854, %v1830, %v1403
    %v1857 = vsel %vm1854, %v1831, %v1405
    %v1858 = vsel %vm1854, %v1832, %v1407
    %v1859 = vsel %vm1854, %v1833, %v1409
    %v1860 = vsel %vm1854, %v1834, %v1411
    %v1861 = vsel %vm1854, %v1835, %v1413
    %v1862 = vsel %vm1854, %v1836, %v1415
    %v1863 = vsel %vm1854, %v1837, %v1417
    %v1864 = vsel %vm1854, %v1838, %v1419
    %v1865 = vsel %vm1854, %v1839, %v1421
    %v1866 = vsel %vm1854, %v1840, %v1423
    %v1867 = vsel %vm1854, %v1841, %v1425
    %v1868 = vsel %vm1854, %v1842, %v1427
    %v1869 = vsel %vm1854, %v1843, %v1429
    %v1870 = vsel %vm1854, %v1844, %v1431
    %v1871 = vsel %vm1854, %v1845, %v1433
    %v1872 = vsel %vm1854, %v1846, %v1435
    %v1873 = vsel %vm1854, %v1847, %v1437
    %v1874 = vsel %vm1854, %v1848, %v1439
    %v1875 = vsel %vm1854, %v1849, %v1441
    %v1876 = vsel %vm1854, %v1850, %v1443
    %v1877 = vsel %vm1854, %v1851, %v1445
    %v1878 = vsel %vm1854, %v1852, %v1447
    %v1879 = vsel %vm1854, %v1853, %v1449
    %vm1880 = vcmask 392192
    %v1881 = vsel %vm1880, %v1855, %v1477
    %v1882 = vsel %vm1880, %v1856, %v1479
    %v1883 = vsel %vm1880, %v1857, %v1481
    %v1884 = vsel %vm1880, %v1858, %v1483
    %v1885 = vsel %vm1880, %v1859, %v1485
    %v1886 = vsel %vm1880, %v1860, %v1487
    %v1887 = vsel %vm1880, %v1861, %v1489
    %v1888 = vsel %vm1880, %v1862, %v1491
    %v1889 = vsel %vm1880, %v1863, %v1493
    %v1890 = vsel %vm1880, %v1864, %v1495
    %v1891 = vsel %vm1880, %v1865, %v1497
    %v1892 = vsel %vm1880, %v1866, %v1499
    %v1893 = vsel %vm1880, %v1867, %v1501
    %v1894 = vsel %vm1880, %v1868, %v1503
    %v1895 = vsel %vm1880, %v1869, %v1505
    %v1896 = vsel %vm1880, %v1870, %v1507
    %v1897 = vsel %vm1880, %v1871, %v1509
    %v1898 = vsel %vm1880, %v1872, %v1511
    %v1899 = vsel %vm1880, %v1873, %v1513
    %v1900 = vsel %vm1880, %v1874, %v1515
    %v1901 = vsel %vm1880, %v1875, %v1517
    %v1902 = vsel %vm1880, %v1876, %v1519
    %v1903 = vsel %vm1880, %v1877, %v1521
    %v1904 = vsel %vm1880, %v1878, %v1523
    %v1905 = vsel %vm1880, %v1879, %v1525
    %vm1906 = vcmask 457728
    %v1907 = vsel %vm1906, %v1881, %v1577
    %v1908 = vsel %vm1906, %v1882, %v1579
    %v1909 = vsel %vm1906, %v1883, %v1581
    %v1910 = vsel %vm1906, %v1884, %v1583
    %v1911 = vsel %vm1906, %v1885, %v1585
    %v1912 = vsel %vm1906, %v1886, %v1587
    %v1913 = vsel %vm1906, %v1887, %v1589
    %v1914 = vsel %vm1906, %v1888, %v1591
    %v1915 = vsel %vm1906, %v1889, %v1593
    %v1916 = vsel %vm1906, %v1890, %v1595
    %v1917 = vsel %vm1906, %v1891, %v1597
    %v1918 = vsel %vm1906, %v1892, %v1599
    %v1919 = vsel %vm1906, %v1893, %v1601
    %v1920 = vsel %vm1906, %v1894, %v1603
    %v1921 = vsel %vm1906, %v1895, %v1605
    %v1922 = vsel %vm1906, %v1896, %v1607
    %v1923 = vsel %vm1906, %v1897, %v1609
    %v1924 = vsel %vm1906, %v1898, %v1611
    %v1925 = vsel %vm1906, %v1899, %v1613
    %v1926 = vsel %vm1906, %v1900, %v1615
    %v1927 = vsel %vm1906, %v1901, %v1617
    %v1928 = vsel %vm1906, %v1902, %v1619
    %v1929 = vsel %vm1906, %v1903, %v1621
    %v1930 = vsel %vm1906, %v1904, %v1623
    %v1931 = vsel %vm1906, %v1905, %v1625
    %vm1932 = vcmask 523264
    %v1933 = vsel %vm1932, %v1907, %v1677
    %v1934 = vsel %vm1932, %v1908, %v1679
    %v1935 = vsel %vm1932, %v1909, %v1681
    %v1936 = vsel %vm1932, %v1910, %v1683
    %v1937 = vsel %vm1932, %v1911, %v1685
    %v1938 = vsel %vm1932, %v1912, %v1687
    %v1939 = vsel %vm1932, %v1913, %v1689
    %v1940 = vsel %vm1932, %v1914, %v1691
    %v1941 = vsel %vm1932, %v1915, %v1693
    %v1942 = vsel %vm1932, %v1916, %v1695
    %v1943 = vsel %vm1932, %v1917, %v1697
    %v1944 = vsel %vm1932, %v1918, %v1699
    %v1945 = vsel %vm1932, %v1919, %v1701
    %v1946 = vsel %vm1932, %v1920, %v1703
    %v1947 = vsel %vm1932, %v1921, %v1705
    %v1948 = vsel %vm1932, %v1922, %v1707
    %v1949 = vsel %vm1932, %v1923, %v1709
    %v1950 = vsel %vm1932, %v1924, %v1711
    %v1951 = vsel %vm1932, %v1925, %v1713
    %v1952 = vsel %vm1932, %v1926, %v1715
    %v1953 = vsel %vm1932, %v1927, %v1717
    %v1954 = vsel %vm1932, %v1928, %v1719
    %v1955 = vsel %vm1932, %v1929, %v1721
    %v1956 = vsel %vm1932, %v1930, %v1723
    %v1957 = vsel %vm1932, %v1931, %v1725
    %v1958 = vpack.c.bf16 %v1934, %v1933
    %v1959 = vpack.c.bf16 %v1936, %v1935
    %v1960 = vpack.c.bf16 %v1938, %v1937
    %v1961 = vpack.c.bf16 %v1940, %v1939
    %v1962 = vpack.c.bf16 %v1942, %v1941
    %v1963 = vpack.c.bf16 %v1944, %v1943
    %v1964 = vpack.c.bf16 %v1946, %v1945
    %v1965 = vpack.c.bf16 %v1948, %v1947
    %v1966 = vpack.c.bf16 %v1950, %v1949
    %v1967 = vpack.c.bf16 %v1952, %v1951
    %v1968 = vpack.c.bf16 %v1954, %v1953
    %v1969 = vpack.c.bf16 %v1956, %v1955
    %v1970 = vpack.c.bf16 %v1957, %v1957
    %v1971 = vld [vmem:[%s3] sm:$0xf]
    %v1972 = vld [vmem:[%s3 + $0x4] sm:$0xf]
    %v1973 = vld [vmem:[%s3 + $0x8] sm:$0xf]
    %v1974 = vld [vmem:[%s3 + $0xc] sm:$0xf]
    %v1975 = vld [vmem:[%s3 + $0x10] sm:$0xf]
    %v1976 = vld [vmem:[%s3 + $0x14] sm:$0xf]
    %v1977 = vld [vmem:[%s3 + $0x18] sm:$0xf]
    %v1978 = vld [vmem:[%s3 + $0x1c] sm:$0xf]
    %v1979 = vld [vmem:[%s3 + $0x20] sm:$0xf]
    %v1980 = vld [vmem:[%s4] sm:$0x1]
    %v1982 = vperm.slane %v1980, 0
    %v1993 = vunpack.c.l.b16 %v1971
    %v1994 = vunpack.c.l.b16 %v1972
    %v1995 = vunpack.c.l.b16 %v1973
    %v1996 = vunpack.c.l.b16 %v1974
    %v1997 = vunpack.c.l.b16 %v1975
    %v1998 = vunpack.c.l.b16 %v1976
    %v1999 = vunpack.c.l.b16 %v1977
    %v2000 = vunpack.c.l.b16 %v1978
    %v2001 = vunpack.c.l.b16 %v1979
    %v2002 = vpack.c.b16 %v1994, %v1993
    %v2003 = vpack.c.b16 %v1996, %v1995
    %v2004 = vpack.c.b16 %v1998, %v1997
    %v2005 = vpack.c.b16 %v2000, %v1999
    %v2006 = vpack.c.b16 %v2001, %v2001
    %vm2011 = vcmask 588800
    %v2013 = vsel %vm2011, %v1958, 0
    %v2016 = vsel %vm2011, %v1959, 0
    %v2019 = vsel %vm2011, %v1960, 0
    %v2022 = vsel %vm2011, %v1961, 0
    %v2025 = vsel %vm2011, %v1962, 0
    %v2028 = vsel %vm2011, %v1963, 0
    %v2031 = vsel %vm2011, %v1964, 0
    %v2034 = vsel %vm2011, %v1965, 0
    %v2037 = vsel %vm2011, %v1966, 0
    %v2040 = vsel %vm2011, %v1967, 0
    %v2043 = vsel %vm2011, %v1968, 0
    %v2046 = vsel %vm2011, %v1969, 0
    %v2049 = vsel %vm2011, %v1970, 0
    %v2052 = vsel %vm360, %v2006, 0
    %2054 = vmatpush.bf16.msra.mxu0 0
    %2055 = vmatpush.bf16.msra.mxu0 0
    %2056 = vmatpush.bf16.msra.mxu0 0
    %2057 = vmatpush.bf16.msra.mxu0 %v2052
    %2058 = vmatpush.bf16.msra.mxu0 %v2005
    %2059 = vmatpush.bf16.msra.mxu0 %v2004
    %2060 = vmatpush.bf16.msra.mxu0 %v2003
    %2061 = vmatpush.bf16.msra.mxu0 %v2002
    %2062 = vmatmul.bf16.gmra.mxu0 %v2013
    %v2063 = vpop.f32.mrf.mxu0
    %v2064 = vadd.f32 %v1982, %v2063
    %v2065 = vpop.f32.mrf.mxu0
    %v2066 = vadd.f32 %v1982, %v2065
    %2067 = vmatmul.bf16.gmra.mxu0 %v2016
    %v2068 = vpop.f32.mrf.mxu0
    %v2069 = vadd.f32 %v1982, %v2068
    %v2070 = vpop.f32.mrf.mxu0
    %v2071 = vadd.f32 %v1982, %v2070
    %2072 = vmatmul.bf16.gmra.mxu0 %v2019
    %v2073 = vpop.f32.mrf.mxu0
    %v2074 = vadd.f32 %v1982, %v2073
    %v2075 = vpop.f32.mrf.mxu0
    %v2076 = vadd.f32 %v1982, %v2075
    %2077 = vmatmul.bf16.gmra.mxu0 %v2022
    %v2078 = vpop.f32.mrf.mxu0
    %v2079 = vadd.f32 %v1982, %v2078
    %v2080 = vpop.f32.mrf.mxu0
    %v2081 = vadd.f32 %v1982, %v2080
    %2082 = vmatmul.bf16.gmra.mxu0 %v2025
    %v2083 = vpop.f32.mrf.mxu0
    %v2084 = vadd.f32 %v1982, %v2083
    %v2085 = vpop.f32.mrf.mxu0
    %v2086 = vadd.f32 %v1982, %v2085
    %2087 = vmatmul.bf16.gmra.mxu0 %v2028
    %v2088 = vpop.f32.mrf.mxu0
    %v2089 = vadd.f32 %v1982, %v2088
    %v2090 = vpop.f32.mrf.mxu0
    %v2091 = vadd.f32 %v1982, %v2090
    %2092 = vmatmul.bf16.gmra.mxu0 %v2031
    %v2093 = vpop.f32.mrf.mxu0
    %v2094 = vadd.f32 %v1982, %v2093
    %v2095 = vpop.f32.mrf.mxu0
    %v2096 = vadd.f32 %v1982, %v2095
    %2097 = vmatmul.bf16.gmra.mxu0 %v2034
    %v2098 = vpop.f32.mrf.mxu0
    %v2099 = vadd.f32 %v1982, %v2098
    %v2100 = vpop.f32.mrf.mxu0
    %v2101 = vadd.f32 %v1982, %v2100
    %2102 = vmatmul.bf16.gmra.mxu0 %v2037
    %v2103 = vpop.f32.mrf.mxu0
    %v2104 = vadd.f32 %v1982, %v2103
    %v2105 = vpop.f32.mrf.mxu0
    %v2106 = vadd.f32 %v1982, %v2105
    %2107 = vmatmul.bf16.gmra.mxu0 %v2040
    %v2108 = vpop.f32.mrf.mxu0
    %v2109 = vadd.f32 %v1982, %v2108
    %v2110 = vpop.f32.mrf.mxu0
    %v2111 = vadd.f32 %v1982, %v2110
    %2112 = vmatmul.bf16.gmra.mxu0 %v2043
    %v2113 = vpop.f32.mrf.mxu0
    %v2114 = vadd.f32 %v1982, %v2113
    %v2115 = vpop.f32.mrf.mxu0
    %v2116 = vadd.f32 %v1982, %v2115
    %2117 = vmatmul.bf16.gmra.mxu0 %v2046
    %v2118 = vpop.f32.mrf.mxu0
    %v2119 = vadd.f32 %v1982, %v2118
    %v2120 = vpop.f32.mrf.mxu0
    %v2121 = vadd.f32 %v1982, %v2120
    %2122 = vmatmul.bf16.gmra.mxu0 %v2049
    %v2123 = vpop.f32.mrf.mxu0
    %v2124 = vadd.f32 %v1982, %v2123
    %v2125 = vpop.f32.mrf.mxu0
    %2126 = vdwg.mxu0
    %vm2127 = vcmp.ge.f32.partialorder %v2064, 0.0
    %vm2128 = vcmp.ge.f32.partialorder %v2066, 0.0
    %vm2129 = vcmp.ge.f32.partialorder %v2069, 0.0
    %vm2130 = vcmp.ge.f32.partialorder %v2071, 0.0
    %vm2131 = vcmp.ge.f32.partialorder %v2074, 0.0
    %vm2132 = vcmp.ge.f32.partialorder %v2076, 0.0
    %vm2133 = vcmp.ge.f32.partialorder %v2079, 0.0
    %vm2134 = vcmp.ge.f32.partialorder %v2081, 0.0
    %vm2135 = vcmp.ge.f32.partialorder %v2084, 0.0
    %vm2136 = vcmp.ge.f32.partialorder %v2086, 0.0
    %vm2137 = vcmp.ge.f32.partialorder %v2089, 0.0
    %vm2138 = vcmp.ge.f32.partialorder %v2091, 0.0
    %vm2139 = vcmp.ge.f32.partialorder %v2094, 0.0
    %vm2140 = vcmp.ge.f32.partialorder %v2096, 0.0
    %vm2141 = vcmp.ge.f32.partialorder %v2099, 0.0
    %vm2142 = vcmp.ge.f32.partialorder %v2101, 0.0
    %vm2143 = vcmp.ge.f32.partialorder %v2104, 0.0
    %vm2144 = vcmp.ge.f32.partialorder %v2106, 0.0
    %vm2145 = vcmp.ge.f32.partialorder %v2109, 0.0
    %vm2146 = vcmp.ge.f32.partialorder %v2111, 0.0
    %vm2147 = vcmp.ge.f32.partialorder %v2114, 0.0
    %vm2148 = vcmp.ge.f32.partialorder %v2116, 0.0
    %vm2149 = vcmp.ge.f32.partialorder %v2119, 0.0
    %vm2150 = vcmp.ge.f32.partialorder %v2121, 0.0
    %vm2151 = vcmp.ge.f32.partialorder %v2124, 0.0
    %v2152 = vmul.f32 %v2064, 0.01
    %v2153 = vmul.f32 %v2066, 0.01
    %v2154 = vmul.f32 %v2069, 0.01
    %v2155 = vmul.f32 %v2071, 0.01
    %v2156 = vmul.f32 %v2074, 0.01
    %v2157 = vmul.f32 %v2076, 0.01
    %v2158 = vmul.f32 %v2079, 0.01
    %v2159 = vmul.f32 %v2081, 0.01
    %v2160 = vmul.f32 %v2084, 0.01
    %v2161 = vmul.f32 %v2086, 0.01
    %v2162 = vmul.f32 %v2089, 0.01
    %v2163 = vmul.f32 %v2091, 0.01
    %v2164 = vmul.f32 %v2094, 0.01
    %v2165 = vmul.f32 %v2096, 0.01
    %v2166 = vmul.f32 %v2099, 0.01
    %v2167 = vmul.f32 %v2101, 0.01
    %v2168 = vmul.f32 %v2104, 0.01
    %v2169 = vmul.f32 %v2106, 0.01
    %v2170 = vmul.f32 %v2109, 0.01
    %v2171 = vmul.f32 %v2111, 0.01
    %v2172 = vmul.f32 %v2114, 0.01
    %v2173 = vmul.f32 %v2116, 0.01
    %v2174 = vmul.f32 %v2119, 0.01
    %v2175 = vmul.f32 %v2121, 0.01
    %v2176 = vmul.f32 %v2124, 0.01
    %v2177 = vsel %vm2127, %v2064, %v2152
    %v2178 = vsel %vm2128, %v2066, %v2153
    %v2179 = vsel %vm2129, %v2069, %v2154
    %v2180 = vsel %vm2130, %v2071, %v2155
    %v2181 = vsel %vm2131, %v2074, %v2156
    %v2182 = vsel %vm2132, %v2076, %v2157
    %v2183 = vsel %vm2133, %v2079, %v2158
    %v2184 = vsel %vm2134, %v2081, %v2159
    %v2185 = vsel %vm2135, %v2084, %v2160
    %v2186 = vsel %vm2136, %v2086, %v2161
    %v2187 = vsel %vm2137, %v2089, %v2162
    %v2188 = vsel %vm2138, %v2091, %v2163
    %v2189 = vsel %vm2139, %v2094, %v2164
    %v2190 = vsel %vm2140, %v2096, %v2165
    %v2191 = vsel %vm2141, %v2099, %v2166
    %v2192 = vsel %vm2142, %v2101, %v2167
    %v2193 = vsel %vm2143, %v2104, %v2168
    %v2194 = vsel %vm2144, %v2106, %v2169
    %v2195 = vsel %vm2145, %v2109, %v2170
    %v2196 = vsel %vm2146, %v2111, %v2171
    %v2197 = vsel %vm2147, %v2114, %v2172
    %v2198 = vsel %vm2148, %v2116, %v2173
    %v2199 = vsel %vm2149, %v2119, %v2174
    %v2200 = vsel %vm2150, %v2121, %v2175
    %v2201 = vsel %vm2151, %v2124, %v2176
    %2202 = vst.msk [vmem:[#allocation3 + $0xc8] sm:$0xff] %vm1776, 0.0
    %2203 = vst.msk [vmem:[#allocation3 + $0xd0] sm:$0xff] %vm1776, 0.0
    %2204 = vst.msk [vmem:[#allocation3] sm:$0xff] %vm1776, %v2177
    %2205 = vst.msk [vmem:[#allocation3 + $0x8] sm:$0xff] %vm1776, %v2178
    %2206 = vst.msk [vmem:[#allocation3 + $0x10] sm:$0xff] %vm1776, %v2179
    %2207 = vst.msk [vmem:[#allocation3 + $0x18] sm:$0xff] %vm1776, %v2180
    %2208 = vst.msk [vmem:[#allocation3 + $0x20] sm:$0xff] %vm1776, %v2181
    %2209 = vst.msk [vmem:[#allocation3 + $0x28] sm:$0xff] %vm1776, %v2182
    %2210 = vst.msk [vmem:[#allocation3 + $0x30] sm:$0xff] %vm1776, %v2183
    %2211 = vst.msk [vmem:[#allocation3 + $0x38] sm:$0xff] %vm1776, %v2184
    %2212 = vst.msk [vmem:[#allocation3 + $0x40] sm:$0xff] %vm1776, %v2185
    %2213 = vst.msk [vmem:[#allocation3 + $0x48] sm:$0xff] %vm1776, %v2186
    %2214 = vst.msk [vmem:[#allocation3 + $0x50] sm:$0xff] %vm1776, %v2187
    %2215 = vst.msk [vmem:[#allocation3 + $0x58] sm:$0xff] %vm1776, %v2188
    %2216 = vst.msk [vmem:[#allocation3 + $0x60] sm:$0xff] %vm1776, %v2189
    %2217 = vst.msk [vmem:[#allocation3 + $0x68] sm:$0xff] %vm1776, %v2190
    %2218 = vst.msk [vmem:[#allocation3 + $0x70] sm:$0xff] %vm1776, %v2191
    %2219 = vst.msk [vmem:[#allocation3 + $0x78] sm:$0xff] %vm1776, %v2192
    %2220 = vst.msk [vmem:[#allocation3 + $0x80] sm:$0xff] %vm1776, %v2193
    %2221 = vst.msk [vmem:[#allocation3 + $0x88] sm:$0xff] %vm1776, %v2194
    %2222 = vst.msk [vmem:[#allocation3 + $0x90] sm:$0xff] %vm1776, %v2195
    %2223 = vst.msk [vmem:[#allocation3 + $0x98] sm:$0xff] %vm1776, %v2196
    %2224 = vst.msk [vmem:[#allocation3 + $0xa0] sm:$0xff] %vm1776, %v2197
    %2225 = vst.msk [vmem:[#allocation3 + $0xa8] sm:$0xff] %vm1776, %v2198
    %2226 = vst.msk [vmem:[#allocation3 + $0xb0] sm:$0xff] %vm1776, %v2199
    %2227 = vst.msk [vmem:[#allocation3 + $0xb8] sm:$0xff] %vm1776, %v2200
    %2228 = vst.msk [vmem:[#allocation3 + $0xc0] sm:$0xff] %vm1776, %v2201
    %v2229 = vld [vmem:[#allocation3 + $0x1] sm:$0xff]
    %v2230 = vld [vmem:[#allocation3 + $0x9] sm:$0xff]
    %v2231 = vld [vmem:[#allocation3 + $0x11] sm:$0xff]
    %v2232 = vld [vmem:[#allocation3 + $0x19] sm:$0xff]
    %v2233 = vld [vmem:[#allocation3 + $0x21] sm:$0xff]
    %v2234 = vld [vmem:[#allocation3 + $0x29] sm:$0xff]
    %v2235 = vld [vmem:[#allocation3 + $0x31] sm:$0xff]
    %v2236 = vld [vmem:[#allocation3 + $0x39] sm:$0xff]
    %v2237 = vld [vmem:[#allocation3 + $0x41] sm:$0xff]
    %v2238 = vld [vmem:[#allocation3 + $0x49] sm:$0xff]
    %v2239 = vld [vmem:[#allocation3 + $0x51] sm:$0xff]
    %v2240 = vld [vmem:[#allocation3 + $0x59] sm:$0xff]
    %v2241 = vld [vmem:[#allocation3 + $0x61] sm:$0xff]
    %v2242 = vld [vmem:[#allocation3 + $0x69] sm:$0xff]
    %v2243 = vld [vmem:[#allocation3 + $0x71] sm:$0xff]
    %v2244 = vld [vmem:[#allocation3 + $0x79] sm:$0xff]
    %v2245 = vld [vmem:[#allocation3 + $0x81] sm:$0xff]
    %v2246 = vld [vmem:[#allocation3 + $0x89] sm:$0xff]
    %v2247 = vld [vmem:[#allocation3 + $0x91] sm:$0xff]
    %v2248 = vld [vmem:[#allocation3 + $0x99] sm:$0xff]
    %v2249 = vld [vmem:[#allocation3 + $0xa1] sm:$0xff]
    %v2250 = vld [vmem:[#allocation3 + $0xa9] sm:$0xff]
    %v2251 = vld [vmem:[#allocation3 + $0xb1] sm:$0xff]
    %v2252 = vld [vmem:[#allocation3 + $0xb9] sm:$0xff]
    %v2253 = vld [vmem:[#allocation3 + $0xc1] sm:$0xff]
    %v2254 = vmax.f32 %v2177, %v2229
    %v2255 = vmax.f32 %v2178, %v2230
    %v2256 = vmax.f32 %v2179, %v2231
    %v2257 = vmax.f32 %v2180, %v2232
    %v2258 = vmax.f32 %v2181, %v2233
    %v2259 = vmax.f32 %v2182, %v2234
    %v2260 = vmax.f32 %v2183, %v2235
    %v2261 = vmax.f32 %v2184, %v2236
    %v2262 = vmax.f32 %v2185, %v2237
    %v2263 = vmax.f32 %v2186, %v2238
    %v2264 = vmax.f32 %v2187, %v2239
    %v2265 = vmax.f32 %v2188, %v2240
    %v2266 = vmax.f32 %v2189, %v2241
    %v2267 = vmax.f32 %v2190, %v2242
    %v2268 = vmax.f32 %v2191, %v2243
    %v2269 = vmax.f32 %v2192, %v2244
    %v2270 = vmax.f32 %v2193, %v2245
    %v2271 = vmax.f32 %v2194, %v2246
    %v2272 = vmax.f32 %v2195, %v2247
    %v2273 = vmax.f32 %v2196, %v2248
    %v2274 = vmax.f32 %v2197, %v2249
    %v2275 = vmax.f32 %v2198, %v2250
    %v2276 = vmax.f32 %v2199, %v2251
    %v2277 = vmax.f32 %v2200, %v2252
    %v2278 = vmax.f32 %v2201, %v2253
    %v2279 = vld [vmem:[#allocation3 + $0xa] sm:$0xff]
    %v2280 = vld [vmem:[#allocation3 + $0x12] sm:$0xff]
    %v2281 = vld [vmem:[#allocation3 + $0x1a] sm:$0xff]
    %v2282 = vld [vmem:[#allocation3 + $0x22] sm:$0xff]
    %v2283 = vld [vmem:[#allocation3 + $0x2a] sm:$0xff]
    %v2284 = vld [vmem:[#allocation3 + $0x32] sm:$0xff]
    %v2285 = vld [vmem:[#allocation3 + $0x3a] sm:$0xff]
    %v2286 = vld [vmem:[#allocation3 + $0x42] sm:$0xff]
    %v2287 = vld [vmem:[#allocation3 + $0x4a] sm:$0xff]
    %v2288 = vld [vmem:[#allocation3 + $0x52] sm:$0xff]
    %v2289 = vld [vmem:[#allocation3 + $0x5a] sm:$0xff]
    %v2290 = vld [vmem:[#allocation3 + $0x62] sm:$0xff]
    %v2291 = vld [vmem:[#allocation3 + $0x6a] sm:$0xff]
    %v2292 = vld [vmem:[#allocation3 + $0x72] sm:$0xff]
    %v2293 = vld [vmem:[#allocation3 + $0x7a] sm:$0xff]
    %v2294 = vld [vmem:[#allocation3 + $0x82] sm:$0xff]
    %v2295 = vld [vmem:[#allocation3 + $0x8a] sm:$0xff]
    %v2296 = vld [vmem:[#allocation3 + $0x92] sm:$0xff]
    %v2297 = vld [vmem:[#allocation3 + $0x9a] sm:$0xff]
    %v2298 = vld [vmem:[#allocation3 + $0xa2] sm:$0xff]
    %v2299 = vld [vmem:[#allocation3 + $0xaa] sm:$0xff]
    %v2300 = vld [vmem:[#allocation3 + $0xb2] sm:$0xff]
    %v2301 = vld [vmem:[#allocation3 + $0xba] sm:$0xff]
    %v2302 = vld [vmem:[#allocation3 + $0xc2] sm:$0xff]
    %v2303 = vld [vmem:[#allocation3 + $0xca] sm:$0xff]
    %v2304 = vmax.f32 %v2254, %v2279
    %v2305 = vmax.f32 %v2255, %v2280
    %v2306 = vmax.f32 %v2256, %v2281
    %v2307 = vmax.f32 %v2257, %v2282
    %v2308 = vmax.f32 %v2258, %v2283
    %v2309 = vmax.f32 %v2259, %v2284
    %v2310 = vmax.f32 %v2260, %v2285
    %v2311 = vmax.f32 %v2261, %v2286
    %v2312 = vmax.f32 %v2262, %v2287
    %v2313 = vmax.f32 %v2263, %v2288
    %v2314 = vmax.f32 %v2264, %v2289
    %v2315 = vmax.f32 %v2265, %v2290
    %v2316 = vmax.f32 %v2266, %v2291
    %v2317 = vmax.f32 %v2267, %v2292
    %v2318 = vmax.f32 %v2268, %v2293
    %v2319 = vmax.f32 %v2269, %v2294
    %v2320 = vmax.f32 %v2270, %v2295
    %v2321 = vmax.f32 %v2271, %v2296
    %v2322 = vmax.f32 %v2272, %v2297
    %v2323 = vmax.f32 %v2273, %v2298
    %v2324 = vmax.f32 %v2274, %v2299
    %v2325 = vmax.f32 %v2275, %v2300
    %v2326 = vmax.f32 %v2276, %v2301
    %v2327 = vmax.f32 %v2277, %v2302
    %v2328 = vmax.f32 %v2278, %v2303
    %v2329 = vld [vmem:[#allocation3 + $0xb] sm:$0xff]
    %v2330 = vld [vmem:[#allocation3 + $0x13] sm:$0xff]
    %v2331 = vld [vmem:[#allocation3 + $0x1b] sm:$0xff]
    %v2332 = vld [vmem:[#allocation3 + $0x23] sm:$0xff]
    %v2333 = vld [vmem:[#allocation3 + $0x2b] sm:$0xff]
    %v2334 = vld [vmem:[#allocation3 + $0x33] sm:$0xff]
    %v2335 = vld [vmem:[#allocation3 + $0x3b] sm:$0xff]
    %v2336 = vld [vmem:[#allocation3 + $0x43] sm:$0xff]
    %v2337 = vld [vmem:[#allocation3 + $0x4b] sm:$0xff]
    %v2338 = vld [vmem:[#allocation3 + $0x53] sm:$0xff]
    %v2339 = vld [vmem:[#allocation3 + $0x5b] sm:$0xff]
    %v2340 = vld [vmem:[#allocation3 + $0x63] sm:$0xff]
    %v2341 = vld [vmem:[#allocation3 + $0x6b] sm:$0xff]
    %v2342 = vld [vmem:[#allocation3 + $0x73] sm:$0xff]
    %v2343 = vld [vmem:[#allocation3 + $0x7b] sm:$0xff]
    %v2344 = vld [vmem:[#allocation3 + $0x83] sm:$0xff]
    %v2345 = vld [vmem:[#allocation3 + $0x8b] sm:$0xff]
    %v2346 = vld [vmem:[#allocation3 + $0x93] sm:$0xff]
    %v2347 = vld [vmem:[#allocation3 + $0x9b] sm:$0xff]
    %v2348 = vld [vmem:[#allocation3 + $0xa3] sm:$0xff]
    %v2349 = vld [vmem:[#allocation3 + $0xab] sm:$0xff]
    %v2350 = vld [vmem:[#allocation3 + $0xb3] sm:$0xff]
    %v2351 = vld [vmem:[#allocation3 + $0xbb] sm:$0xff]
    %v2352 = vld [vmem:[#allocation3 + $0xc3] sm:$0xff]
    %v2353 = vld [vmem:[#allocation3 + $0xcb] sm:$0xff]
    %v2354 = vmax.f32 %v2304, %v2329
    %v2355 = vmax.f32 %v2305, %v2330
    %v2356 = vmax.f32 %v2306, %v2331
    %v2357 = vmax.f32 %v2307, %v2332
    %v2358 = vmax.f32 %v2308, %v2333
    %v2359 = vmax.f32 %v2309, %v2334
    %v2360 = vmax.f32 %v2310, %v2335
    %v2361 = vmax.f32 %v2311, %v2336
    %v2362 = vmax.f32 %v2312, %v2337
    %v2363 = vmax.f32 %v2313, %v2338
    %v2364 = vmax.f32 %v2314, %v2339
    %v2365 = vmax.f32 %v2315, %v2340
    %v2366 = vmax.f32 %v2316, %v2341
    %v2367 = vmax.f32 %v2317, %v2342
    %v2368 = vmax.f32 %v2318, %v2343
    %v2369 = vmax.f32 %v2319, %v2344
    %v2370 = vmax.f32 %v2320, %v2345
    %v2371 = vmax.f32 %v2321, %v2346
    %v2372 = vmax.f32 %v2322, %v2347
    %v2373 = vmax.f32 %v2323, %v2348
    %v2374 = vmax.f32 %v2324, %v2349
    %v2375 = vmax.f32 %v2325, %v2350
    %v2376 = vmax.f32 %v2326, %v2351
    %v2377 = vmax.f32 %v2327, %v2352
    %v2378 = vmax.f32 %v2328, %v2353
    %2379 = vst.msk [vmem:[#allocation3] sm:$0xff] %vm1776, %v2354
    %2380 = vst.msk [vmem:[#allocation3 + $0x8] sm:$0xff] %vm1776, %v2355
    %2381 = vst.msk [vmem:[#allocation3 + $0x10] sm:$0xff] %vm1776, %v2356
    %2382 = vst.msk [vmem:[#allocation3 + $0x18] sm:$0xff] %vm1776, %v2357
    %2383 = vst.msk [vmem:[#allocation3 + $0x20] sm:$0xff] %vm1776, %v2358
    %2384 = vst.msk [vmem:[#allocation3 + $0x28] sm:$0xff] %vm1776, %v2359
    %2385 = vst.msk [vmem:[#allocation3 + $0x30] sm:$0xff] %vm1776, %v2360
    %2386 = vst.msk [vmem:[#allocation3 + $0x38] sm:$0xff] %vm1776, %v2361
    %2387 = vst.msk [vmem:[#allocation3 + $0x40] sm:$0xff] %vm1776, %v2362
    %2388 = vst.msk [vmem:[#allocation3 + $0x48] sm:$0xff] %vm1776, %v2363
    %2389 = vst.msk [vmem:[#allocation3 + $0x50] sm:$0xff] %vm1776, %v2364
    %2390 = vst.msk [vmem:[#allocation3 + $0x58] sm:$0xff] %vm1776, %v2365
    %2391 = vst.msk [vmem:[#allocation3 + $0x60] sm:$0xff] %vm1776, %v2366
    %2392 = vst.msk [vmem:[#allocation3 + $0x68] sm:$0xff] %vm1776, %v2367
    %2393 = vst.msk [vmem:[#allocation3 + $0x70] sm:$0xff] %vm1776, %v2368
    %2394 = vst.msk [vmem:[#allocation3 + $0x78] sm:$0xff] %vm1776, %v2369
    %2395 = vst.msk [vmem:[#allocation3 + $0x80] sm:$0xff] %vm1776, %v2370
    %2396 = vst.msk [vmem:[#allocation3 + $0x88] sm:$0xff] %vm1776, %v2371
    %2397 = vst.msk [vmem:[#allocation3 + $0x90] sm:$0xff] %vm1776, %v2372
    %2398 = vst.msk [vmem:[#allocation3 + $0x98] sm:$0xff] %vm1776, %v2373
    %2399 = vst.msk [vmem:[#allocation3 + $0xa0] sm:$0xff] %vm1776, %v2374
    %2400 = vst.msk [vmem:[#allocation3 + $0xa8] sm:$0xff] %vm1776, %v2375
    %2401 = vst.msk [vmem:[#allocation3 + $0xb0] sm:$0xff] %vm1776, %v2376
    %2402 = vst.msk [vmem:[#allocation3 + $0xb8] sm:$0xff] %vm1776, %v2377
    %2403 = vst.msk [vmem:[#allocation3 + $0xc0] sm:$0xff] %vm1776, %v2378
    %s2404 = scalar_lea.vmem [#allocation3], 11
    %v2405 = vld [vmem:[%s2404] ss:$2 sm:$0xf]
    %vm2406 = vcmask 125952
    %2407 = vst.msk [vmem:[#allocation4] sm:$0xf] %vm2406, %v2405
    %s2408 = scalar_lea.vmem [#allocation3], 31
    %v2409 = vld [vmem:[%s2408] ss:$2 sm:$0xf]
    %2410 = vst.msk [vmem:[#allocation4 + $0x4] sm:$0xf] %vm2406, %v2409
    %s2411 = scalar_lea.vmem [#allocation3], 51
    %v2412 = vld [vmem:[%s2411] ss:$2 sm:$0xf]
    %2413 = vst.msk [vmem:[#allocation4 + $0x8] sm:$0xf] %vm2406, %v2412
    %s2414 = scalar_lea.vmem [#allocation3], 71
    %v2415 = vld [vmem:[%s2414] ss:$2 sm:$0xf]
    %2416 = vst.msk [vmem:[#allocation4 + $0xc] sm:$0xf] %vm2406, %v2415
    %s2417 = scalar_lea.vmem [#allocation3], 111
    %v2418 = vld [vmem:[%s2417] ss:$2 sm:$0xf]
    %2419 = vst.msk [vmem:[#allocation4 + $0x10] sm:$0xf] %vm2406, %v2418
    %s2420 = scalar_lea.vmem [#allocation3], 131
    %v2421 = vld [vmem:[%s2420] ss:$2 sm:$0xf]
    %2422 = vst.msk [vmem:[#allocation4 + $0x14] sm:$0xf] %vm2406, %v2421
    %s2423 = scalar_lea.vmem [#allocation3], 151
    %v2424 = vld [vmem:[%s2423] ss:$2 sm:$0xf]
    %2425 = vst.msk [vmem:[#allocation4 + $0x18] sm:$0xf] %vm2406, %v2424
    %s2426 = scalar_lea.vmem [#allocation3], 171
    %v2427 = vld [vmem:[%s2426] ss:$2 sm:$0xf]
    %2428 = vst.msk [vmem:[#allocation4 + $0x1c] sm:$0xf] %vm2406, %v2427
    %v2429 = vld [vmem:[#allocation4] ss:$16 sm:$0x3]
    %v2430 = vpack.c.bf16 %v2429, %v2429
    %v2431 = vld [vmem:[%s5] sm:$0xf]
    %v2432 = vld [vmem:[%s5 + $0x4] sm:$0xf]
    %s2433 = scalar_lea.vmem [#allocation4], 1
    %v2434 = vld [vmem:[%s2433] ss:$16 sm:$0x3]
    %v2435 = vpack.c.bf16 %v2434, %v2434
    %s2436 = scalar_lea.vmem %s5, 8
    %v2437 = vld [vmem:[%s2436] sm:$0xf]
    %v2438 = vld [vmem:[%s2436 + $0x4] sm:$0xf]
    %v2441 = vunpack.c.l.b16 %v2437
    %v2442 = vunpack.c.l.b16 %v2438
    %v2443 = vpack.c.b16 %v2442, %v2441
    %v2446 = vsel %vm1776, %v2435, 0
    %2448 = vmatpush.bf16.msra.mxu0 0
    %2449 = vmatpush.bf16.msra.mxu0 0
    %2450 = vmatpush.bf16.msra.mxu0 0
    %2451 = vmatpush.bf16.msra.mxu0 0
    %2452 = vmatpush.bf16.msra.mxu0 0
    %2453 = vmatpush.bf16.msra.mxu0 0
    %2454 = vmatpush.bf16.msra.mxu0 0
    %2455 = vmatpush.bf16.msra.mxu0 %v2443
    %2456 = vmatmul.bf16.gmra.mxu0 %v2446
    %v2457 = vpop.f32.mrf.mxu0
    %v2458 = vadd.f32 0.0, %v2457
    %v2459 = vpop.f32.mrf.mxu0
    %2460 = vdwg.mxu0
    %v2463 = vunpack.c.l.b16 %v2431
    %v2464 = vunpack.c.l.b16 %v2432
    %v2465 = vpack.c.b16 %v2464, %v2463
    %v2468 = vsel %vm1776, %v2430, 0
    %2470 = vmatpush.bf16.msra.mxu0 0
    %2471 = vmatpush.bf16.msra.mxu0 0
    %2472 = vmatpush.bf16.msra.mxu0 0
    %2473 = vmatpush.bf16.msra.mxu0 0
    %2474 = vmatpush.bf16.msra.mxu0 0
    %2475 = vmatpush.bf16.msra.mxu0 0
    %2476 = vmatpush.bf16.msra.mxu0 0
    %2477 = vmatpush.bf16.msra.mxu0 %v2465
    %2478 = vmatmul.bf16.gmra.mxu0 %v2468
    %v2479 = vpop.f32.mrf.mxu0
    %v2480 = vadd.f32 %v2458, %v2479
    %v2481 = vpop.f32.mrf.mxu0
    %2482 = vdwg.mxu0
    %s2483 = scalar_lea.vmem [#allocation4], 2
    %v2484 = vld [vmem:[%s2483] ss:$16 sm:$0x3]
    %v2485 = vpack.c.bf16 %v2484, %v2484
    %s2486 = scalar_lea.vmem %s5, 16
    %v2487 = vld [vmem:[%s2486] sm:$0xf]
    %v2488 = vld [vmem:[%s2486 + $0x4] sm:$0xf]
    %v2491 = vunpack.c.l.b16 %v2487
    %v2492 = vunpack.c.l.b16 %v2488
    %v2493 = vpack.c.b16 %v2492, %v2491
    %v2496 = vsel %vm1776, %v2485, 0
    %2498 = vmatpush.bf16.msra.mxu0 0
    %2499 = vmatpush.bf16.msra.mxu0 0
    %2500 = vmatpush.bf16.msra.mxu0 0
    %2501 = vmatpush.bf16.msra.mxu0 0
    %2502 = vmatpush.bf16.msra.mxu0 0
    %2503 = vmatpush.bf16.msra.mxu0 0
    %2504 = vmatpush.bf16.msra.mxu0 0
    %2505 = vmatpush.bf16.msra.mxu0 %v2493
    %2506 = vmatmul.bf16.gmra.mxu0 %v2496
    %v2507 = vpop.f32.mrf.mxu0
    %v2508 = vadd.f32 0.0, %v2507
    %v2509 = vpop.f32.mrf.mxu0
    %2510 = vdwg.mxu0
    %v2511 = vadd.f32 %v2480, %v2508
    %s2512 = scalar_lea.vmem [#allocation4], 3
    %v2513 = vld [vmem:[%s2512] ss:$16 sm:$0x3]
    %v2514 = vpack.c.bf16 %v2513, %v2513
    %s2515 = scalar_lea.vmem %s5, 24
    %v2516 = vld [vmem:[%s2515] sm:$0xf]
    %v2517 = vld [vmem:[%s2515 + $0x4] sm:$0xf]
    %v2520 = vunpack.c.l.b16 %v2516
    %v2521 = vunpack.c.l.b16 %v2517
    %v2522 = vpack.c.b16 %v2521, %v2520
    %v2525 = vsel %vm1776, %v2514, 0
    %2527 = vmatpush.bf16.msra.mxu0 0
    %2528 = vmatpush.bf16.msra.mxu0 0
    %2529 = vmatpush.bf16.msra.mxu0 0
    %2530 = vmatpush.bf16.msra.mxu0 0
    %2531 = vmatpush.bf16.msra.mxu0 0
    %2532 = vmatpush.bf16.msra.mxu0 0
    %2533 = vmatpush.bf16.msra.mxu0 0
    %2534 = vmatpush.bf16.msra.mxu0 %v2522
    %2535 = vmatmul.bf16.gmra.mxu0 %v2525
    %v2536 = vpop.f32.mrf.mxu0
    %v2537 = vadd.f32 0.0, %v2536
    %v2538 = vpop.f32.mrf.mxu0
    %2539 = vdwg.mxu0
    %v2540 = vadd.f32 %v2511, %v2537
    %s2541 = scalar_lea.vmem [#allocation4], 4
    %v2542 = vld [vmem:[%s2541] ss:$16 sm:$0x3]
    %v2543 = vpack.c.bf16 %v2542, %v2542
    %s2544 = scalar_lea.vmem %s5, 32
    %v2545 = vld [vmem:[%s2544] sm:$0xf]
    %v2546 = vld [vmem:[%s2544 + $0x4] sm:$0xf]
    %v2549 = vunpack.c.l.b16 %v2545
    %v2550 = vunpack.c.l.b16 %v2546
    %v2551 = vpack.c.b16 %v2550, %v2549
    %v2554 = vsel %vm1776, %v2543, 0
    %2556 = vmatpush.bf16.msra.mxu0 0
    %2557 = vmatpush.bf16.msra.mxu0 0
    %2558 = vmatpush.bf16.msra.mxu0 0
    %2559 = vmatpush.bf16.msra.mxu0 0
    %2560 = vmatpush.bf16.msra.mxu0 0
    %2561 = vmatpush.bf16.msra.mxu0 0
    %2562 = vmatpush.bf16.msra.mxu0 0
    %2563 = vmatpush.bf16.msra.mxu0 %v2551
    %2564 = vmatmul.bf16.gmra.mxu0 %v2554
    %v2565 = vpop.f32.mrf.mxu0
    %v2566 = vadd.f32 0.0, %v2565
    %v2567 = vpop.f32.mrf.mxu0
    %2568 = vdwg.mxu0
    %v2569 = vadd.f32 %v2540, %v2566
    %s2570 = scalar_lea.vmem [#allocation4], 5
    %v2571 = vld [vmem:[%s2570] ss:$16 sm:$0x3]
    %v2572 = vpack.c.bf16 %v2571, %v2571
    %s2573 = scalar_lea.vmem %s5, 40
    %v2574 = vld [vmem:[%s2573] sm:$0xf]
    %v2575 = vld [vmem:[%s2573 + $0x4] sm:$0xf]
    %v2578 = vunpack.c.l.b16 %v2574
    %v2579 = vunpack.c.l.b16 %v2575
    %v2580 = vpack.c.b16 %v2579, %v2578
    %v2583 = vsel %vm1776, %v2572, 0
    %2585 = vmatpush.bf16.msra.mxu0 0
    %2586 = vmatpush.bf16.msra.mxu0 0
    %2587 = vmatpush.bf16.msra.mxu0 0
    %2588 = vmatpush.bf16.msra.mxu0 0
    %2589 = vmatpush.bf16.msra.mxu0 0
    %2590 = vmatpush.bf16.msra.mxu0 0
    %2591 = vmatpush.bf16.msra.mxu0 0
    %2592 = vmatpush.bf16.msra.mxu0 %v2580
    %2593 = vmatmul.bf16.gmra.mxu0 %v2583
    %v2594 = vpop.f32.mrf.mxu0
    %v2595 = vadd.f32 0.0, %v2594
    %v2596 = vpop.f32.mrf.mxu0
    %2597 = vdwg.mxu0
    %v2598 = vadd.f32 %v2569, %v2595
    %s2599 = scalar_lea.vmem [#allocation4], 6
    %v2600 = vld [vmem:[%s2599] ss:$16 sm:$0x3]
    %v2601 = vpack.c.bf16 %v2600, %v2600
    %s2602 = scalar_lea.vmem %s5, 48
    %v2603 = vld [vmem:[%s2602] sm:$0xf]
    %v2604 = vld [vmem:[%s2602 + $0x4] sm:$0xf]
    %v2607 = vunpack.c.l.b16 %v2603
    %v2608 = vunpack.c.l.b16 %v2604
    %v2609 = vpack.c.b16 %v2608, %v2607
    %v2612 = vsel %vm1776, %v2601, 0
    %2614 = vmatpush.bf16.msra.mxu0 0
    %2615 = vmatpush.bf16.msra.mxu0 0
    %2616 = vmatpush.bf16.msra.mxu0 0
    %2617 = vmatpush.bf16.msra.mxu0 0
    %2618 = vmatpush.bf16.msra.mxu0 0
    %2619 = vmatpush.bf16.msra.mxu0 0
    %2620 = vmatpush.bf16.msra.mxu0 0
    %2621 = vmatpush.bf16.msra.mxu0 %v2609
    %2622 = vmatmul.bf16.gmra.mxu0 %v2612
    %v2623 = vpop.f32.mrf.mxu0
    %v2624 = vadd.f32 0.0, %v2623
    %v2625 = vpop.f32.mrf.mxu0
    %2626 = vdwg.mxu0
    %v2627 = vadd.f32 %v2598, %v2624
    %s2628 = scalar_lea.vmem [#allocation4], 7
    %v2629 = vld [vmem:[%s2628] ss:$16 sm:$0x3]
    %v2630 = vpack.c.bf16 %v2629, %v2629
    %s2631 = scalar_lea.vmem %s5, 56
    %v2632 = vld [vmem:[%s2631] sm:$0xf]
    %v2633 = vld [vmem:[%s2631 + $0x4] sm:$0xf]
    %v2636 = vunpack.c.l.b16 %v2632
    %v2637 = vunpack.c.l.b16 %v2633
    %v2638 = vpack.c.b16 %v2637, %v2636
    %v2641 = vsel %vm1776, %v2630, 0
    %2643 = vmatpush.bf16.msra.mxu0 0
    %2644 = vmatpush.bf16.msra.mxu0 0
    %2645 = vmatpush.bf16.msra.mxu0 0
    %2646 = vmatpush.bf16.msra.mxu0 0
    %2647 = vmatpush.bf16.msra.mxu0 0
    %2648 = vmatpush.bf16.msra.mxu0 0
    %2649 = vmatpush.bf16.msra.mxu0 0
    %2650 = vmatpush.bf16.msra.mxu0 %v2638
    %2651 = vmatmul.bf16.gmra.mxu0 %v2641
    %v2652 = vpop.f32.mrf.mxu0
    %v2653 = vadd.f32 0.0, %v2652
    %v2654 = vpop.f32.mrf.mxu0
    %2655 = vdwg.mxu0
    %v2656 = vadd.f32 %v2627, %v2653
    %s2657 = scalar_lea.vmem [#allocation4], 8
    %v2658 = vld [vmem:[%s2657] ss:$16 sm:$0x3]
    %v2659 = vpack.c.bf16 %v2658, %v2658
    %s2660 = scalar_lea.vmem %s5, 64
    %v2661 = vld [vmem:[%s2660] sm:$0xf]
    %v2662 = vld [vmem:[%s2660 + $0x4] sm:$0xf]
    %v2665 = vunpack.c.l.b16 %v2661
    %v2666 = vunpack.c.l.b16 %v2662
    %v2667 = vpack.c.b16 %v2666, %v2665
    %v2670 = vsel %vm1776, %v2659, 0
    %2672 = vmatpush.bf16.msra.mxu0 0
    %2673 = vmatpush.bf16.msra.mxu0 0
    %2674 = vmatpush.bf16.msra.mxu0 0
    %2675 = vmatpush.bf16.msra.mxu0 0
    %2676 = vmatpush.bf16.msra.mxu0 0
    %2677 = vmatpush.bf16.msra.mxu0 0
    %2678 = vmatpush.bf16.msra.mxu0 0
    %2679 = vmatpush.bf16.msra.mxu0 %v2667
    %2680 = vmatmul.bf16.gmra.mxu0 %v2670
    %v2681 = vpop.f32.mrf.mxu0
    %v2682 = vadd.f32 0.0, %v2681
    %v2683 = vpop.f32.mrf.mxu0
    %2684 = vdwg.mxu0
    %v2685 = vadd.f32 %v2656, %v2682
    %s2686 = scalar_lea.vmem [#allocation4], 9
    %v2687 = vld [vmem:[%s2686] ss:$16 sm:$0x3]
    %v2688 = vpack.c.bf16 %v2687, %v2687
    %s2689 = scalar_lea.vmem %s5, 72
    %v2690 = vld [vmem:[%s2689] sm:$0xf]
    %v2691 = vld [vmem:[%s2689 + $0x4] sm:$0xf]
    %v2694 = vunpack.c.l.b16 %v2690
    %v2695 = vunpack.c.l.b16 %v2691
    %v2696 = vpack.c.b16 %v2695, %v2694
    %v2699 = vsel %vm1776, %v2688, 0
    %2701 = vmatpush.bf16.msra.mxu0 0
    %2702 = vmatpush.bf16.msra.mxu0 0
    %2703 = vmatpush.bf16.msra.mxu0 0
    %2704 = vmatpush.bf16.msra.mxu0 0
    %2705 = vmatpush.bf16.msra.mxu0 0
    %2706 = vmatpush.bf16.msra.mxu0 0
    %2707 = vmatpush.bf16.msra.mxu0 0
    %2708 = vmatpush.bf16.msra.mxu0 %v2696
    %2709 = vmatmul.bf16.gmra.mxu0 %v2699
    %v2710 = vpop.f32.mrf.mxu0
    %v2711 = vadd.f32 0.0, %v2710
    %v2712 = vpop.f32.mrf.mxu0
    %2713 = vdwg.mxu0
    %v2714 = vadd.f32 %v2685, %v2711
    %s2715 = scalar_lea.vmem [#allocation4], 10
    %v2716 = vld [vmem:[%s2715] ss:$16 sm:$0x3]
    %v2717 = vpack.c.bf16 %v2716, %v2716
    %s2718 = scalar_lea.vmem %s5, 80
    %v2719 = vld [vmem:[%s2718] sm:$0xf]
    %v2720 = vld [vmem:[%s2718 + $0x4] sm:$0xf]
    %v2723 = vunpack.c.l.b16 %v2719
    %v2724 = vunpack.c.l.b16 %v2720
    %v2725 = vpack.c.b16 %v2724, %v2723
    %v2728 = vsel %vm1776, %v2717, 0
    %2730 = vmatpush.bf16.msra.mxu0 0
    %2731 = vmatpush.bf16.msra.mxu0 0
    %2732 = vmatpush.bf16.msra.mxu0 0
    %2733 = vmatpush.bf16.msra.mxu0 0
    %2734 = vmatpush.bf16.msra.mxu0 0
    %2735 = vmatpush.bf16.msra.mxu0 0
    %2736 = vmatpush.bf16.msra.mxu0 0
    %2737 = vmatpush.bf16.msra.mxu0 %v2725
    %2738 = vmatmul.bf16.gmra.mxu0 %v2728
    %v2739 = vpop.f32.mrf.mxu0
    %v2740 = vadd.f32 0.0, %v2739
    %v2741 = vpop.f32.mrf.mxu0
    %2742 = vdwg.mxu0
    %v2743 = vadd.f32 %v2714, %v2740
    %s2744 = scalar_lea.vmem [#allocation4], 11
    %v2745 = vld [vmem:[%s2744] ss:$16 sm:$0x3]
    %v2746 = vpack.c.bf16 %v2745, %v2745
    %s2747 = scalar_lea.vmem %s5, 88
    %v2748 = vld [vmem:[%s2747] sm:$0xf]
    %v2749 = vld [vmem:[%s2747 + $0x4] sm:$0xf]
    %v2752 = vunpack.c.l.b16 %v2748
    %v2753 = vunpack.c.l.b16 %v2749
    %v2754 = vpack.c.b16 %v2753, %v2752
    %v2757 = vsel %vm1776, %v2746, 0
    %2759 = vmatpush.bf16.msra.mxu0 0
    %2760 = vmatpush.bf16.msra.mxu0 0
    %2761 = vmatpush.bf16.msra.mxu0 0
    %2762 = vmatpush.bf16.msra.mxu0 0
    %2763 = vmatpush.bf16.msra.mxu0 0
    %2764 = vmatpush.bf16.msra.mxu0 0
    %2765 = vmatpush.bf16.msra.mxu0 0
    %2766 = vmatpush.bf16.msra.mxu0 %v2754
    %2767 = vmatmul.bf16.gmra.mxu0 %v2757
    %v2768 = vpop.f32.mrf.mxu0
    %v2769 = vadd.f32 0.0, %v2768
    %v2770 = vpop.f32.mrf.mxu0
    %2771 = vdwg.mxu0
    %v2772 = vadd.f32 %v2743, %v2769
    %s2773 = scalar_lea.vmem [#allocation4], 12
    %v2774 = vld [vmem:[%s2773] ss:$16 sm:$0x3]
    %v2775 = vpack.c.bf16 %v2774, %v2774
    %s2776 = scalar_lea.vmem %s5, 96
    %v2777 = vld [vmem:[%s2776] sm:$0xf]
    %v2778 = vld [vmem:[%s2776 + $0x4] sm:$0xf]
    %v2781 = vunpack.c.l.b16 %v2777
    %v2782 = vunpack.c.l.b16 %v2778
    %v2783 = vpack.c.b16 %v2782, %v2781
    %v2786 = vsel %vm1776, %v2775, 0
    %2788 = vmatpush.bf16.msra.mxu0 0
    %2789 = vmatpush.bf16.msra.mxu0 0
    %2790 = vmatpush.bf16.msra.mxu0 0
    %2791 = vmatpush.bf16.msra.mxu0 0
    %2792 = vmatpush.bf16.msra.mxu0 0
    %2793 = vmatpush.bf16.msra.mxu0 0
    %2794 = vmatpush.bf16.msra.mxu0 0
    %2795 = vmatpush.bf16.msra.mxu0 %v2783
    %2796 = vmatmul.bf16.gmra.mxu0 %v2786
    %v2797 = vpop.f32.mrf.mxu0
    %v2798 = vadd.f32 0.0, %v2797
    %v2799 = vpop.f32.mrf.mxu0
    %2800 = vdwg.mxu0
    %v2801 = vadd.f32 %v2772, %v2798
    %s2802 = scalar_lea.vmem [#allocation4], 13
    %v2803 = vld [vmem:[%s2802] ss:$16 sm:$0x3]
    %v2804 = vpack.c.bf16 %v2803, %v2803
    %s2805 = scalar_lea.vmem %s5, 104
    %v2806 = vld [vmem:[%s2805] sm:$0xf]
    %v2807 = vld [vmem:[%s2805 + $0x4] sm:$0xf]
    %v2810 = vunpack.c.l.b16 %v2806
    %v2811 = vunpack.c.l.b16 %v2807
    %v2812 = vpack.c.b16 %v2811, %v2810
    %v2815 = vsel %vm1776, %v2804, 0
    %2817 = vmatpush.bf16.msra.mxu0 0
    %2818 = vmatpush.bf16.msra.mxu0 0
    %2819 = vmatpush.bf16.msra.mxu0 0
    %2820 = vmatpush.bf16.msra.mxu0 0
    %2821 = vmatpush.bf16.msra.mxu0 0
    %2822 = vmatpush.bf16.msra.mxu0 0
    %2823 = vmatpush.bf16.msra.mxu0 0
    %2824 = vmatpush.bf16.msra.mxu0 %v2812
    %2825 = vmatmul.bf16.gmra.mxu0 %v2815
    %v2826 = vpop.f32.mrf.mxu0
    %v2827 = vadd.f32 0.0, %v2826
    %v2828 = vpop.f32.mrf.mxu0
    %2829 = vdwg.mxu0
    %v2830 = vadd.f32 %v2801, %v2827
    %s2831 = scalar_lea.vmem [#allocation4], 14
    %v2832 = vld [vmem:[%s2831] ss:$16 sm:$0x3]
    %v2833 = vpack.c.bf16 %v2832, %v2832
    %s2834 = scalar_lea.vmem %s5, 112
    %v2835 = vld [vmem:[%s2834] sm:$0xf]
    %v2836 = vld [vmem:[%s2834 + $0x4] sm:$0xf]
    %v2839 = vunpack.c.l.b16 %v2835
    %v2840 = vunpack.c.l.b16 %v2836
    %v2841 = vpack.c.b16 %v2840, %v2839
    %v2844 = vsel %vm1776, %v2833, 0
    %2846 = vmatpush.bf16.msra.mxu0 0
    %2847 = vmatpush.bf16.msra.mxu0 0
    %2848 = vmatpush.bf16.msra.mxu0 0
    %2849 = vmatpush.bf16.msra.mxu0 0
    %2850 = vmatpush.bf16.msra.mxu0 0
    %2851 = vmatpush.bf16.msra.mxu0 0
    %2852 = vmatpush.bf16.msra.mxu0 0
    %2853 = vmatpush.bf16.msra.mxu0 %v2841
    %2854 = vmatmul.bf16.gmra.mxu0 %v2844
    %v2855 = vpop.f32.mrf.mxu0
    %v2856 = vadd.f32 0.0, %v2855
    %v2857 = vpop.f32.mrf.mxu0
    %2858 = vdwg.mxu0
    %v2859 = vadd.f32 %v2830, %v2856
    %s2860 = scalar_lea.vmem [#allocation4], 15
    %v2861 = vld [vmem:[%s2860] ss:$16 sm:$0x3]
    %v2862 = vpack.c.bf16 %v2861, %v2861
    %s2863 = scalar_lea.vmem %s5, 120
    %v2864 = vld [vmem:[%s2863] sm:$0xf]
    %v2865 = vld [vmem:[%s2863 + $0x4] sm:$0xf]
    %v2868 = vunpack.c.l.b16 %v2864
    %v2869 = vunpack.c.l.b16 %v2865
    %v2870 = vpack.c.b16 %v2869, %v2868
    %v2873 = vsel %vm1776, %v2862, 0
    %2875 = vmatpush.bf16.msra.mxu0 0
    %2876 = vmatpush.bf16.msra.mxu0 0
    %2877 = vmatpush.bf16.msra.mxu0 0
    %2878 = vmatpush.bf16.msra.mxu0 0
    %2879 = vmatpush.bf16.msra.mxu0 0
    %2880 = vmatpush.bf16.msra.mxu0 0
    %2881 = vmatpush.bf16.msra.mxu0 0
    %2882 = vmatpush.bf16.msra.mxu0 %v2870
    %2883 = vmatmul.bf16.gmra.mxu0 %v2873
    %v2884 = vpop.f32.mrf.mxu0
    %v2885 = vadd.f32 0.0, %v2884
    %v2886 = vpop.f32.mrf.mxu0
    %2887 = vdwg.mxu0
    %v2888 = vadd.f32 %v2859, %v2885
    %v2889 = vld [vmem:[%s6] sm:$0x1]
    %v2891 = vperm.slane %v2889, 0
    %v2893 = vadd.f32 %v2888, %v2891
    %2894 = vst [vmem:[#allocation5] sm:$0x3] %v2893
    // Predicated region
    $region30: #{convnet_forward.1} parent=1 // pred_check
      _
    $region31: #{convnet_forward.1} parent=1 // pred_check_branch
      %2896 = sbr.rel (0) target = $region33
    $region32: #{convnet_forward.1} parent=1 // pred_region
      %2898 = vsyncadd [#allocation6], 0
      %s2900 = sshll.u32 [#allocation5], 4
      %s2901 = int_to_ptr.vmem [resolvable:$true] %s2900
      %s2902 = sshll.u32 %s7, 4
      %s2903 = int_to_ptr.hbm [resolvable:$true] %s2902
      %2905 = dma.vmem_to_hbm [thread:$0]  %s2901, 32, %s2903, [#allocation6]
    $region33: #{convnet_forward.1} parent=1 // pred_fallthru
      _
    // Predicated region
    $region34: #{convnet_forward.1} parent=1 // pred_check
      _
    $region35: #{convnet_forward.1} parent=1 // pred_check_branch
      %2907 = sbr.rel (0) target = $region37
    $region36: #{convnet_forward.1} parent=1 // pred_region
      %2909 = dma.done [#allocation6], 32
    $region37: #{convnet_forward.1} parent=1 // pred_fallthru
      _
    %2910 = vsyncpa [#allocation6], 1

</llo_original>
